<compile_context>
chip_gen: v7x
topology: tpu7x:2x2x1
jax: 0.10.0
libtpu: 0.0.40
codegen_flags: <defaults>
</compile_context>

<pallas_src>
import jax
import jax.numpy as jnp
from jax import lax
from jax.experimental import pallas as pl
from jax.experimental.pallas import tpu as pltpu

EPS = 1e-5  # InstanceNorm3d default eps


def _make_kernel(D, H, W, Cin, Cout, Sp, M, offsets):
    """Kernel closure over static geometry (all Python ints)."""
    inv_cnt = 1.0 / float(D * H * W)

    def kernel(xm_ref, w1_ref, w2_ref, wi_ref, bi_ref, mask_ref, out_ref,
               h1m_ref, col1_ref, col2_ref):
        # xm_ref : (Cin, Sp + 2M)  channel-first, zero-padded volume with a
        #          lane margin of M on each side (margin is zero).
        # out_ref: (Cout, Sp)      result over the padded frame (halo columns
        #          are discarded by the wrapper).
        mask = mask_ref[...]                                # (1, Sp) interior

        def inorm_relu(y):
            # y: (C, Sp) conv output over the padded frame (halo cols garbage).
            # Per-channel stats over interior voxels only (biased variance),
            # no affine, then ReLU; halo columns come out exactly 0.
            mean = jnp.sum(y * mask, axis=1, keepdims=True) * inv_cnt
            d = (y - mean) * mask
            var = jnp.sum(d * d, axis=1, keepdims=True) * inv_cnt
            return jnp.maximum(d * lax.rsqrt(var + EPS), 0.0)

        # ---- conv1: im2col (27 contiguous lane-shifted slices) + 1 matmul ----
        for t, o in enumerate(offsets):
            col1_ref[t * Cin:(t + 1) * Cin, :] = xm_ref[:, M + o:M + o + Sp]
        h1 = inorm_relu(jnp.dot(w1_ref[...], col1_ref[...],
                                preferred_element_type=jnp.float32))

        # ---- stage h1 with a lane margin so conv2's taps are contiguous ----
        # Only the margins need zeroing; the in-frame halo is already 0.
        h1m_ref[:, 0:M] = jnp.zeros((Cout, M), jnp.float32)
        h1m_ref[:, M + Sp:M + Sp + M] = jnp.zeros((Cout, M), jnp.float32)
        h1m_ref[:, M:M + Sp] = h1

        # ---- conv2: same im2col + single matmul ----
        for t, o in enumerate(offsets):
            col2_ref[t * Cout:(t + 1) * Cout, :] = h1m_ref[:, M + o:M + o + Sp]
        h2 = inorm_relu(jnp.dot(w2_ref[...], col2_ref[...],
                                preferred_element_type=jnp.float32))

        # ---- identity: 1x1x1 conv (bias=True) + residual add ----
        ident = jnp.dot(wi_ref[...], xm_ref[:, M:M + Sp],
                        preferred_element_type=jnp.float32) + bi_ref[...]
        out_ref[...] = h2 + ident

    return kernel


def resblock3d(x, params):
    """x: (N, D, H, W, Cin) f32.  Returns (N, D, H, W, Cout) f32.

    params = (w1, b1, w2, b2, wi, bi) with w1 (3,3,3,Cin,Cout) DHWIO,
    w2 (3,3,3,Cout,Cout), wi (Cin,Cout), biases (1, C).  b1/b2 are accepted
    for API compatibility but not used inside the kernel: a per-channel bias
    added before a non-affine InstanceNorm cancels exactly.
    """
    N, D, H, W, Cin = x.shape
    w1, _b1, w2, _b2, wi, bi = params
    Cout = w1.shape[-1]

    HW2 = (H + 2) * (W + 2)
    W2 = W + 2
    Sp = (D + 2) * HW2                      # flattened zero-padded volume
    m_req = HW2 + W2 + 1                    # largest |tap lane offset|
    M = ((m_req + 127) // 128) * 128        # lane-aligned margin

    # flat lane offsets of the 27 conv taps, (kd, kh, kw) row-major -- must
    # match the weight reshape order below.
    offsets = [(kd - 1) * HW2 + (kh - 1) * W2 + (kw - 1)
               for kd in range(3) for kh in range(3) for kw in range(3)]

    # Layout plumbing (plain XLA, outside the kernel): channel-first,
    # +1 spatial halo of zeros, flatten, add a zero lane margin of M.
    x_cf = jnp.transpose(x, (0, 4, 1, 2, 3))                       # (N,Cin,D,H,W)
    x_pad = jnp.pad(x_cf, ((0, 0), (0, 0), (1, 1), (1, 1), (1, 1)))
    x_m = jnp.pad(x_pad.reshape(N, Cin, Sp), ((0, 0), (0, 0), (M, M)))

    # weights as (Cout, 27*C) with K tap-major; identity as (Cout, Cin).
    w1m = w1.reshape(27 * Cin, Cout).T
    w2m = w2.reshape(27 * Cout, Cout).T
    wit = wi.T
    bic = bi.reshape(Cout, 1)

    # interior mask over the padded frame (1 at real voxels, 0 at halo).
    md = (jnp.arange(D + 2) >= 1) & (jnp.arange(D + 2) <= D)
    mh = (jnp.arange(H + 2) >= 1) & (jnp.arange(H + 2) <= H)
    mw = (jnp.arange(W + 2) >= 1) & (jnp.arange(W + 2) <= W)
    mask = (md[:, None, None] & mh[None, :, None] & mw[None, None, :])
    mask = mask.reshape(1, Sp).astype(jnp.float32)

    kernel = _make_kernel(D, H, W, Cin, Cout, Sp, M, offsets)

    # TODO(synk): for large volumes (e.g. 64^3+) add a D-tile grid axis with a
    # 1-voxel halo and two-pass instance-norm stats so the per-step working
    # set fits v7x's 64 MiB VMEM; at these shapes the whole volume fits easily.
    out_pad = pl.pallas_call(
        kernel,
        out_shape=jax.ShapeDtypeStruct((N, Cout, Sp), jnp.float32),
        grid_spec=pltpu.PrefetchScalarGridSpec(
            num_scalar_prefetch=0,
            grid=(N,),  # one batch element per grid step
            in_specs=[
                pl.BlockSpec((None, Cin, Sp + 2 * M), lambda n: (n, 0, 0)),
                pl.BlockSpec((Cout, 27 * Cin), lambda n: (0, 0)),
                pl.BlockSpec((Cout, 27 * Cout), lambda n: (0, 0)),
                pl.BlockSpec((Cout, Cin), lambda n: (0, 0)),
                pl.BlockSpec((Cout, 1), lambda n: (0, 0)),
                pl.BlockSpec((1, Sp), lambda n: (0, 0)),
            ],
            out_specs=pl.BlockSpec((None, Cout, Sp), lambda n: (n, 0, 0)),
            scratch_shapes=[
                pltpu.VMEM((Cout, Sp + 2 * M), jnp.float32),   # h1 staging
                pltpu.VMEM((27 * Cin, Sp), jnp.float32),       # im2col conv1
                pltpu.VMEM((27 * Cout, Sp), jnp.float32),      # im2col conv2
            ],
        ),
        compiler_params=pltpu.CompilerParams(
            dimension_semantics=("parallel",)),
    )(x_m, w1m, w2m, wit, bic, mask)

    # Strip the halo and go back to NDHWC (cheap, keeps the in-kernel store
    # lane-dense).
    out = out_pad.reshape(N, Cout, D + 2, H + 2, W + 2)[:, :, 1:-1, 1:-1, 1:-1]
    return jnp.transpose(out, (0, 2, 3, 4, 1))


# ---------------- pure-JAX reference (for verification) ----------------
def _conv3d_same_ref(x, w, b):
    y = lax.conv_general_dilated(
        x, w, window_strides=(1, 1, 1), padding="SAME",
        dimension_numbers=("NDHWC", "DHWIO", "NDHWC"))
    return y + b.reshape(-1)


def _instance_norm_ref(x):
    mean = jnp.mean(x, axis=(1, 2, 3), keepdims=True)
    var = jnp.mean((x - mean) ** 2, axis=(1, 2, 3), keepdims=True)
    return (x - mean) * lax.rsqrt(var + EPS)


def resblock3d_ref(x, params):
    w1, b1, w2, b2, wi, bi = params
    h = jnp.maximum(_instance_norm_ref(_conv3d_same_ref(x, w1, b1)), 0.0)
    h = jnp.maximum(_instance_norm_ref(_conv3d_same_ref(h, w2, b2)), 0.0)
    ident = jnp.einsum("ndhwi,io->ndhwo", x, wi) + bi.reshape(-1)
    return h + ident


if __name__ == "__main__":
    key = jax.random.PRNGKey(0)
    N, D, H, W = 2, 8, 8, 8
    Cin, Cout = 4, 8  # in_planes != out_planes -> identity 1x1 conv + residual

    ks = jax.random.split(key, 7)
    x = jax.random.normal(ks[0], (N, D, H, W, Cin), jnp.float32)
    w1 = jax.random.normal(ks[1], (3, 3, 3, Cin, Cout), jnp.float32) * 0.1
    b1 = jax.random.normal(ks[2], (1, Cout), jnp.float32) * 0.1
    w2 = jax.random.normal(ks[3], (3, 3, 3, Cout, Cout), jnp.float32) * 0.1
    b2 = jax.random.normal(ks[4], (1, Cout), jnp.float32) * 0.1
    wi = jax.random.normal(ks[5], (Cin, Cout), jnp.float32) * 0.1
    bi = jax.random.normal(ks[6], (1, Cout), jnp.float32) * 0.1
    params = (w1, b1, w2, b2, wi, bi)

    out = resblock3d(x, params)
    jax.block_until_ready(out)

    ref = resblock3d_ref(x, params)
    max_err = float(jnp.max(jnp.abs(out - ref)))
    assert jnp.allclose(out, ref, atol=1e-3, rtol=1e-3), max_err

    print("KERNEL_OK")
</pallas_src>

<mosaic_0001>
module attributes {stable_mosaic.version = 11 : i64} {
  func.func @kernel(%arg0: i32, %arg1: memref<1x4x1256xf32, #tpu.memory_space<vmem>>, %arg2: memref<8x108xf32, #tpu.memory_space<vmem>>, %arg3: memref<8x216xf32, #tpu.memory_space<vmem>>, %arg4: memref<8x4xf32, #tpu.memory_space<vmem>>, %arg5: memref<8x1xf32, #tpu.memory_space<vmem>>, %arg6: memref<1x1000xf32, #tpu.memory_space<vmem>>, %arg7: memref<1x8x1000xf32, #tpu.memory_space<vmem>>, %arg8: memref<8x1256xf32, #tpu.memory_space<vmem>>, %arg9: memref<108x1000xf32, #tpu.memory_space<vmem>>, %arg10: memref<216x1000xf32, #tpu.memory_space<vmem>>) attributes {dimension_semantics = [#tpu.dimension_semantics<parallel>], iteration_bounds = array<i64: 2>, scalar_prefetch = 0 : i64, scratch_operands = 3 : i64, tpu.core_type = #tpu.core_type<tc>, window_params = [{transform_indices = @transform_0, window_bounds = array<i64: 1, 4, 1256>}, {pipeline_mode = #tpu.pipeline_mode<synchronous>, transform_indices = @transform_1, window_bounds = array<i64: 8, 108>}, {pipeline_mode = #tpu.pipeline_mode<synchronous>, transform_indices = @transform_2, window_bounds = array<i64: 8, 216>}, {pipeline_mode = #tpu.pipeline_mode<synchronous>, transform_indices = @transform_3, window_bounds = array<i64: 8, 4>}, {pipeline_mode = #tpu.pipeline_mode<synchronous>, transform_indices = @transform_4, window_bounds = array<i64: 8, 1>}, {pipeline_mode = #tpu.pipeline_mode<synchronous>, transform_indices = @transform_5, window_bounds = array<i64: 1, 1000>}, {transform_indices = @transform_6, window_bounds = array<i64: 1, 8, 1000>}]} {
    %c0 = arith.constant 0 : index
    %c0_0 = arith.constant 0 : index
    %0 = vector.load %arg6[%c0, %c0_0] : memref<1x1000xf32, #tpu.memory_space<vmem>>, vector<1x1000xf32>
    %c0_1 = arith.constant 0 : index
    %c0_2 = arith.constant 0 : index
    %c17 = arith.constant 17 : index
    %1 = vector.load %arg1[%c0_1, %c0_2, %c17] : memref<1x4x1256xf32, #tpu.memory_space<vmem>>, vector<1x4x1000xf32>
    %2 = vector.shape_cast %1 : vector<1x4x1000xf32> to vector<4x1000xf32>
    %c0_3 = arith.constant 0 : index
    %c0_4 = arith.constant 0 : index
    %3 = vector.load %arg9[%c0_3, %c0_4] : memref<108x1000xf32, #tpu.memory_space<vmem>>, vector<4x1000xf32>
    tpu.vector_store %arg9[%c0_3, %c0_4], %2 {strides = array<i32>} : memref<108x1000xf32, #tpu.memory_space<vmem>>, vector<4x1000xf32>,
    %c0_5 = arith.constant 0 : index
    %c0_6 = arith.constant 0 : index
    %c18 = arith.constant 18 : index
    %4 = vector.load %arg1[%c0_5, %c0_6, %c18] : memref<1x4x1256xf32, #tpu.memory_space<vmem>>, vector<1x4x1000xf32>
    %5 = vector.shape_cast %4 : vector<1x4x1000xf32> to vector<4x1000xf32>
    %c4 = arith.constant 4 : index
    %c0_7 = arith.constant 0 : index
    %6 = vector.load %arg9[%c4, %c0_7] : memref<108x1000xf32, #tpu.memory_space<vmem>>, vector<4x1000xf32>
    tpu.vector_store %arg9[%c4, %c0_7], %5 {strides = array<i32>} : memref<108x1000xf32, #tpu.memory_space<vmem>>, vector<4x1000xf32>,
    %c0_8 = arith.constant 0 : index
    %c0_9 = arith.constant 0 : index
    %c19 = arith.constant 19 : index
    %7 = vector.load %arg1[%c0_8, %c0_9, %c19] : memref<1x4x1256xf32, #tpu.memory_space<vmem>>, vector<1x4x1000xf32>
    %8 = vector.shape_cast %7 : vector<1x4x1000xf32> to vector<4x1000xf32>
    %c8 = arith.constant 8 : index
    %c0_10 = arith.constant 0 : index
    %9 = vector.load %arg9[%c8, %c0_10] : memref<108x1000xf32, #tpu.memory_space<vmem>>, vector<4x1000xf32>
    tpu.vector_store %arg9[%c8, %c0_10], %8 {strides = array<i32>} : memref<108x1000xf32, #tpu.memory_space<vmem>>, vector<4x1000xf32>,
    %c0_11 = arith.constant 0 : index
    %c0_12 = arith.constant 0 : index
    %c27 = arith.constant 27 : index
    %10 = vector.load %arg1[%c0_11, %c0_12, %c27] : memref<1x4x1256xf32, #tpu.memory_space<vmem>>, vector<1x4x1000xf32>
    %11 = vector.shape_cast %10 : vector<1x4x1000xf32> to vector<4x1000xf32>
    %c12 = arith.constant 12 : index
    %c0_13 = arith.constant 0 : index
    %12 = vector.load %arg9[%c12, %c0_13] : memref<108x1000xf32, #tpu.memory_space<vmem>>, vector<4x1000xf32>
    tpu.vector_store %arg9[%c12, %c0_13], %11 {strides = array<i32>} : memref<108x1000xf32, #tpu.memory_space<vmem>>, vector<4x1000xf32>,
    %c0_14 = arith.constant 0 : index
    %c0_15 = arith.constant 0 : index
    %c28 = arith.constant 28 : index
    %13 = vector.load %arg1[%c0_14, %c0_15, %c28] : memref<1x4x1256xf32, #tpu.memory_space<vmem>>, vector<1x4x1000xf32>
    %14 = vector.shape_cast %13 : vector<1x4x1000xf32> to vector<4x1000xf32>
    %c16 = arith.constant 16 : index
    %c0_16 = arith.constant 0 : index
    %15 = vector.load %arg9[%c16, %c0_16] : memref<108x1000xf32, #tpu.memory_space<vmem>>, vector<4x1000xf32>
    tpu.vector_store %arg9[%c16, %c0_16], %14 {strides = array<i32>} : memref<108x1000xf32, #tpu.memory_space<vmem>>, vector<4x1000xf32>,
    %c0_17 = arith.constant 0 : index
    %c0_18 = arith.constant 0 : index
    %c29 = arith.constant 29 : index
    %16 = vector.load %arg1[%c0_17, %c0_18, %c29] : memref<1x4x1256xf32, #tpu.memory_space<vmem>>, vector<1x4x1000xf32>
    %17 = vector.shape_cast %16 : vector<1x4x1000xf32> to vector<4x1000xf32>
    %c20 = arith.constant 20 : index
    %c0_19 = arith.constant 0 : index
    %18 = vector.load %arg9[%c20, %c0_19] : memref<108x1000xf32, #tpu.memory_space<vmem>>, vector<4x1000xf32>
    tpu.vector_store %arg9[%c20, %c0_19], %17 {strides = array<i32>} : memref<108x1000xf32, #tpu.memory_space<vmem>>, vector<4x1000xf32>,
    %c0_20 = arith.constant 0 : index
    %c0_21 = arith.constant 0 : index
    %c37 = arith.constant 37 : index
    %19 = vector.load %arg1[%c0_20, %c0_21, %c37] : memref<1x4x1256xf32, #tpu.memory_space<vmem>>, vector<1x4x1000xf32>
    %20 = vector.shape_cast %19 : vector<1x4x1000xf32> to vector<4x1000xf32>
    %c24 = arith.constant 24 : index
    %c0_22 = arith.constant 0 : index
    %21 = vector.load %arg9[%c24, %c0_22] : memref<108x1000xf32, #tpu.memory_space<vmem>>, vector<4x1000xf32>
    tpu.vector_store %arg9[%c24, %c0_22], %20 {strides = array<i32>} : memref<108x1000xf32, #tpu.memory_space<vmem>>, vector<4x1000xf32>,
    %c0_23 = arith.constant 0 : index
    %c0_24 = arith.constant 0 : index
    %c38 = arith.constant 38 : index
    %22 = vector.load %arg1[%c0_23, %c0_24, %c38] : memref<1x4x1256xf32, #tpu.memory_space<vmem>>, vector<1x4x1000xf32>
    %23 = vector.shape_cast %22 : vector<1x4x1000xf32> to vector<4x1000xf32>
    %c28_25 = arith.constant 28 : index
    %c0_26 = arith.constant 0 : index
    %24 = vector.load %arg9[%c28_25, %c0_26] : memref<108x1000xf32, #tpu.memory_space<vmem>>, vector<4x1000xf32>
    tpu.vector_store %arg9[%c28_25, %c0_26], %23 {strides = array<i32>} : memref<108x1000xf32, #tpu.memory_space<vmem>>, vector<4x1000xf32>,
    %c0_27 = arith.constant 0 : index
    %c0_28 = arith.constant 0 : index
    %c39 = arith.constant 39 : index
    %25 = vector.load %arg1[%c0_27, %c0_28, %c39] : memref<1x4x1256xf32, #tpu.memory_space<vmem>>, vector<1x4x1000xf32>
    %26 = vector.shape_cast %25 : vector<1x4x1000xf32> to vector<4x1000xf32>
    %c32 = arith.constant 32 : index
    %c0_29 = arith.constant 0 : index
    %27 = vector.load %arg9[%c32, %c0_29] : memref<108x1000xf32, #tpu.memory_space<vmem>>, vector<4x1000xf32>
    tpu.vector_store %arg9[%c32, %c0_29], %26 {strides = array<i32>} : memref<108x1000xf32, #tpu.memory_space<vmem>>, vector<4x1000xf32>,
    %c0_30 = arith.constant 0 : index
    %c0_31 = arith.constant 0 : index
    %c117 = arith.constant 117 : index
    %28 = vector.load %arg1[%c0_30, %c0_31, %c117] : memref<1x4x1256xf32, #tpu.memory_space<vmem>>, vector<1x4x1000xf32>
    %29 = vector.shape_cast %28 : vector<1x4x1000xf32> to vector<4x1000xf32>
    %c36 = arith.constant 36 : index
    %c0_32 = arith.constant 0 : index
    %30 = vector.load %arg9[%c36, %c0_32] : memref<108x1000xf32, #tpu.memory_space<vmem>>, vector<4x1000xf32>
    tpu.vector_store %arg9[%c36, %c0_32], %29 {strides = array<i32>} : memref<108x1000xf32, #tpu.memory_space<vmem>>, vector<4x1000xf32>,
    %c0_33 = arith.constant 0 : index
    %c0_34 = arith.constant 0 : index
    %c118 = arith.constant 118 : index
    %31 = vector.load %arg1[%c0_33, %c0_34, %c118] : memref<1x4x1256xf32, #tpu.memory_space<vmem>>, vector<1x4x1000xf32>
    %32 = vector.shape_cast %31 : vector<1x4x1000xf32> to vector<4x1000xf32>
    %c40 = arith.constant 40 : index
    %c0_35 = arith.constant 0 : index
    %33 = vector.load %arg9[%c40, %c0_35] : memref<108x1000xf32, #tpu.memory_space<vmem>>, vector<4x1000xf32>
    tpu.vector_store %arg9[%c40, %c0_35], %32 {strides = array<i32>} : memref<108x1000xf32, #tpu.memory_space<vmem>>, vector<4x1000xf32>,
    %c0_36 = arith.constant 0 : index
    %c0_37 = arith.constant 0 : index
    %c119 = arith.constant 119 : index
    %34 = vector.load %arg1[%c0_36, %c0_37, %c119] : memref<1x4x1256xf32, #tpu.memory_space<vmem>>, vector<1x4x1000xf32>
    %35 = vector.shape_cast %34 : vector<1x4x1000xf32> to vector<4x1000xf32>
    %c44 = arith.constant 44 : index
    %c0_38 = arith.constant 0 : index
    %36 = vector.load %arg9[%c44, %c0_38] : memref<108x1000xf32, #tpu.memory_space<vmem>>, vector<4x1000xf32>
    tpu.vector_store %arg9[%c44, %c0_38], %35 {strides = array<i32>} : memref<108x1000xf32, #tpu.memory_space<vmem>>, vector<4x1000xf32>,
    %c0_39 = arith.constant 0 : index
    %c0_40 = arith.constant 0 : index
    %c127 = arith.constant 127 : index
    %37 = vector.load %arg1[%c0_39, %c0_40, %c127] : memref<1x4x1256xf32, #tpu.memory_space<vmem>>, vector<1x4x1000xf32>
    %38 = vector.shape_cast %37 : vector<1x4x1000xf32> to vector<4x1000xf32>
    %c48 = arith.constant 48 : index
    %c0_41 = arith.constant 0 : index
    %39 = vector.load %arg9[%c48, %c0_41] : memref<108x1000xf32, #tpu.memory_space<vmem>>, vector<4x1000xf32>
    tpu.vector_store %arg9[%c48, %c0_41], %38 {strides = array<i32>} : memref<108x1000xf32, #tpu.memory_space<vmem>>, vector<4x1000xf32>,
    %c0_42 = arith.constant 0 : index
    %c0_43 = arith.constant 0 : index
    %c128 = arith.constant 128 : index
    %40 = vector.load %arg1[%c0_42, %c0_43, %c128] : memref<1x4x1256xf32, #tpu.memory_space<vmem>>, vector<1x4x1000xf32>
    %41 = vector.shape_cast %40 : vector<1x4x1000xf32> to vector<4x1000xf32>
    %c52 = arith.constant 52 : index
    %c0_44 = arith.constant 0 : index
    %42 = vector.load %arg9[%c52, %c0_44] : memref<108x1000xf32, #tpu.memory_space<vmem>>, vector<4x1000xf32>
    tpu.vector_store %arg9[%c52, %c0_44], %41 {strides = array<i32>} : memref<108x1000xf32, #tpu.memory_space<vmem>>, vector<4x1000xf32>,
    %c0_45 = arith.constant 0 : index
    %c0_46 = arith.constant 0 : index
    %c129 = arith.constant 129 : index
    %43 = vector.load %arg1[%c0_45, %c0_46, %c129] : memref<1x4x1256xf32, #tpu.memory_space<vmem>>, vector<1x4x1000xf32>
    %44 = vector.shape_cast %43 : vector<1x4x1000xf32> to vector<4x1000xf32>
    %c56 = arith.constant 56 : index
    %c0_47 = arith.constant 0 : index
    %45 = vector.load %arg9[%c56, %c0_47] : memref<108x1000xf32, #tpu.memory_space<vmem>>, vector<4x1000xf32>
    tpu.vector_store %arg9[%c56, %c0_47], %44 {strides = array<i32>} : memref<108x1000xf32, #tpu.memory_space<vmem>>, vector<4x1000xf32>,
    %c0_48 = arith.constant 0 : index
    %c0_49 = arith.constant 0 : index
    %c137 = arith.constant 137 : index
    %46 = vector.load %arg1[%c0_48, %c0_49, %c137] : memref<1x4x1256xf32, #tpu.memory_space<vmem>>, vector<1x4x1000xf32>
    %47 = vector.shape_cast %46 : vector<1x4x1000xf32> to vector<4x1000xf32>
    %c60 = arith.constant 60 : index
    %c0_50 = arith.constant 0 : index
    %48 = vector.load %arg9[%c60, %c0_50] : memref<108x1000xf32, #tpu.memory_space<vmem>>, vector<4x1000xf32>
    tpu.vector_store %arg9[%c60, %c0_50], %47 {strides = array<i32>} : memref<108x1000xf32, #tpu.memory_space<vmem>>, vector<4x1000xf32>,
    %c0_51 = arith.constant 0 : index
    %c0_52 = arith.constant 0 : index
    %c138 = arith.constant 138 : index
    %49 = vector.load %arg1[%c0_51, %c0_52, %c138] : memref<1x4x1256xf32, #tpu.memory_space<vmem>>, vector<1x4x1000xf32>
    %50 = vector.shape_cast %49 : vector<1x4x1000xf32> to vector<4x1000xf32>
    %c64 = arith.constant 64 : index
    %c0_53 = arith.constant 0 : index
    %51 = vector.load %arg9[%c64, %c0_53] : memref<108x1000xf32, #tpu.memory_space<vmem>>, vector<4x1000xf32>
    tpu.vector_store %arg9[%c64, %c0_53], %50 {strides = array<i32>} : memref<108x1000xf32, #tpu.memory_space<vmem>>, vector<4x1000xf32>,
    %c0_54 = arith.constant 0 : index
    %c0_55 = arith.constant 0 : index
    %c139 = arith.constant 139 : index
    %52 = vector.load %arg1[%c0_54, %c0_55, %c139] : memref<1x4x1256xf32, #tpu.memory_space<vmem>>, vector<1x4x1000xf32>
    %53 = vector.shape_cast %52 : vector<1x4x1000xf32> to vector<4x1000xf32>
    %c68 = arith.constant 68 : index
    %c0_56 = arith.constant 0 : index
    %54 = vector.load %arg9[%c68, %c0_56] : memref<108x1000xf32, #tpu.memory_space<vmem>>, vector<4x1000xf32>
    tpu.vector_store %arg9[%c68, %c0_56], %53 {strides = array<i32>} : memref<108x1000xf32, #tpu.memory_space<vmem>>, vector<4x1000xf32>,
    %c0_57 = arith.constant 0 : index
    %c0_58 = arith.constant 0 : index
    %c217 = arith.constant 217 : index
    %55 = vector.load %arg1[%c0_57, %c0_58, %c217] : memref<1x4x1256xf32, #tpu.memory_space<vmem>>, vector<1x4x1000xf32>
    %56 = vector.shape_cast %55 : vector<1x4x1000xf32> to vector<4x1000xf32>
    %c72 = arith.constant 72 : index
    %c0_59 = arith.constant 0 : index
    %57 = vector.load %arg9[%c72, %c0_59] : memref<108x1000xf32, #tpu.memory_space<vmem>>, vector<4x1000xf32>
    tpu.vector_store %arg9[%c72, %c0_59], %56 {strides = array<i32>} : memref<108x1000xf32, #tpu.memory_space<vmem>>, vector<4x1000xf32>,
    %c0_60 = arith.constant 0 : index
    %c0_61 = arith.constant 0 : index
    %c218 = arith.constant 218 : index
    %58 = vector.load %arg1[%c0_60, %c0_61, %c218] : memref<1x4x1256xf32, #tpu.memory_space<vmem>>, vector<1x4x1000xf32>
    %59 = vector.shape_cast %58 : vector<1x4x1000xf32> to vector<4x1000xf32>
    %c76 = arith.constant 76 : index
    %c0_62 = arith.constant 0 : index
    %60 = vector.load %arg9[%c76, %c0_62] : memref<108x1000xf32, #tpu.memory_space<vmem>>, vector<4x1000xf32>
    tpu.vector_store %arg9[%c76, %c0_62], %59 {strides = array<i32>} : memref<108x1000xf32, #tpu.memory_space<vmem>>, vector<4x1000xf32>,
    %c0_63 = arith.constant 0 : index
    %c0_64 = arith.constant 0 : index
    %c219 = arith.constant 219 : index
    %61 = vector.load %arg1[%c0_63, %c0_64, %c219] : memref<1x4x1256xf32, #tpu.memory_space<vmem>>, vector<1x4x1000xf32>
    %62 = vector.shape_cast %61 : vector<1x4x1000xf32> to vector<4x1000xf32>
    %c80 = arith.constant 80 : index
    %c0_65 = arith.constant 0 : index
    %63 = vector.load %arg9[%c80, %c0_65] : memref<108x1000xf32, #tpu.memory_space<vmem>>, vector<4x1000xf32>
    tpu.vector_store %arg9[%c80, %c0_65], %62 {strides = array<i32>} : memref<108x1000xf32, #tpu.memory_space<vmem>>, vector<4x1000xf32>,
    %c0_66 = arith.constant 0 : index
    %c0_67 = arith.constant 0 : index
    %c227 = arith.constant 227 : index
    %64 = vector.load %arg1[%c0_66, %c0_67, %c227] : memref<1x4x1256xf32, #tpu.memory_space<vmem>>, vector<1x4x1000xf32>
    %65 = vector.shape_cast %64 : vector<1x4x1000xf32> to vector<4x1000xf32>
    %c84 = arith.constant 84 : index
    %c0_68 = arith.constant 0 : index
    %66 = vector.load %arg9[%c84, %c0_68] : memref<108x1000xf32, #tpu.memory_space<vmem>>, vector<4x1000xf32>
    tpu.vector_store %arg9[%c84, %c0_68], %65 {strides = array<i32>} : memref<108x1000xf32, #tpu.memory_space<vmem>>, vector<4x1000xf32>,
    %c0_69 = arith.constant 0 : index
    %c0_70 = arith.constant 0 : index
    %c228 = arith.constant 228 : index
    %67 = vector.load %arg1[%c0_69, %c0_70, %c228] : memref<1x4x1256xf32, #tpu.memory_space<vmem>>, vector<1x4x1000xf32>
    %68 = vector.shape_cast %67 : vector<1x4x1000xf32> to vector<4x1000xf32>
    %c88 = arith.constant 88 : index
    %c0_71 = arith.constant 0 : index
    %69 = vector.load %arg9[%c88, %c0_71] : memref<108x1000xf32, #tpu.memory_space<vmem>>, vector<4x1000xf32>
    tpu.vector_store %arg9[%c88, %c0_71], %68 {strides = array<i32>} : memref<108x1000xf32, #tpu.memory_space<vmem>>, vector<4x1000xf32>,
    %c0_72 = arith.constant 0 : index
    %c0_73 = arith.constant 0 : index
    %c229 = arith.constant 229 : index
    %70 = vector.load %arg1[%c0_72, %c0_73, %c229] : memref<1x4x1256xf32, #tpu.memory_space<vmem>>, vector<1x4x1000xf32>
    %71 = vector.shape_cast %70 : vector<1x4x1000xf32> to vector<4x1000xf32>
    %c92 = arith.constant 92 : index
    %c0_74 = arith.constant 0 : index
    %72 = vector.load %arg9[%c92, %c0_74] : memref<108x1000xf32, #tpu.memory_space<vmem>>, vector<4x1000xf32>
    tpu.vector_store %arg9[%c92, %c0_74], %71 {strides = array<i32>} : memref<108x1000xf32, #tpu.memory_space<vmem>>, vector<4x1000xf32>,
    %c0_75 = arith.constant 0 : index
    %c0_76 = arith.constant 0 : index
    %c237 = arith.constant 237 : index
    %73 = vector.load %arg1[%c0_75, %c0_76, %c237] : memref<1x4x1256xf32, #tpu.memory_space<vmem>>, vector<1x4x1000xf32>
    %74 = vector.shape_cast %73 : vector<1x4x1000xf32> to vector<4x1000xf32>
    %c96 = arith.constant 96 : index
    %c0_77 = arith.constant 0 : index
    %75 = vector.load %arg9[%c96, %c0_77] : memref<108x1000xf32, #tpu.memory_space<vmem>>, vector<4x1000xf32>
    tpu.vector_store %arg9[%c96, %c0_77], %74 {strides = array<i32>} : memref<108x1000xf32, #tpu.memory_space<vmem>>, vector<4x1000xf32>,
    %c0_78 = arith.constant 0 : index
    %c0_79 = arith.constant 0 : index
    %c238 = arith.constant 238 : index
    %76 = vector.load %arg1[%c0_78, %c0_79, %c238] : memref<1x4x1256xf32, #tpu.memory_space<vmem>>, vector<1x4x1000xf32>
    %77 = vector.shape_cast %76 : vector<1x4x1000xf32> to vector<4x1000xf32>
    %c100 = arith.constant 100 : index
    %c0_80 = arith.constant 0 : index
    %78 = vector.load %arg9[%c100, %c0_80] : memref<108x1000xf32, #tpu.memory_space<vmem>>, vector<4x1000xf32>
    tpu.vector_store %arg9[%c100, %c0_80], %77 {strides = array<i32>} : memref<108x1000xf32, #tpu.memory_space<vmem>>, vector<4x1000xf32>,
    %c0_81 = arith.constant 0 : index
    %c0_82 = arith.constant 0 : index
    %c239 = arith.constant 239 : index
    %79 = vector.load %arg1[%c0_81, %c0_82, %c239] : memref<1x4x1256xf32, #tpu.memory_space<vmem>>, vector<1x4x1000xf32>
    %80 = vector.shape_cast %79 : vector<1x4x1000xf32> to vector<4x1000xf32>
    %c104 = arith.constant 104 : index
    %c0_83 = arith.constant 0 : index
    %81 = vector.load %arg9[%c104, %c0_83] : memref<108x1000xf32, #tpu.memory_space<vmem>>, vector<4x1000xf32>
    tpu.vector_store %arg9[%c104, %c0_83], %80 {strides = array<i32>} : memref<108x1000xf32, #tpu.memory_space<vmem>>, vector<4x1000xf32>,
    %c0_84 = arith.constant 0 : index
    %c0_85 = arith.constant 0 : index
    %82 = vector.load %arg2[%c0_84, %c0_85] : memref<8x108xf32, #tpu.memory_space<vmem>>, vector<8x108xf32>
    %c0_86 = arith.constant 0 : index
    %c0_87 = arith.constant 0 : index
    %83 = vector.load %arg9[%c0_86, %c0_87] : memref<108x1000xf32, #tpu.memory_space<vmem>>, vector<108x1000xf32>
    %cst = arith.constant dense<0.000000e+00> : vector<8x1000xf32>
    %84 = tpu.matmul %82, %83, %cst {dimension_numbers = #tpu.dot_dimension_numbers<[1], [0], [0], [1], [0, 0, 1, 1], [], []>} : vector<8x108xf32>, vector<108x1000xf32>, vector<8x1000xf32> -> vector<8x1000xf32>
    %85 = vector.broadcast %0 : vector<1x1000xf32> to vector<8x1000xf32>
    %86 = arith.mulf %84, %85 : vector<8x1000xf32>
    %cst_88 = arith.constant dense<0.000000e+00> : vector<8xf32>
    %87 = vector.multi_reduction <add>, %86, %cst_88 [1] : vector<8x1000xf32> to vector<8xf32>
    %88 = vector.shape_cast %87 : vector<8xf32> to vector<8x1xf32>
    %cst_89 = arith.constant 0.001953125 : f32
    %89 = vector.broadcast %cst_89 : f32 to vector<8x1xf32>
    %90 = arith.mulf %88, %89 : vector<8x1xf32>
    %91 = vector.broadcast %90 : vector<8x1xf32> to vector<8x1000xf32>
    %92 = arith.subf %84, %91 : vector<8x1000xf32>
    %93 = vector.broadcast %0 : vector<1x1000xf32> to vector<8x1000xf32>
    %94 = arith.mulf %92, %93 : vector<8x1000xf32>
    %95 = arith.mulf %94, %94 : vector<8x1000xf32>
    %cst_90 = arith.constant dense<0.000000e+00> : vector<8xf32>
    %96 = vector.multi_reduction <add>, %95, %cst_90 [1] : vector<8x1000xf32> to vector<8xf32>
    %97 = vector.shape_cast %96 : vector<8xf32> to vector<8x1xf32>
    %cst_91 = arith.constant 0.001953125 : f32
    %98 = vector.broadcast %cst_91 : f32 to vector<8x1xf32>
    %99 = arith.mulf %97, %98 : vector<8x1xf32>
    %cst_92 = arith.constant 9.99999974E-6 : f32
    %100 = vector.broadcast %cst_92 : f32 to vector<8x1xf32>
    %101 = arith.addf %99, %100 : vector<8x1xf32>
    %102 = math.rsqrt %101 : vector<8x1xf32>
    %103 = vector.broadcast %102 : vector<8x1xf32> to vector<8x1000xf32>
    %104 = arith.mulf %94, %103 : vector<8x1000xf32>
    %cst_93 = arith.constant 0.000000e+00 : f32
    %105 = vector.broadcast %cst_93 : f32 to vector<8x1000xf32>
    %106 = arith.maximumf %104, %105 : vector<8x1000xf32>
    %cst_94 = arith.constant 0.000000e+00 : f32
    %107 = vector.broadcast %cst_94 : f32 to vector<8x128xf32>
    %c0_95 = arith.constant 0 : index
    %c0_96 = arith.constant 0 : index
    %108 = vector.load %arg8[%c0_95, %c0_96] : memref<8x1256xf32, #tpu.memory_space<vmem>>, vector<8x128xf32>
    tpu.vector_store %arg8[%c0_95, %c0_96], %107 {strides = array<i32>} : memref<8x1256xf32, #tpu.memory_space<vmem>>, vector<8x128xf32>,
    %cst_97 = arith.constant 0.000000e+00 : f32
    %109 = vector.broadcast %cst_97 : f32 to vector<8x128xf32>
    %c0_98 = arith.constant 0 : index
    %c1128 = arith.constant 1128 : index
    %110 = vector.load %arg8[%c0_98, %c1128] : memref<8x1256xf32, #tpu.memory_space<vmem>>, vector<8x128xf32>
    tpu.vector_store %arg8[%c0_98, %c1128], %109 {strides = array<i32>} : memref<8x1256xf32, #tpu.memory_space<vmem>>, vector<8x128xf32>,
    %c0_99 = arith.constant 0 : index
    %c128_100 = arith.constant 128 : index
    %111 = vector.load %arg8[%c0_99, %c128_100] : memref<8x1256xf32, #tpu.memory_space<vmem>>, vector<8x1000xf32>
    tpu.vector_store %arg8[%c0_99, %c128_100], %106 {strides = array<i32>} : memref<8x1256xf32, #tpu.memory_space<vmem>>, vector<8x1000xf32>,
    %c0_101 = arith.constant 0 : index
    %c17_102 = arith.constant 17 : index
    %112 = vector.load %arg8[%c0_101, %c17_102] : memref<8x1256xf32, #tpu.memory_space<vmem>>, vector<8x1000xf32>
    %c0_103 = arith.constant 0 : index
    %c0_104 = arith.constant 0 : index
    %113 = vector.load %arg10[%c0_103, %c0_104] : memref<216x1000xf32, #tpu.memory_space<vmem>>, vector<8x1000xf32>
    tpu.vector_store %arg10[%c0_103, %c0_104], %112 {strides = array<i32>} : memref<216x1000xf32, #tpu.memory_space<vmem>>, vector<8x1000xf32>,
    %c0_105 = arith.constant 0 : index
    %c18_106 = arith.constant 18 : index
    %114 = vector.load %arg8[%c0_105, %c18_106] : memref<8x1256xf32, #tpu.memory_space<vmem>>, vector<8x1000xf32>
    %c8_107 = arith.constant 8 : index
    %c0_108 = arith.constant 0 : index
    %115 = vector.load %arg10[%c8_107, %c0_108] : memref<216x1000xf32, #tpu.memory_space<vmem>>, vector<8x1000xf32>
    tpu.vector_store %arg10[%c8_107, %c0_108], %114 {strides = array<i32>} : memref<216x1000xf32, #tpu.memory_space<vmem>>, vector<8x1000xf32>,
    %c0_109 = arith.constant 0 : index
    %c19_110 = arith.constant 19 : index
    %116 = vector.load %arg8[%c0_109, %c19_110] : memref<8x1256xf32, #tpu.memory_space<vmem>>, vector<8x1000xf32>
    %c16_111 = arith.constant 16 : index
    %c0_112 = arith.constant 0 : index
    %117 = vector.load %arg10[%c16_111, %c0_112] : memref<216x1000xf32, #tpu.memory_space<vmem>>, vector<8x1000xf32>
    tpu.vector_store %arg10[%c16_111, %c0_112], %116 {strides = array<i32>} : memref<216x1000xf32, #tpu.memory_space<vmem>>, vector<8x1000xf32>,
    %c0_113 = arith.constant 0 : index
    %c27_114 = arith.constant 27 : index
    %118 = vector.load %arg8[%c0_113, %c27_114] : memref<8x1256xf32, #tpu.memory_space<vmem>>, vector<8x1000xf32>
    %c24_115 = arith.constant 24 : index
    %c0_116 = arith.constant 0 : index
    %119 = vector.load %arg10[%c24_115, %c0_116] : memref<216x1000xf32, #tpu.memory_space<vmem>>, vector<8x1000xf32>
    tpu.vector_store %arg10[%c24_115, %c0_116], %118 {strides = array<i32>} : memref<216x1000xf32, #tpu.memory_space<vmem>>, vector<8x1000xf32>,
    %c0_117 = arith.constant 0 : index
    %c28_118 = arith.constant 28 : index
    %120 = vector.load %arg8[%c0_117, %c28_118] : memref<8x1256xf32, #tpu.memory_space<vmem>>, vector<8x1000xf32>
    %c32_119 = arith.constant 32 : index
    %c0_120 = arith.constant 0 : index
    %121 = vector.load %arg10[%c32_119, %c0_120] : memref<216x1000xf32, #tpu.memory_space<vmem>>, vector<8x1000xf32>
    tpu.vector_store %arg10[%c32_119, %c0_120], %120 {strides = array<i32>} : memref<216x1000xf32, #tpu.memory_space<vmem>>, vector<8x1000xf32>,
    %c0_121 = arith.constant 0 : index
    %c29_122 = arith.constant 29 : index
    %122 = vector.load %arg8[%c0_121, %c29_122] : memref<8x1256xf32, #tpu.memory_space<vmem>>, vector<8x1000xf32>
    %c40_123 = arith.constant 40 : index
    %c0_124 = arith.constant 0 : index
    %123 = vector.load %arg10[%c40_123, %c0_124] : memref<216x1000xf32, #tpu.memory_space<vmem>>, vector<8x1000xf32>
    tpu.vector_store %arg10[%c40_123, %c0_124], %122 {strides = array<i32>} : memref<216x1000xf32, #tpu.memory_space<vmem>>, vector<8x1000xf32>,
    %c0_125 = arith.constant 0 : index
    %c37_126 = arith.constant 37 : index
    %124 = vector.load %arg8[%c0_125, %c37_126] : memref<8x1256xf32, #tpu.memory_space<vmem>>, vector<8x1000xf32>
    %c48_127 = arith.constant 48 : index
    %c0_128 = arith.constant 0 : index
    %125 = vector.load %arg10[%c48_127, %c0_128] : memref<216x1000xf32, #tpu.memory_space<vmem>>, vector<8x1000xf32>
    tpu.vector_store %arg10[%c48_127, %c0_128], %124 {strides = array<i32>} : memref<216x1000xf32, #tpu.memory_space<vmem>>, vector<8x1000xf32>,
    %c0_129 = arith.constant 0 : index
    %c38_130 = arith.constant 38 : index
    %126 = vector.load %arg8[%c0_129, %c38_130] : memref<8x1256xf32, #tpu.memory_space<vmem>>, vector<8x1000xf32>
    %c56_131 = arith.constant 56 : index
    %c0_132 = arith.constant 0 : index
    %127 = vector.load %arg10[%c56_131, %c0_132] : memref<216x1000xf32, #tpu.memory_space<vmem>>, vector<8x1000xf32>
    tpu.vector_store %arg10[%c56_131, %c0_132], %126 {strides = array<i32>} : memref<216x1000xf32, #tpu.memory_space<vmem>>, vector<8x1000xf32>,
    %c0_133 = arith.constant 0 : index
    %c39_134 = arith.constant 39 : index
    %128 = vector.load %arg8[%c0_133, %c39_134] : memref<8x1256xf32, #tpu.memory_space<vmem>>, vector<8x1000xf32>
    %c64_135 = arith.constant 64 : index
    %c0_136 = arith.constant 0 : index
    %129 = vector.load %arg10[%c64_135, %c0_136] : memref<216x1000xf32, #tpu.memory_space<vmem>>, vector<8x1000xf32>
    tpu.vector_store %arg10[%c64_135, %c0_136], %128 {strides = array<i32>} : memref<216x1000xf32, #tpu.memory_space<vmem>>, vector<8x1000xf32>,
    %c0_137 = arith.constant 0 : index
    %c117_138 = arith.constant 117 : index
    %130 = vector.load %arg8[%c0_137, %c117_138] : memref<8x1256xf32, #tpu.memory_space<vmem>>, vector<8x1000xf32>
    %c72_139 = arith.constant 72 : index
    %c0_140 = arith.constant 0 : index
    %131 = vector.load %arg10[%c72_139, %c0_140] : memref<216x1000xf32, #tpu.memory_space<vmem>>, vector<8x1000xf32>
    tpu.vector_store %arg10[%c72_139, %c0_140], %130 {strides = array<i32>} : memref<216x1000xf32, #tpu.memory_space<vmem>>, vector<8x1000xf32>,
    %c0_141 = arith.constant 0 : index
    %c118_142 = arith.constant 118 : index
    %132 = vector.load %arg8[%c0_141, %c118_142] : memref<8x1256xf32, #tpu.memory_space<vmem>>, vector<8x1000xf32>
    %c80_143 = arith.constant 80 : index
    %c0_144 = arith.constant 0 : index
    %133 = vector.load %arg10[%c80_143, %c0_144] : memref<216x1000xf32, #tpu.memory_space<vmem>>, vector<8x1000xf32>
    tpu.vector_store %arg10[%c80_143, %c0_144], %132 {strides = array<i32>} : memref<216x1000xf32, #tpu.memory_space<vmem>>, vector<8x1000xf32>,
    %c0_145 = arith.constant 0 : index
    %c119_146 = arith.constant 119 : index
    %134 = vector.load %arg8[%c0_145, %c119_146] : memref<8x1256xf32, #tpu.memory_space<vmem>>, vector<8x1000xf32>
    %c88_147 = arith.constant 88 : index
    %c0_148 = arith.constant 0 : index
    %135 = vector.load %arg10[%c88_147, %c0_148] : memref<216x1000xf32, #tpu.memory_space<vmem>>, vector<8x1000xf32>
    tpu.vector_store %arg10[%c88_147, %c0_148], %134 {strides = array<i32>} : memref<216x1000xf32, #tpu.memory_space<vmem>>, vector<8x1000xf32>,
    %c0_149 = arith.constant 0 : index
    %c127_150 = arith.constant 127 : index
    %136 = vector.load %arg8[%c0_149, %c127_150] : memref<8x1256xf32, #tpu.memory_space<vmem>>, vector<8x1000xf32>
    %c96_151 = arith.constant 96 : index
    %c0_152 = arith.constant 0 : index
    %137 = vector.load %arg10[%c96_151, %c0_152] : memref<216x1000xf32, #tpu.memory_space<vmem>>, vector<8x1000xf32>
    tpu.vector_store %arg10[%c96_151, %c0_152], %136 {strides = array<i32>} : memref<216x1000xf32, #tpu.memory_space<vmem>>, vector<8x1000xf32>,
    %c0_153 = arith.constant 0 : index
    %c128_154 = arith.constant 128 : index
    %138 = vector.load %arg8[%c0_153, %c128_154] : memref<8x1256xf32, #tpu.memory_space<vmem>>, vector<8x1000xf32>
    %c104_155 = arith.constant 104 : index
    %c0_156 = arith.constant 0 : index
    %139 = vector.load %arg10[%c104_155, %c0_156] : memref<216x1000xf32, #tpu.memory_space<vmem>>, vector<8x1000xf32>
    tpu.vector_store %arg10[%c104_155, %c0_156], %138 {strides = array<i32>} : memref<216x1000xf32, #tpu.memory_space<vmem>>, vector<8x1000xf32>,
    %c0_157 = arith.constant 0 : index
    %c129_158 = arith.constant 129 : index
    %140 = vector.load %arg8[%c0_157, %c129_158] : memref<8x1256xf32, #tpu.memory_space<vmem>>, vector<8x1000xf32>
    %c112 = arith.constant 112 : index
    %c0_159 = arith.constant 0 : index
    %141 = vector.load %arg10[%c112, %c0_159] : memref<216x1000xf32, #tpu.memory_space<vmem>>, vector<8x1000xf32>
    tpu.vector_store %arg10[%c112, %c0_159], %140 {strides = array<i32>} : memref<216x1000xf32, #tpu.memory_space<vmem>>, vector<8x1000xf32>,
    %c0_160 = arith.constant 0 : index
    %c137_161 = arith.constant 137 : index
    %142 = vector.load %arg8[%c0_160, %c137_161] : memref<8x1256xf32, #tpu.memory_space<vmem>>, vector<8x1000xf32>
    %c120 = arith.constant 120 : index
    %c0_162 = arith.constant 0 : index
    %143 = vector.load %arg10[%c120, %c0_162] : memref<216x1000xf32, #tpu.memory_space<vmem>>, vector<8x1000xf32>
    tpu.vector_store %arg10[%c120, %c0_162], %142 {strides = array<i32>} : memref<216x1000xf32, #tpu.memory_space<vmem>>, vector<8x1000xf32>,
    %c0_163 = arith.constant 0 : index
    %c138_164 = arith.constant 138 : index
    %144 = vector.load %arg8[%c0_163, %c138_164] : memref<8x1256xf32, #tpu.memory_space<vmem>>, vector<8x1000xf32>
    %c128_165 = arith.constant 128 : index
    %c0_166 = arith.constant 0 : index
    %145 = vector.load %arg10[%c128_165, %c0_166] : memref<216x1000xf32, #tpu.memory_space<vmem>>, vector<8x1000xf32>
    tpu.vector_store %arg10[%c128_165, %c0_166], %144 {strides = array<i32>} : memref<216x1000xf32, #tpu.memory_space<vmem>>, vector<8x1000xf32>,
    %c0_167 = arith.constant 0 : index
    %c139_168 = arith.constant 139 : index
    %146 = vector.load %arg8[%c0_167, %c139_168] : memref<8x1256xf32, #tpu.memory_space<vmem>>, vector<8x1000xf32>
    %c136 = arith.constant 136 : index
    %c0_169 = arith.constant 0 : index
    %147 = vector.load %arg10[%c136, %c0_169] : memref<216x1000xf32, #tpu.memory_space<vmem>>, vector<8x1000xf32>
    tpu.vector_store %arg10[%c136, %c0_169], %146 {strides = array<i32>} : memref<216x1000xf32, #tpu.memory_space<vmem>>, vector<8x1000xf32>,
    %c0_170 = arith.constant 0 : index
    %c217_171 = arith.constant 217 : index
    %148 = vector.load %arg8[%c0_170, %c217_171] : memref<8x1256xf32, #tpu.memory_space<vmem>>, vector<8x1000xf32>
    %c144 = arith.constant 144 : index
    %c0_172 = arith.constant 0 : index
    %149 = vector.load %arg10[%c144, %c0_172] : memref<216x1000xf32, #tpu.memory_space<vmem>>, vector<8x1000xf32>
    tpu.vector_store %arg10[%c144, %c0_172], %148 {strides = array<i32>} : memref<216x1000xf32, #tpu.memory_space<vmem>>, vector<8x1000xf32>,
    %c0_173 = arith.constant 0 : index
    %c218_174 = arith.constant 218 : index
    %150 = vector.load %arg8[%c0_173, %c218_174] : memref<8x1256xf32, #tpu.memory_space<vmem>>, vector<8x1000xf32>
    %c152 = arith.constant 152 : index
    %c0_175 = arith.constant 0 : index
    %151 = vector.load %arg10[%c152, %c0_175] : memref<216x1000xf32, #tpu.memory_space<vmem>>, vector<8x1000xf32>
    tpu.vector_store %arg10[%c152, %c0_175], %150 {strides = array<i32>} : memref<216x1000xf32, #tpu.memory_space<vmem>>, vector<8x1000xf32>,
    %c0_176 = arith.constant 0 : index
    %c219_177 = arith.constant 219 : index
    %152 = vector.load %arg8[%c0_176, %c219_177] : memref<8x1256xf32, #tpu.memory_space<vmem>>, vector<8x1000xf32>
    %c160 = arith.constant 160 : index
    %c0_178 = arith.constant 0 : index
    %153 = vector.load %arg10[%c160, %c0_178] : memref<216x1000xf32, #tpu.memory_space<vmem>>, vector<8x1000xf32>
    tpu.vector_store %arg10[%c160, %c0_178], %152 {strides = array<i32>} : memref<216x1000xf32, #tpu.memory_space<vmem>>, vector<8x1000xf32>,
    %c0_179 = arith.constant 0 : index
    %c227_180 = arith.constant 227 : index
    %154 = vector.load %arg8[%c0_179, %c227_180] : memref<8x1256xf32, #tpu.memory_space<vmem>>, vector<8x1000xf32>
    %c168 = arith.constant 168 : index
    %c0_181 = arith.constant 0 : index
    %155 = vector.load %arg10[%c168, %c0_181] : memref<216x1000xf32, #tpu.memory_space<vmem>>, vector<8x1000xf32>
    tpu.vector_store %arg10[%c168, %c0_181], %154 {strides = array<i32>} : memref<216x1000xf32, #tpu.memory_space<vmem>>, vector<8x1000xf32>,
    %c0_182 = arith.constant 0 : index
    %c228_183 = arith.constant 228 : index
    %156 = vector.load %arg8[%c0_182, %c228_183] : memref<8x1256xf32, #tpu.memory_space<vmem>>, vector<8x1000xf32>
    %c176 = arith.constant 176 : index
    %c0_184 = arith.constant 0 : index
    %157 = vector.load %arg10[%c176, %c0_184] : memref<216x1000xf32, #tpu.memory_space<vmem>>, vector<8x1000xf32>
    tpu.vector_store %arg10[%c176, %c0_184], %156 {strides = array<i32>} : memref<216x1000xf32, #tpu.memory_space<vmem>>, vector<8x1000xf32>,
    %c0_185 = arith.constant 0 : index
    %c229_186 = arith.constant 229 : index
    %158 = vector.load %arg8[%c0_185, %c229_186] : memref<8x1256xf32, #tpu.memory_space<vmem>>, vector<8x1000xf32>
    %c184 = arith.constant 184 : index
    %c0_187 = arith.constant 0 : index
    %159 = vector.load %arg10[%c184, %c0_187] : memref<216x1000xf32, #tpu.memory_space<vmem>>, vector<8x1000xf32>
    tpu.vector_store %arg10[%c184, %c0_187], %158 {strides = array<i32>} : memref<216x1000xf32, #tpu.memory_space<vmem>>, vector<8x1000xf32>,
    %c0_188 = arith.constant 0 : index
    %c237_189 = arith.constant 237 : index
    %160 = vector.load %arg8[%c0_188, %c237_189] : memref<8x1256xf32, #tpu.memory_space<vmem>>, vector<8x1000xf32>
    %c192 = arith.constant 192 : index
    %c0_190 = arith.constant 0 : index
    %161 = vector.load %arg10[%c192, %c0_190] : memref<216x1000xf32, #tpu.memory_space<vmem>>, vector<8x1000xf32>
    tpu.vector_store %arg10[%c192, %c0_190], %160 {strides = array<i32>} : memref<216x1000xf32, #tpu.memory_space<vmem>>, vector<8x1000xf32>,
    %c0_191 = arith.constant 0 : index
    %c238_192 = arith.constant 238 : index
    %162 = vector.load %arg8[%c0_191, %c238_192] : memref<8x1256xf32, #tpu.memory_space<vmem>>, vector<8x1000xf32>
    %c200 = arith.constant 200 : index
    %c0_193 = arith.constant 0 : index
    %163 = vector.load %arg10[%c200, %c0_193] : memref<216x1000xf32, #tpu.memory_space<vmem>>, vector<8x1000xf32>
    tpu.vector_store %arg10[%c200, %c0_193], %162 {strides = array<i32>} : memref<216x1000xf32, #tpu.memory_space<vmem>>, vector<8x1000xf32>,
    %c0_194 = arith.constant 0 : index
    %c239_195 = arith.constant 239 : index
    %164 = vector.load %arg8[%c0_194, %c239_195] : memref<8x1256xf32, #tpu.memory_space<vmem>>, vector<8x1000xf32>
    %c208 = arith.constant 208 : index
    %c0_196 = arith.constant 0 : index
    %165 = vector.load %arg10[%c208, %c0_196] : memref<216x1000xf32, #tpu.memory_space<vmem>>, vector<8x1000xf32>
    tpu.vector_store %arg10[%c208, %c0_196], %164 {strides = array<i32>} : memref<216x1000xf32, #tpu.memory_space<vmem>>, vector<8x1000xf32>,
    %c0_197 = arith.constant 0 : index
    %c0_198 = arith.constant 0 : index
    %166 = vector.load %arg3[%c0_197, %c0_198] : memref<8x216xf32, #tpu.memory_space<vmem>>, vector<8x216xf32>
    %c0_199 = arith.constant 0 : index
    %c0_200 = arith.constant 0 : index
    %167 = vector.load %arg10[%c0_199, %c0_200] : memref<216x1000xf32, #tpu.memory_space<vmem>>, vector<216x1000xf32>
    %cst_201 = arith.constant dense<0.000000e+00> : vector<8x1000xf32>
    %168 = tpu.matmul %166, %167, %cst_201 {dimension_numbers = #tpu.dot_dimension_numbers<[1], [0], [0], [1], [0, 0, 1, 1], [], []>} : vector<8x216xf32>, vector<216x1000xf32>, vector<8x1000xf32> -> vector<8x1000xf32>
    %169 = vector.broadcast %0 : vector<1x1000xf32> to vector<8x1000xf32>
    %170 = arith.mulf %168, %169 : vector<8x1000xf32>
    %cst_202 = arith.constant dense<0.000000e+00> : vector<8xf32>
    %171 = vector.multi_reduction <add>, %170, %cst_202 [1] : vector<8x1000xf32> to vector<8xf32>
    %172 = vector.shape_cast %171 : vector<8xf32> to vector<8x1xf32>
    %cst_203 = arith.constant 0.001953125 : f32
    %173 = vector.broadcast %cst_203 : f32 to vector<8x1xf32>
    %174 = arith.mulf %172, %173 : vector<8x1xf32>
    %175 = vector.broadcast %174 : vector<8x1xf32> to vector<8x1000xf32>
    %176 = arith.subf %168, %175 : vector<8x1000xf32>
    %177 = vector.broadcast %0 : vector<1x1000xf32> to vector<8x1000xf32>
    %178 = arith.mulf %176, %177 : vector<8x1000xf32>
    %179 = arith.mulf %178, %178 : vector<8x1000xf32>
    %cst_204 = arith.constant dense<0.000000e+00> : vector<8xf32>
    %180 = vector.multi_reduction <add>, %179, %cst_204 [1] : vector<8x1000xf32> to vector<8xf32>
    %181 = vector.shape_cast %180 : vector<8xf32> to vector<8x1xf32>
    %cst_205 = arith.constant 0.001953125 : f32
    %182 = vector.broadcast %cst_205 : f32 to vector<8x1xf32>
    %183 = arith.mulf %181, %182 : vector<8x1xf32>
    %cst_206 = arith.constant 9.99999974E-6 : f32
    %184 = vector.broadcast %cst_206 : f32 to vector<8x1xf32>
    %185 = arith.addf %183, %184 : vector<8x1xf32>
    %186 = math.rsqrt %185 : vector<8x1xf32>
    %187 = vector.broadcast %186 : vector<8x1xf32> to vector<8x1000xf32>
    %188 = arith.mulf %178, %187 : vector<8x1000xf32>
    %cst_207 = arith.constant 0.000000e+00 : f32
    %189 = vector.broadcast %cst_207 : f32 to vector<8x1000xf32>
    %190 = arith.maximumf %188, %189 : vector<8x1000xf32>
    %c0_208 = arith.constant 0 : index
    %c0_209 = arith.constant 0 : index
    %191 = vector.load %arg4[%c0_208, %c0_209] : memref<8x4xf32, #tpu.memory_space<vmem>>, vector<8x4xf32>
    %c0_210 = arith.constant 0 : index
    %c0_211 = arith.constant 0 : index
    %c128_212 = arith.constant 128 : index
    %192 = vector.load %arg1[%c0_210, %c0_211, %c128_212] : memref<1x4x1256xf32, #tpu.memory_space<vmem>>, vector<1x4x1000xf32>
    %193 = vector.shape_cast %192 : vector<1x4x1000xf32> to vector<4x1000xf32>
    %cst_213 = arith.constant dense<0.000000e+00> : vector<8x1000xf32>
    %194 = tpu.matmul %191, %193, %cst_213 {dimension_numbers = #tpu.dot_dimension_numbers<[1], [0], [0], [1], [0, 0, 1, 1], [], []>} : vector<8x4xf32>, vector<4x1000xf32>, vector<8x1000xf32> -> vector<8x1000xf32>
    %c0_214 = arith.constant 0 : index
    %c0_215 = arith.constant 0 : index
    %195 = vector.load %arg5[%c0_214, %c0_215] : memref<8x1xf32, #tpu.memory_space<vmem>>, vector<8x1xf32>
    %196 = vector.broadcast %195 : vector<8x1xf32> to vector<8x1000xf32>
    %197 = arith.addf %194, %196 : vector<8x1000xf32>
    %198 = arith.addf %190, %197 : vector<8x1000xf32>
    %c0_216 = arith.constant 0 : index
    %c0_217 = arith.constant 0 : index
    %c0_218 = arith.constant 0 : index
    %199 = vector.load %arg7[%c0_216, %c0_217, %c0_218] : memref<1x8x1000xf32, #tpu.memory_space<vmem>>, vector<1x8x1000xf32>
    %200 = vector.shape_cast %199 : vector<1x8x1000xf32> to vector<8x1000xf32>
    %201 = vector.shape_cast %198 : vector<8x1000xf32> to vector<1x8x1000xf32>
    tpu.vector_store %arg7[%c0_216, %c0_217, %c0_218], %201 {strides = array<i32>} : memref<1x8x1000xf32, #tpu.memory_space<vmem>>, vector<1x8x1000xf32>,
    return
  }
  func.func @transform_0(%arg0: i32) -> (i32, i32, i32) {
    %c0_i32 = arith.constant 0 : i32
    %c0_i32_0 = arith.constant 0 : i32
    %c0_i32_1 = arith.constant 0 : i32
    return %arg0, %c0_i32, %c0_i32_0 : i32, i32, i32
  }
  func.func @transform_1(%arg0: i32) -> (i32, i32) {
    %c0_i32 = arith.constant 0 : i32
    %c0_i32_0 = arith.constant 0 : i32
    %c0_i32_1 = arith.constant 0 : i32
    return %c0_i32, %c0_i32_0 : i32, i32
  }
  func.func @transform_2(%arg0: i32) -> (i32, i32) {
    %c0_i32 = arith.constant 0 : i32
    %c0_i32_0 = arith.constant 0 : i32
    %c0_i32_1 = arith.constant 0 : i32
    return %c0_i32, %c0_i32_0 : i32, i32
  }
  func.func @transform_3(%arg0: i32) -> (i32, i32) {
    %c0_i32 = arith.constant 0 : i32
    %c0_i32_0 = arith.constant 0 : i32
    %c0_i32_1 = arith.constant 0 : i32
    return %c0_i32, %c0_i32_0 : i32, i32
  }
  func.func @transform_4(%arg0: i32) -> (i32, i32) {
    %c0_i32 = arith.constant 0 : i32
    %c0_i32_0 = arith.constant 0 : i32
    %c0_i32_1 = arith.constant 0 : i32
    return %c0_i32, %c0_i32_0 : i32, i32
  }
  func.func @transform_5(%arg0: i32) -> (i32, i32) {
    %c0_i32 = arith.constant 0 : i32
    %c0_i32_0 = arith.constant 0 : i32
    %c0_i32_1 = arith.constant 0 : i32
    return %c0_i32, %c0_i32_0 : i32, i32
  }
  func.func @transform_6(%arg0: i32) -> (i32, i32, i32) {
    %c0_i32 = arith.constant 0 : i32
    %c0_i32_0 = arith.constant 0 : i32
    %c0_i32_1 = arith.constant 0 : i32
    return %arg0, %c0_i32, %c0_i32_0 : i32, i32, i32
  }
}

</mosaic_0001>

<llo_original>
// kernel: tpu_custom_call.1
$region0: #{tpu_custom_call.1}
  #allocation0 [shape = 'u32[]', space=smem, size = 0x4, offset = 0x4, fixed_abs, tag = 'smem constant byte address 0x4 - core index']
  #allocation1 [shape = 'u32[144,128]{1,0:T(1,128)}', space=vmem, size = 0x12000, scoped, tag = 'internal scratch']
  #allocation2 [shape = 'f32[8,1256]{1,0:T(8,128)}', space=vmem, size = 0xa000, scoped, tag = 'scratch operand']
  #allocation3 [shape = 'f32[108,1000]{1,0:T(8,128)}', space=vmem, size = 0x70000, scoped, tag = 'scratch operand']
  #allocation4 [shape = 'f32[216,1000]{1,0:T(8,128)}', space=vmem, size = 0xd8000, scoped, tag = 'scratch operand']
  %s0 = inlined_call_operand.hbm [shape: f32[2,4,1256], index: 0, kind: input, shape index: {}]
  %s1 = inlined_call_operand.vmem [shape: f32[8,108], index: 1, kind: input, shape index: {}]
  %s2 = inlined_call_operand.vmem [shape: f32[8,216], index: 2, kind: input, shape index: {}]
  %s3 = inlined_call_operand.vmem [shape: f32[8,4], index: 3, kind: input, shape index: {}]
  %s4 = inlined_call_operand.vmem [shape: f32[8,1], index: 4, kind: input, shape index: {}]
  %s5 = inlined_call_operand.vmem [shape: f32[1,1000], index: 5, kind: input, shape index: {}]
  %s6 = inlined_call_operand.hbm [shape: f32[2,8,1000], index: 6, kind: output, shape index: {}]
  %s7 = sld [smem:[#allocation0]]
  $region61: #{tpu_custom_call.1} parent=0
    _
  %s9 = ssub.s32 1, %s7
  %s10 = scalar_select 0, %s9, %s7
  $region1: #{tpu_custom_call.1} parent=0
    #allocation5 [shape = 'u8[40960]{0}', space=vmem, size = 0xa000, scoped, tag = 'input window, operand 0']
    #allocation6 [shape = 's32[2]{0}', space=sflag, size = 0x8, scoped, tag = 'scoped memory for tpu_custom_call.1']
    #allocation7 [shape = 's32[2]{0}', space=sflag, size = 0x8, scoped, tag = 'scoped memory for tpu_custom_call.1']
    #allocation8 [shape = 'u8[65536]{0}', space=vmem, size = 0x10000, scoped, tag = 'output window, operand 0']
    %11 = vsyncpa [#allocation6], 0
    %s12 = scalar_lea.sflag [#allocation6], 1
    %13 = vsyncpa %s12, 0
    %14 = vsyncpa [#allocation7], 0
    %s15 = scalar_lea.sflag [#allocation7], 1
    %16 = vsyncpa %s15, 0
    loop: start=0, step=1, limit=4
    $region2: #{tpu_custom_call.1} parent=1 // loop_pre_header
      _
    $region3: #{tpu_custom_call.1} parent=1 // loop_header
      %s18 = sphi 0, %s22
      %p19 = scmp.ge.s32.totalorder %s18, 4
      %s28 = sphi 0, %s30
      %s31 = sphi 0, %s28
      %s32 = sphi 0, %s31
      %s48 = sphi 0, %s32
      %s52 = sphi 0, %s52
      %s54 = sphi 0, %s52
      %s55 = sphi 0, %s54
      %s69 = sphi 0, %s55
      %s73 = sphi 0, %s73
      %s75 = sphi 0, %s73
      %s76 = sphi 0, %s75
      %s90 = sphi 0, %s76
      %s94 = sphi 0, %s94
      %s96 = sphi 0, %s94
      %s97 = sphi 0, %s96
      %s111 = sphi 0, %s97
      %s115 = sphi 0, %s115
      %s117 = sphi 0, %s115
      %s118 = sphi 0, %s117
      %s132 = sphi 0, %s118
      %s136 = sphi 0, %s136
      %s138 = sphi 0, %s136
      %s139 = sphi 0, %s138
      %s153 = sphi 0, %s139
      %s159 = sphi 0, %s161
      %s162 = sphi 0, %s159
      %s163 = sphi 0, %s162
      %s179 = sphi 0, %s163
    $region4: #{tpu_custom_call.1} parent=1 // loop_header_branch
      %21 = sbr.rel (%p19) target = $region8
    $region5: #{tpu_custom_call.1} parent=1 // loop_body
      %s23 = ssub.s32 %s18, 1
      %s24 = ssub.s32 %s18, 2
      %s25 = sadd.s32 %s18, 1
      %s26 = ssub.s32 %s18, %s25
      %p27 = scmp.eq.s32.totalorder %s26, 0
      %s29 = sadd.s32 %s28, 1
      %s30 = scalar_select %p27, %s28, %s29
      %p33 = pneg %p27
      %p34 = scmp.eq.s32.totalorder %s18, 1
      %p35 = por %p33, %p34
      %p36 = scmp.ne.s32.totalorder %s28, %s31
      %p37 = scmp.eq.s32.totalorder %s18, 0
      %p38 = por %p36, %p37
      %p39 = scmp.ne.s32.totalorder %s28, %s31
      %p40 = scmp.eq.s32.totalorder %s23, 1
      %p41 = por %p39, %p40
      %p42 = scmp.ne.s32.totalorder %s31, %s32
      %p43 = scmp.eq.s32.totalorder %s23, 0
      %p44 = por %p42, %p43
      %p45 = scmp.ne.s32.totalorder %s31, %s32
      %p46 = scmp.eq.s32.totalorder %s24, 1
      %p47 = por %p45, %p46
      %p49 = scmp.ne.s32.totalorder %s32, %s48
      %p50 = scmp.eq.s32.totalorder %s24, 0
      %p51 = por %p49, %p50
      %s53 = sadd.s32 %s52, 1
      %p56 = scmp.eq.s32.totalorder %s18, 1
      %p57 = scmp.ne.s32.totalorder %s52, %s54
      %p58 = scmp.eq.s32.totalorder %s18, 0
      %p59 = por %p57, %p58
      %p60 = scmp.ne.s32.totalorder %s52, %s54
      %p61 = scmp.eq.s32.totalorder %s23, 1
      %p62 = por %p60, %p61
      %p63 = scmp.ne.s32.totalorder %s54, %s55
      %p64 = scmp.eq.s32.totalorder %s23, 0
      %p65 = por %p63, %p64
      %p66 = scmp.ne.s32.totalorder %s54, %s55
      %p67 = scmp.eq.s32.totalorder %s24, 1
      %p68 = por %p66, %p67
      %p70 = scmp.ne.s32.totalorder %s55, %s69
      %p71 = scmp.eq.s32.totalorder %s24, 0
      %p72 = por %p70, %p71
      %s74 = sadd.s32 %s73, 1
      %p77 = scmp.eq.s32.totalorder %s18, 1
      %p78 = scmp.ne.s32.totalorder %s73, %s75
      %p79 = scmp.eq.s32.totalorder %s18, 0
      %p80 = por %p78, %p79
      %p81 = scmp.ne.s32.totalorder %s73, %s75
      %p82 = scmp.eq.s32.totalorder %s23, 1
      %p83 = por %p81, %p82
      %p84 = scmp.ne.s32.totalorder %s75, %s76
      %p85 = scmp.eq.s32.totalorder %s23, 0
      %p86 = por %p84, %p85
      %p87 = scmp.ne.s32.totalorder %s75, %s76
      %p88 = scmp.eq.s32.totalorder %s24, 1
      %p89 = por %p87, %p88
      %p91 = scmp.ne.s32.totalorder %s76, %s90
      %p92 = scmp.eq.s32.totalorder %s24, 0
      %p93 = por %p91, %p92
      %s95 = sadd.s32 %s94, 1
      %p98 = scmp.eq.s32.totalorder %s18, 1
      %p99 = scmp.ne.s32.totalorder %s94, %s96
      %p100 = scmp.eq.s32.totalorder %s18, 0
      %p101 = por %p99, %p100
      %p102 = scmp.ne.s32.totalorder %s94, %s96
      %p103 = scmp.eq.s32.totalorder %s23, 1
      %p104 = por %p102, %p103
      %p105 = scmp.ne.s32.totalorder %s96, %s97
      %p106 = scmp.eq.s32.totalorder %s23, 0
      %p107 = por %p105, %p106
      %p108 = scmp.ne.s32.totalorder %s96, %s97
      %p109 = scmp.eq.s32.totalorder %s24, 1
      %p110 = por %p108, %p109
      %p112 = scmp.ne.s32.totalorder %s97, %s111
      %p113 = scmp.eq.s32.totalorder %s24, 0
      %p114 = por %p112, %p113
      %s116 = sadd.s32 %s115, 1
      %p119 = scmp.eq.s32.totalorder %s18, 1
      %p120 = scmp.ne.s32.totalorder %s115, %s117
      %p121 = scmp.eq.s32.totalorder %s18, 0
      %p122 = por %p120, %p121
      %p123 = scmp.ne.s32.totalorder %s115, %s117
      %p124 = scmp.eq.s32.totalorder %s23, 1
      %p125 = por %p123, %p124
      %p126 = scmp.ne.s32.totalorder %s117, %s118
      %p127 = scmp.eq.s32.totalorder %s23, 0
      %p128 = por %p126, %p127
      %p129 = scmp.ne.s32.totalorder %s117, %s118
      %p130 = scmp.eq.s32.totalorder %s24, 1
      %p131 = por %p129, %p130
      %p133 = scmp.ne.s32.totalorder %s118, %s132
      %p134 = scmp.eq.s32.totalorder %s24, 0
      %p135 = por %p133, %p134
      %s137 = sadd.s32 %s136, 1
      %p140 = scmp.eq.s32.totalorder %s18, 1
      %p141 = scmp.ne.s32.totalorder %s136, %s138
      %p142 = scmp.eq.s32.totalorder %s18, 0
      %p143 = por %p141, %p142
      %p144 = scmp.ne.s32.totalorder %s136, %s138
      %p145 = scmp.eq.s32.totalorder %s23, 1
      %p146 = por %p144, %p145
      %p147 = scmp.ne.s32.totalorder %s138, %s139
      %p148 = scmp.eq.s32.totalorder %s23, 0
      %p149 = por %p147, %p148
      %p150 = scmp.ne.s32.totalorder %s138, %s139
      %p151 = scmp.eq.s32.totalorder %s24, 1
      %p152 = por %p150, %p151
      %p154 = scmp.ne.s32.totalorder %s139, %s153
      %p155 = scmp.eq.s32.totalorder %s24, 0
      %p156 = por %p154, %p155
      %s157 = ssub.s32 %s18, %s25
      %p158 = scmp.eq.s32.totalorder %s157, 0
      %s160 = sadd.s32 %s159, 1
      %s161 = scalar_select %p158, %s159, %s160
      %p164 = pneg %p158
      %p165 = scmp.eq.s32.totalorder %s18, 1
      %p166 = por %p164, %p165
      %p167 = scmp.ne.s32.totalorder %s159, %s162
      %p168 = scmp.eq.s32.totalorder %s18, 0
      %p169 = por %p167, %p168
      %p170 = scmp.ne.s32.totalorder %s159, %s162
      %p171 = scmp.eq.s32.totalorder %s23, 1
      %p172 = por %p170, %p171
      %p173 = scmp.ne.s32.totalorder %s162, %s163
      %p174 = scmp.eq.s32.totalorder %s23, 0
      %p175 = por %p173, %p174
      %p176 = scmp.ne.s32.totalorder %s162, %s163
      %p177 = scmp.eq.s32.totalorder %s24, 1
      %p178 = por %p176, %p177
      %p180 = scmp.ne.s32.totalorder %s163, %s179
      %p181 = scmp.eq.s32.totalorder %s24, 0
      %p182 = por %p180, %p181
      %p183 = scmp.le.s32.totalorder 1, %s18
      %p184 = scmp.lt.s32.totalorder %s18, 3
      %p185 = pnand %p183, %p184
      %p186 = pneg %p185
      // Predicated region
      $region9: #{tpu_custom_call.1} parent=5 // pred_check
        _
      $region10: #{tpu_custom_call.1} parent=5 // pred_check_branch
        %188 = sbr.rel (%p185) target = $region12
      $region11: #{tpu_custom_call.1} parent=5 // pred_region
        %s189 = ssub.s32 %s18, 1
        // Predicated region
        $region13: #{tpu_custom_call.1} parent=11 // pred_check
          %p190 = pneg %p65
        $region14: #{tpu_custom_call.1} parent=11 // pred_check_branch
          %192 = sbr.rel (%p190) target = $region16
        $region15: #{tpu_custom_call.1} parent=11 // pred_region
          _
        $region16: #{tpu_custom_call.1} parent=11 // pred_fallthru
          _
        // Predicated region
        $region17: #{tpu_custom_call.1} parent=11 // pred_check
          %p193 = pneg %p86
        $region18: #{tpu_custom_call.1} parent=11 // pred_check_branch
          %195 = sbr.rel (%p193) target = $region20
        $region19: #{tpu_custom_call.1} parent=11 // pred_region
          _
        $region20: #{tpu_custom_call.1} parent=11 // pred_fallthru
          _
        // Predicated region
        $region21: #{tpu_custom_call.1} parent=11 // pred_check
          %p196 = pneg %p107
        $region22: #{tpu_custom_call.1} parent=11 // pred_check_branch
          %198 = sbr.rel (%p196) target = $region24
        $region23: #{tpu_custom_call.1} parent=11 // pred_region
          _
        $region24: #{tpu_custom_call.1} parent=11 // pred_fallthru
          _
        // Predicated region
        $region25: #{tpu_custom_call.1} parent=11 // pred_check
          %p199 = pneg %p128
        $region26: #{tpu_custom_call.1} parent=11 // pred_check_branch
          %201 = sbr.rel (%p199) target = $region28
        $region27: #{tpu_custom_call.1} parent=11 // pred_region
          _
        $region28: #{tpu_custom_call.1} parent=11 // pred_fallthru
          _
        // Predicated region
        $region29: #{tpu_custom_call.1} parent=11 // pred_check
          %p202 = pneg %p149
        $region30: #{tpu_custom_call.1} parent=11 // pred_check_branch
          %204 = sbr.rel (%p202) target = $region32
        $region31: #{tpu_custom_call.1} parent=11 // pred_region
          _
        $region32: #{tpu_custom_call.1} parent=11 // pred_fallthru
          _
      $region12: #{tpu_custom_call.1} parent=5 // pred_fallthru
        _
      %p205 = scmp.lt.s32.totalorder %s18, 2
      // Predicated region
      $region33: #{tpu_custom_call.1} parent=5 // pred_check
        %p206 = pneg %p205
      $region34: #{tpu_custom_call.1} parent=5 // pred_check_branch
        %208 = sbr.rel (%p206) target = $region36
      $region35: #{tpu_custom_call.1} parent=5 // pred_region
        // Predicated region
        $region37: #{tpu_custom_call.1} parent=35 // pred_check
          %p209 = pneg %p38
        $region38: #{tpu_custom_call.1} parent=35 // pred_check_branch
          %211 = sbr.rel (%p209) target = $region40
        $region39: #{tpu_custom_call.1} parent=35 // pred_region
          %s212 = sand.u32 %s28, 1
          %s213 = scalar_lea.sflag [#allocation6], %s212
          %s214 = sand.u32 %s28, 1
          %s215 = smul.addr %s214, 40
          %s216 = scalar_lea.vmem [#allocation5], %s215
          %s218 = ssub.s32 640, 640
          %219 = vsyncadd %s213, %s218
          %s220 = smul.addr %s18, 10
          %s221 = smul.addr %s220, 64
          %s222 = scalar_lea.hbm %s0, %s221
          %s224 = sshll.u32 %s216, 4
          %s225 = int_to_ptr.vmem [resolvable:$true] %s224
          %227 = dma.hbm_to_vmem [thread:$0]  %s222, 640, %s225, %s213
        $region40: #{tpu_custom_call.1} parent=35 // pred_fallthru
          _
      $region36: #{tpu_custom_call.1} parent=5 // pred_fallthru
        _
      %p228 = scmp.le.s32.totalorder 1, %s18
      %p229 = scmp.lt.s32.totalorder %s18, 3
      %p230 = pnand %p228, %p229
      %p231 = pneg %p230
      // Predicated region
      $region41: #{tpu_custom_call.1} parent=5 // pred_check
        _
      $region42: #{tpu_custom_call.1} parent=5 // pred_check_branch
        %233 = sbr.rel (%p230) target = $region44
      $region43: #{tpu_custom_call.1} parent=5 // pred_region
        %s234 = ssub.s32 %s18, 1
        %s235 = sand.u32 %s31, 1
        %s236 = scalar_lea.sflag [#allocation6], %s235
        %s237 = sand.u32 %s31, 1
        %s238 = smul.addr %s237, 40
        %s239 = scalar_lea.vmem [#allocation5], %s238
        // Predicated region
        $region45: #{tpu_custom_call.1} parent=43 // pred_check
          %p240 = pneg %p44
        $region46: #{tpu_custom_call.1} parent=43 // pred_check_branch
          %242 = sbr.rel (%p240) target = $region48
        $region47: #{tpu_custom_call.1} parent=43 // pred_region
          %243 = dma.done %s236, 640
        $region48: #{tpu_custom_call.1} parent=43 // pred_fallthru
          _
        %s244 = sand.u32 %s31, 1
        %s245 = scalar_lea.sflag [#allocation6], %s244
        %s246 = sand.u32 %s31, 1
        %s247 = smul.addr %s246, 40
        %s248 = scalar_lea.vmem [#allocation5], %s247
        %p249 = pneg %p44
        %p250 = pneg %p41
        %p251 = pneg %p65
        %p252 = pneg %p62
        %p253 = pneg %p86
        %p254 = pneg %p83
        %p255 = pneg %p107
        %p256 = pneg %p104
        %p257 = pneg %p128
        %p258 = pneg %p125
        %p259 = pneg %p149
        %p260 = pneg %p146
        %p261 = pneg %p175
        %p262 = pneg %p172
        %s263 = sand.u32 %s162, 1
        %s264 = scalar_lea.sflag [#allocation7], %s263
        %s265 = sand.u32 %s162, 1
        %s266 = smul.addr %s265, 64
        %s267 = scalar_lea.vmem [#allocation8], %s266
        %v268 = vld [vmem:[%s5] sm:$0xff]
        %v269 = vld [vmem:[%s239] sm:$0xff]
        %v270 = vld [vmem:[%s239 + $0x8] sm:$0xff]
        %v271 = vld [vmem:[%s239 + $0x10] sm:$0xff]
        %v272 = vld [vmem:[%s239 + $0x18] sm:$0xff]
        %v277 = vcombine.high %v269, %v269
        %v278 = vcombine.high %v270, %v270
        %v279 = vcombine.high %v271, %v271
        %v280 = vcombine.high %v272, %v272
        %281 = vrot.lane.b32.xlu0 %v269, 111
        %v282 = vpop.permute.xlu0 %281
        %283 = vrot.lane.b32.xlu0 %v277, 111
        %v284 = vpop.permute.xlu0 %283
        %285 = vrot.lane.b32.xlu0 %v270, 111
        %v286 = vpop.permute.xlu0 %285
        %287 = vrot.lane.b32.xlu0 %v278, 111
        %v288 = vpop.permute.xlu0 %287
        %289 = vrot.lane.b32.xlu0 %v271, 111
        %v290 = vpop.permute.xlu0 %289
        %291 = vrot.lane.b32.xlu0 %v279, 111
        %v292 = vpop.permute.xlu0 %291
        %293 = vrot.lane.b32.xlu0 %v272, 111
        %v294 = vpop.permute.xlu0 %293
        %295 = vrot.lane.b32.xlu0 %v280, 111
        %v296 = vpop.permute.xlu0 %295
        %vm297 = vcmask 908288
        %v298 = vsel %vm297, %v282, %v284
        %v299 = vsel %vm297, %v284, %v286
        %v300 = vsel %vm297, %v286, %v288
        %v301 = vsel %vm297, %v288, %v290
        %v302 = vsel %vm297, %v290, %v292
        %v303 = vsel %vm297, %v292, %v294
        %v304 = vsel %vm297, %v294, %v296
        %313 = vst [vmem:[#allocation3] sm:$0xf] %v298
        %314 = vst [vmem:[#allocation3 + $0x8] sm:$0xf] %v299
        %315 = vst [vmem:[#allocation3 + $0x10] sm:$0xf] %v300
        %316 = vst [vmem:[#allocation3 + $0x18] sm:$0xf] %v301
        %317 = vst [vmem:[#allocation3 + $0x20] sm:$0xf] %v302
        %318 = vst [vmem:[#allocation3 + $0x28] sm:$0xf] %v303
        %319 = vst [vmem:[#allocation3 + $0x30] sm:$0xf] %v304
        %vm320 = vcmask 846848
        %321 = vst.msk [vmem:[#allocation3 + $0x38] sm:$0xf] %vm320, %v296
        %v322 = vld [vmem:[%s239] sm:$0xff]
        %v323 = vld [vmem:[%s239 + $0x8] sm:$0xff]
        %v324 = vld [vmem:[%s239 + $0x10] sm:$0xff]
        %v325 = vld [vmem:[%s239 + $0x18] sm:$0xff]
        %v330 = vcombine.low %v322, %v322
        %v331 = vcombine.low %v323, %v323
        %v332 = vcombine.low %v324, %v324
        %v333 = vcombine.low %v325, %v325
        %334 = vrot.lane.b32.xlu0 %v330, 110
        %v335 = vpop.permute.xlu0 %334
        %336 = vrot.lane.b32.xlu0 %v322, 110
        %v337 = vpop.permute.xlu0 %336
        %338 = vrot.lane.b32.xlu0 %v331, 110
        %v339 = vpop.permute.xlu0 %338
        %340 = vrot.lane.b32.xlu0 %v323, 110
        %v341 = vpop.permute.xlu0 %340
        %342 = vrot.lane.b32.xlu0 %v332, 110
        %v343 = vpop.permute.xlu0 %342
        %344 = vrot.lane.b32.xlu0 %v324, 110
        %v345 = vpop.permute.xlu0 %344
        %346 = vrot.lane.b32.xlu0 %v333, 110
        %v347 = vpop.permute.xlu0 %346
        %348 = vrot.lane.b32.xlu0 %v325, 110
        %v349 = vpop.permute.xlu0 %348
        %vm350 = vcmask 900096
        %v351 = vsel %vm350, %v335, %v337
        %v352 = vsel %vm350, %v337, %v339
        %v353 = vsel %vm350, %v339, %v341
        %v354 = vsel %vm350, %v341, %v343
        %v355 = vsel %vm350, %v343, %v345
        %v356 = vsel %vm350, %v345, %v347
        %v357 = vsel %vm350, %v347, %v349
        %366 = vst [vmem:[#allocation3] sm:$0xf0] %v351
        %367 = vst [vmem:[#allocation3 + $0x8] sm:$0xf0] %v352
        %368 = vst [vmem:[#allocation3 + $0x10] sm:$0xf0] %v353
        %369 = vst [vmem:[#allocation3 + $0x18] sm:$0xf0] %v354
        %370 = vst [vmem:[#allocation3 + $0x20] sm:$0xf0] %v355
        %371 = vst [vmem:[#allocation3 + $0x28] sm:$0xf0] %v356
        %372 = vst [vmem:[#allocation3 + $0x30] sm:$0xf0] %v357
        %vm373 = vcmask 850948
        %374 = vst.msk [vmem:[#allocation3 + $0x38] sm:$0xf0] %vm373, %v349
        %v375 = vld [vmem:[%s239] sm:$0xff]
        %v376 = vld [vmem:[%s239 + $0x8] sm:$0xff]
        %v377 = vld [vmem:[%s239 + $0x10] sm:$0xff]
        %v378 = vld [vmem:[%s239 + $0x18] sm:$0xff]
        %v383 = vcombine.high %v375, %v375
        %v384 = vcombine.high %v376, %v376
        %v385 = vcombine.high %v377, %v377
        %v386 = vcombine.high %v378, %v378
        %387 = vrot.lane.b32.xlu0 %v375, 109
        %v388 = vpop.permute.xlu0 %387
        %389 = vrot.lane.b32.xlu0 %v383, 109
        %v390 = vpop.permute.xlu0 %389
        %391 = vrot.lane.b32.xlu0 %v376, 109
        %v392 = vpop.permute.xlu0 %391
        %393 = vrot.lane.b32.xlu0 %v384, 109
        %v394 = vpop.permute.xlu0 %393
        %395 = vrot.lane.b32.xlu0 %v377, 109
        %v396 = vpop.permute.xlu0 %395
        %397 = vrot.lane.b32.xlu0 %v385, 109
        %v398 = vpop.permute.xlu0 %397
        %399 = vrot.lane.b32.xlu0 %v378, 109
        %v400 = vpop.permute.xlu0 %399
        %401 = vrot.lane.b32.xlu0 %v386, 109
        %v402 = vpop.permute.xlu0 %401
        %vm403 = vcmask 891904
        %v404 = vsel %vm403, %v388, %v390
        %v405 = vsel %vm403, %v390, %v392
        %v406 = vsel %vm403, %v392, %v394
        %v407 = vsel %vm403, %v394, %v396
        %v408 = vsel %vm403, %v396, %v398
        %v409 = vsel %vm403, %v398, %v400
        %v410 = vsel %vm403, %v400, %v402
        %419 = vst [vmem:[#allocation3 + $0x40] sm:$0xf] %v404
        %420 = vst [vmem:[#allocation3 + $0x48] sm:$0xf] %v405
        %421 = vst [vmem:[#allocation3 + $0x50] sm:$0xf] %v406
        %422 = vst [vmem:[#allocation3 + $0x58] sm:$0xf] %v407
        %423 = vst [vmem:[#allocation3 + $0x60] sm:$0xf] %v408
        %424 = vst [vmem:[#allocation3 + $0x68] sm:$0xf] %v409
        %425 = vst [vmem:[#allocation3 + $0x70] sm:$0xf] %v410
        %426 = vst.msk [vmem:[#allocation3 + $0x78] sm:$0xf] %vm320, %v402
        %v427 = vld [vmem:[%s239] sm:$0xff]
        %v428 = vld [vmem:[%s239 + $0x8] sm:$0xff]
        %v429 = vld [vmem:[%s239 + $0x10] sm:$0xff]
        %v430 = vld [vmem:[%s239 + $0x18] sm:$0xff]
        %v431 = vld [vmem:[%s239 + $0x20] sm:$0xf]
        %v437 = vcombine.low %v427, %v427
        %v438 = vcombine.low %v428, %v428
        %v439 = vcombine.low %v429, %v429
        %v440 = vcombine.low %v430, %v430
        %v441 = vcombine.low %v431, %v431
        %442 = vrot.lane.b32.xlu0 %v437, 101
        %v443 = vpop.permute.xlu0 %442
        %444 = vrot.lane.b32.xlu0 %v427, 101
        %v445 = vpop.permute.xlu0 %444
        %446 = vrot.lane.b32.xlu0 %v438, 101
        %v447 = vpop.permute.xlu0 %446
        %448 = vrot.lane.b32.xlu0 %v428, 101
        %v449 = vpop.permute.xlu0 %448
        %450 = vrot.lane.b32.xlu0 %v439, 101
        %v451 = vpop.permute.xlu0 %450
        %452 = vrot.lane.b32.xlu0 %v429, 101
        %v453 = vpop.permute.xlu0 %452
        %454 = vrot.lane.b32.xlu0 %v440, 101
        %v455 = vpop.permute.xlu0 %454
        %456 = vrot.lane.b32.xlu0 %v430, 101
        %v457 = vpop.permute.xlu0 %456
        %458 = vrot.lane.b32.xlu0 %v441, 101
        %v459 = vpop.permute.xlu0 %458
        %vm460 = vcmask 826368
        %v461 = vsel %vm460, %v443, %v445
        %v462 = vsel %vm460, %v445, %v447
        %v463 = vsel %vm460, %v447, %v449
        %v464 = vsel %vm460, %v449, %v451
        %v465 = vsel %vm460, %v451, %v453
        %v466 = vsel %vm460, %v453, %v455
        %v467 = vsel %vm460, %v455, %v457
        %v468 = vsel %vm460, %v457, %v459
        %477 = vst [vmem:[#allocation3 + $0x40] sm:$0xf0] %v461
        %478 = vst [vmem:[#allocation3 + $0x48] sm:$0xf0] %v462
        %479 = vst [vmem:[#allocation3 + $0x50] sm:$0xf0] %v463
        %480 = vst [vmem:[#allocation3 + $0x58] sm:$0xf0] %v464
        %481 = vst [vmem:[#allocation3 + $0x60] sm:$0xf0] %v465
        %482 = vst [vmem:[#allocation3 + $0x68] sm:$0xf0] %v466
        %483 = vst [vmem:[#allocation3 + $0x70] sm:$0xf0] %v467
        %484 = vst.msk [vmem:[#allocation3 + $0x78] sm:$0xf0] %vm373, %v468
        %v485 = vld [vmem:[%s239] sm:$0xff]
        %v486 = vld [vmem:[%s239 + $0x8] sm:$0xff]
        %v487 = vld [vmem:[%s239 + $0x10] sm:$0xff]
        %v488 = vld [vmem:[%s239 + $0x18] sm:$0xff]
        %v489 = vld [vmem:[%s239 + $0x20] sm:$0xf]
        %v495 = vcombine.high %v485, %v485
        %v496 = vcombine.high %v486, %v486
        %v497 = vcombine.high %v487, %v487
        %v498 = vcombine.high %v488, %v488
        %499 = vrot.lane.b32.xlu0 %v485, 100
        %v500 = vpop.permute.xlu0 %499
        %501 = vrot.lane.b32.xlu0 %v495, 100
        %v502 = vpop.permute.xlu0 %501
        %503 = vrot.lane.b32.xlu0 %v486, 100
        %v504 = vpop.permute.xlu0 %503
        %505 = vrot.lane.b32.xlu0 %v496, 100
        %v506 = vpop.permute.xlu0 %505
        %507 = vrot.lane.b32.xlu0 %v487, 100
        %v508 = vpop.permute.xlu0 %507
        %509 = vrot.lane.b32.xlu0 %v497, 100
        %v510 = vpop.permute.xlu0 %509
        %511 = vrot.lane.b32.xlu0 %v488, 100
        %v512 = vpop.permute.xlu0 %511
        %513 = vrot.lane.b32.xlu0 %v498, 100
        %v514 = vpop.permute.xlu0 %513
        %515 = vrot.lane.b32.xlu0 %v489, 100
        %v516 = vpop.permute.xlu0 %515
        %vm517 = vcmask 818176
        %v518 = vsel %vm517, %v500, %v502
        %v519 = vsel %vm517, %v502, %v504
        %v520 = vsel %vm517, %v504, %v506
        %v521 = vsel %vm517, %v506, %v508
        %v522 = vsel %vm517, %v508, %v510
        %v523 = vsel %vm517, %v510, %v512
        %v524 = vsel %vm517, %v512, %v514
        %v525 = vsel %vm517, %v514, %v516
        %534 = vst [vmem:[#allocation3 + $0x80] sm:$0xf] %v518
        %535 = vst [vmem:[#allocation3 + $0x88] sm:$0xf] %v519
        %536 = vst [vmem:[#allocation3 + $0x90] sm:$0xf] %v520
        %537 = vst [vmem:[#allocation3 + $0x98] sm:$0xf] %v521
        %538 = vst [vmem:[#allocation3 + $0xa0] sm:$0xf] %v522
        %539 = vst [vmem:[#allocation3 + $0xa8] sm:$0xf] %v523
        %540 = vst [vmem:[#allocation3 + $0xb0] sm:$0xf] %v524
        %541 = vst.msk [vmem:[#allocation3 + $0xb8] sm:$0xf] %vm320, %v525
        %v542 = vld [vmem:[%s239] sm:$0xff]
        %v543 = vld [vmem:[%s239 + $0x8] sm:$0xff]
        %v544 = vld [vmem:[%s239 + $0x10] sm:$0xff]
        %v545 = vld [vmem:[%s239 + $0x18] sm:$0xff]
        %v546 = vld [vmem:[%s239 + $0x20] sm:$0xf]
        %v552 = vcombine.low %v542, %v542
        %v553 = vcombine.low %v543, %v543
        %v554 = vcombine.low %v544, %v544
        %v555 = vcombine.low %v545, %v545
        %v556 = vcombine.low %v546, %v546
        %557 = vrot.lane.b32.xlu0 %v552, 99
        %v558 = vpop.permute.xlu0 %557
        %559 = vrot.lane.b32.xlu0 %v542, 99
        %v560 = vpop.permute.xlu0 %559
        %561 = vrot.lane.b32.xlu0 %v553, 99
        %v562 = vpop.permute.xlu0 %561
        %563 = vrot.lane.b32.xlu0 %v543, 99
        %v564 = vpop.permute.xlu0 %563
        %565 = vrot.lane.b32.xlu0 %v554, 99
        %v566 = vpop.permute.xlu0 %565
        %567 = vrot.lane.b32.xlu0 %v544, 99
        %v568 = vpop.permute.xlu0 %567
        %569 = vrot.lane.b32.xlu0 %v555, 99
        %v570 = vpop.permute.xlu0 %569
        %571 = vrot.lane.b32.xlu0 %v545, 99
        %v572 = vpop.permute.xlu0 %571
        %573 = vrot.lane.b32.xlu0 %v556, 99
        %v574 = vpop.permute.xlu0 %573
        %vm575 = vcmask 809984
        %v576 = vsel %vm575, %v558, %v560
        %v577 = vsel %vm575, %v560, %v562
        %v578 = vsel %vm575, %v562, %v564
        %v579 = vsel %vm575, %v564, %v566
        %v580 = vsel %vm575, %v566, %v568
        %v581 = vsel %vm575, %v568, %v570
        %v582 = vsel %vm575, %v570, %v572
        %v583 = vsel %vm575, %v572, %v574
        %592 = vst [vmem:[#allocation3 + $0x80] sm:$0xf0] %v576
        %593 = vst [vmem:[#allocation3 + $0x88] sm:$0xf0] %v577
        %594 = vst [vmem:[#allocation3 + $0x90] sm:$0xf0] %v578
        %595 = vst [vmem:[#allocation3 + $0x98] sm:$0xf0] %v579
        %596 = vst [vmem:[#allocation3 + $0xa0] sm:$0xf0] %v580
        %597 = vst [vmem:[#allocation3 + $0xa8] sm:$0xf0] %v581
        %598 = vst [vmem:[#allocation3 + $0xb0] sm:$0xf0] %v582
        %599 = vst.msk [vmem:[#allocation3 + $0xb8] sm:$0xf0] %vm373, %v583
        %v600 = vld [vmem:[%s239] sm:$0xff]
        %v601 = vld [vmem:[%s239 + $0x8] sm:$0xff]
        %v602 = vld [vmem:[%s239 + $0x10] sm:$0xff]
        %v603 = vld [vmem:[%s239 + $0x18] sm:$0xff]
        %v604 = vld [vmem:[%s239 + $0x20] sm:$0xf]
        %v610 = vcombine.high %v600, %v600
        %v611 = vcombine.high %v601, %v601
        %v612 = vcombine.high %v602, %v602
        %v613 = vcombine.high %v603, %v603
        %614 = vrot.lane.b32.xlu0 %v600, 91
        %v615 = vpop.permute.xlu0 %614
        %616 = vrot.lane.b32.xlu0 %v610, 91
        %v617 = vpop.permute.xlu0 %616
        %618 = vrot.lane.b32.xlu0 %v601, 91
        %v619 = vpop.permute.xlu0 %618
        %620 = vrot.lane.b32.xlu0 %v611, 91
        %v621 = vpop.permute.xlu0 %620
        %622 = vrot.lane.b32.xlu0 %v602, 91
        %v623 = vpop.permute.xlu0 %622
        %624 = vrot.lane.b32.xlu0 %v612, 91
        %v625 = vpop.permute.xlu0 %624
        %626 = vrot.lane.b32.xlu0 %v603, 91
        %v627 = vpop.permute.xlu0 %626
        %628 = vrot.lane.b32.xlu0 %v613, 91
        %v629 = vpop.permute.xlu0 %628
        %630 = vrot.lane.b32.xlu0 %v604, 91
        %v631 = vpop.permute.xlu0 %630
        %vm632 = vcmask 744448
        %v633 = vsel %vm632, %v615, %v617
        %v634 = vsel %vm632, %v617, %v619
        %v635 = vsel %vm632, %v619, %v621
        %v636 = vsel %vm632, %v621, %v623
        %v637 = vsel %vm632, %v623, %v625
        %v638 = vsel %vm632, %v625, %v627
        %v639 = vsel %vm632, %v627, %v629
        %v640 = vsel %vm632, %v629, %v631
        %649 = vst [vmem:[#allocation3 + $0xc0] sm:$0xf] %v633
        %650 = vst [vmem:[#allocation3 + $0xc8] sm:$0xf] %v634
        %651 = vst [vmem:[#allocation3 + $0xd0] sm:$0xf] %v635
        %652 = vst [vmem:[#allocation3 + $0xd8] sm:$0xf] %v636
        %653 = vst [vmem:[#allocation3 + $0xe0] sm:$0xf] %v637
        %654 = vst [vmem:[#allocation3 + $0xe8] sm:$0xf] %v638
        %655 = vst [vmem:[#allocation3 + $0xf0] sm:$0xf] %v639
        %656 = vst.msk [vmem:[#allocation3 + $0xf8] sm:$0xf] %vm320, %v640
        %v657 = vld [vmem:[%s239] sm:$0xff]
        %v658 = vld [vmem:[%s239 + $0x8] sm:$0xff]
        %v659 = vld [vmem:[%s239 + $0x10] sm:$0xff]
        %v660 = vld [vmem:[%s239 + $0x18] sm:$0xff]
        %v661 = vld [vmem:[%s239 + $0x20] sm:$0xf]
        %v667 = vcombine.low %v657, %v657
        %v668 = vcombine.low %v658, %v658
        %v669 = vcombine.low %v659, %v659
        %v670 = vcombine.low %v660, %v660
        %v671 = vcombine.low %v661, %v661
        %672 = vrot.lane.b32.xlu0 %v667, 90
        %v673 = vpop.permute.xlu0 %672
        %674 = vrot.lane.b32.xlu0 %v657, 90
        %v675 = vpop.permute.xlu0 %674
        %676 = vrot.lane.b32.xlu0 %v668, 90
        %v677 = vpop.permute.xlu0 %676
        %678 = vrot.lane.b32.xlu0 %v658, 90
        %v679 = vpop.permute.xlu0 %678
        %680 = vrot.lane.b32.xlu0 %v669, 90
        %v681 = vpop.permute.xlu0 %680
        %682 = vrot.lane.b32.xlu0 %v659, 90
        %v683 = vpop.permute.xlu0 %682
        %684 = vrot.lane.b32.xlu0 %v670, 90
        %v685 = vpop.permute.xlu0 %684
        %686 = vrot.lane.b32.xlu0 %v660, 90
        %v687 = vpop.permute.xlu0 %686
        %688 = vrot.lane.b32.xlu0 %v671, 90
        %v689 = vpop.permute.xlu0 %688
        %vm690 = vcmask 736256
        %v691 = vsel %vm690, %v673, %v675
        %v692 = vsel %vm690, %v675, %v677
        %v693 = vsel %vm690, %v677, %v679
        %v694 = vsel %vm690, %v679, %v681
        %v695 = vsel %vm690, %v681, %v683
        %v696 = vsel %vm690, %v683, %v685
        %v697 = vsel %vm690, %v685, %v687
        %v698 = vsel %vm690, %v687, %v689
        %707 = vst [vmem:[#allocation3 + $0xc0] sm:$0xf0] %v691
        %708 = vst [vmem:[#allocation3 + $0xc8] sm:$0xf0] %v692
        %709 = vst [vmem:[#allocation3 + $0xd0] sm:$0xf0] %v693
        %710 = vst [vmem:[#allocation3 + $0xd8] sm:$0xf0] %v694
        %711 = vst [vmem:[#allocation3 + $0xe0] sm:$0xf0] %v695
        %712 = vst [vmem:[#allocation3 + $0xe8] sm:$0xf0] %v696
        %713 = vst [vmem:[#allocation3 + $0xf0] sm:$0xf0] %v697
        %714 = vst.msk [vmem:[#allocation3 + $0xf8] sm:$0xf0] %vm373, %v698
        %v715 = vld [vmem:[%s239] sm:$0xff]
        %v716 = vld [vmem:[%s239 + $0x8] sm:$0xff]
        %v717 = vld [vmem:[%s239 + $0x10] sm:$0xff]
        %v718 = vld [vmem:[%s239 + $0x18] sm:$0xff]
        %v719 = vld [vmem:[%s239 + $0x20] sm:$0xf]
        %v725 = vcombine.high %v715, %v715
        %v726 = vcombine.high %v716, %v716
        %v727 = vcombine.high %v717, %v717
        %v728 = vcombine.high %v718, %v718
        %729 = vrot.lane.b32.xlu0 %v715, 89
        %v730 = vpop.permute.xlu0 %729
        %731 = vrot.lane.b32.xlu0 %v725, 89
        %v732 = vpop.permute.xlu0 %731
        %733 = vrot.lane.b32.xlu0 %v716, 89
        %v734 = vpop.permute.xlu0 %733
        %735 = vrot.lane.b32.xlu0 %v726, 89
        %v736 = vpop.permute.xlu0 %735
        %737 = vrot.lane.b32.xlu0 %v717, 89
        %v738 = vpop.permute.xlu0 %737
        %739 = vrot.lane.b32.xlu0 %v727, 89
        %v740 = vpop.permute.xlu0 %739
        %741 = vrot.lane.b32.xlu0 %v718, 89
        %v742 = vpop.permute.xlu0 %741
        %743 = vrot.lane.b32.xlu0 %v728, 89
        %v744 = vpop.permute.xlu0 %743
        %745 = vrot.lane.b32.xlu0 %v719, 89
        %v746 = vpop.permute.xlu0 %745
        %vm747 = vcmask 728064
        %v748 = vsel %vm747, %v730, %v732
        %v749 = vsel %vm747, %v732, %v734
        %v750 = vsel %vm747, %v734, %v736
        %v751 = vsel %vm747, %v736, %v738
        %v752 = vsel %vm747, %v738, %v740
        %v753 = vsel %vm747, %v740, %v742
        %v754 = vsel %vm747, %v742, %v744
        %v755 = vsel %vm747, %v744, %v746
        %764 = vst [vmem:[#allocation3 + $0x100] sm:$0xf] %v748
        %765 = vst [vmem:[#allocation3 + $0x108] sm:$0xf] %v749
        %766 = vst [vmem:[#allocation3 + $0x110] sm:$0xf] %v750
        %767 = vst [vmem:[#allocation3 + $0x118] sm:$0xf] %v751
        %768 = vst [vmem:[#allocation3 + $0x120] sm:$0xf] %v752
        %769 = vst [vmem:[#allocation3 + $0x128] sm:$0xf] %v753
        %770 = vst [vmem:[#allocation3 + $0x130] sm:$0xf] %v754
        %771 = vst.msk [vmem:[#allocation3 + $0x138] sm:$0xf] %vm320, %v755
        %v772 = vld [vmem:[%s239] sm:$0xff]
        %v773 = vld [vmem:[%s239 + $0x8] sm:$0xff]
        %v774 = vld [vmem:[%s239 + $0x10] sm:$0xff]
        %v775 = vld [vmem:[%s239 + $0x18] sm:$0xff]
        %v776 = vld [vmem:[%s239 + $0x20] sm:$0xf]
        %v782 = vcombine.low %v772, %v772
        %v783 = vcombine.low %v773, %v773
        %v784 = vcombine.low %v774, %v774
        %v785 = vcombine.low %v775, %v775
        %v786 = vcombine.low %v776, %v776
        %787 = vrot.lane.b32.xlu0 %v782, 11
        %v788 = vpop.permute.xlu0 %787
        %789 = vrot.lane.b32.xlu0 %v772, 11
        %v790 = vpop.permute.xlu0 %789
        %791 = vrot.lane.b32.xlu0 %v783, 11
        %v792 = vpop.permute.xlu0 %791
        %793 = vrot.lane.b32.xlu0 %v773, 11
        %v794 = vpop.permute.xlu0 %793
        %795 = vrot.lane.b32.xlu0 %v784, 11
        %v796 = vpop.permute.xlu0 %795
        %797 = vrot.lane.b32.xlu0 %v774, 11
        %v798 = vpop.permute.xlu0 %797
        %799 = vrot.lane.b32.xlu0 %v785, 11
        %v800 = vpop.permute.xlu0 %799
        %801 = vrot.lane.b32.xlu0 %v775, 11
        %v802 = vpop.permute.xlu0 %801
        %803 = vrot.lane.b32.xlu0 %v786, 11
        %v804 = vpop.permute.xlu0 %803
        %vm805 = vcmask 89088
        %v806 = vsel %vm805, %v788, %v790
        %v807 = vsel %vm805, %v790, %v792
        %v808 = vsel %vm805, %v792, %v794
        %v809 = vsel %vm805, %v794, %v796
        %v810 = vsel %vm805, %v796, %v798
        %v811 = vsel %vm805, %v798, %v800
        %v812 = vsel %vm805, %v800, %v802
        %v813 = vsel %vm805, %v802, %v804
        %822 = vst [vmem:[#allocation3 + $0x100] sm:$0xf0] %v806
        %823 = vst [vmem:[#allocation3 + $0x108] sm:$0xf0] %v807
        %824 = vst [vmem:[#allocation3 + $0x110] sm:$0xf0] %v808
        %825 = vst [vmem:[#allocation3 + $0x118] sm:$0xf0] %v809
        %826 = vst [vmem:[#allocation3 + $0x120] sm:$0xf0] %v810
        %827 = vst [vmem:[#allocation3 + $0x128] sm:$0xf0] %v811
        %828 = vst [vmem:[#allocation3 + $0x130] sm:$0xf0] %v812
        %829 = vst.msk [vmem:[#allocation3 + $0x138] sm:$0xf0] %vm373, %v813
        %v830 = vld [vmem:[%s239] sm:$0xff]
        %v831 = vld [vmem:[%s239 + $0x8] sm:$0xff]
        %v832 = vld [vmem:[%s239 + $0x10] sm:$0xff]
        %v833 = vld [vmem:[%s239 + $0x18] sm:$0xff]
        %v834 = vld [vmem:[%s239 + $0x20] sm:$0xf]
        %v840 = vcombine.high %v830, %v830
        %v841 = vcombine.high %v831, %v831
        %v842 = vcombine.high %v832, %v832
        %v843 = vcombine.high %v833, %v833
        %844 = vrot.lane.b32.xlu0 %v830, 10
        %v845 = vpop.permute.xlu0 %844
        %846 = vrot.lane.b32.xlu0 %v840, 10
        %v847 = vpop.permute.xlu0 %846
        %848 = vrot.lane.b32.xlu0 %v831, 10
        %v849 = vpop.permute.xlu0 %848
        %850 = vrot.lane.b32.xlu0 %v841, 10
        %v851 = vpop.permute.xlu0 %850
        %852 = vrot.lane.b32.xlu0 %v832, 10
        %v853 = vpop.permute.xlu0 %852
        %854 = vrot.lane.b32.xlu0 %v842, 10
        %v855 = vpop.permute.xlu0 %854
        %856 = vrot.lane.b32.xlu0 %v833, 10
        %v857 = vpop.permute.xlu0 %856
        %858 = vrot.lane.b32.xlu0 %v843, 10
        %v859 = vpop.permute.xlu0 %858
        %860 = vrot.lane.b32.xlu0 %v834, 10
        %v861 = vpop.permute.xlu0 %860
        %vm862 = vcmask 80896
        %v863 = vsel %vm862, %v845, %v847
        %v864 = vsel %vm862, %v847, %v849
        %v865 = vsel %vm862, %v849, %v851
        %v866 = vsel %vm862, %v851, %v853
        %v867 = vsel %vm862, %v853, %v855
        %v868 = vsel %vm862, %v855, %v857
        %v869 = vsel %vm862, %v857, %v859
        %v870 = vsel %vm862, %v859, %v861
        %879 = vst [vmem:[#allocation3 + $0x140] sm:$0xf] %v863
        %880 = vst [vmem:[#allocation3 + $0x148] sm:$0xf] %v864
        %881 = vst [vmem:[#allocation3 + $0x150] sm:$0xf] %v865
        %882 = vst [vmem:[#allocation3 + $0x158] sm:$0xf] %v866
        %883 = vst [vmem:[#allocation3 + $0x160] sm:$0xf] %v867
        %884 = vst [vmem:[#allocation3 + $0x168] sm:$0xf] %v868
        %885 = vst [vmem:[#allocation3 + $0x170] sm:$0xf] %v869
        %886 = vst.msk [vmem:[#allocation3 + $0x178] sm:$0xf] %vm320, %v870
        %v887 = vld [vmem:[%s239] sm:$0xff]
        %v888 = vld [vmem:[%s239 + $0x8] sm:$0xff]
        %v889 = vld [vmem:[%s239 + $0x10] sm:$0xff]
        %v890 = vld [vmem:[%s239 + $0x18] sm:$0xff]
        %v891 = vld [vmem:[%s239 + $0x20] sm:$0xf]
        %v897 = vcombine.low %v887, %v887
        %v898 = vcombine.low %v888, %v888
        %v899 = vcombine.low %v889, %v889
        %v900 = vcombine.low %v890, %v890
        %v901 = vcombine.low %v891, %v891
        %902 = vrot.lane.b32.xlu0 %v897, 9
        %v903 = vpop.permute.xlu0 %902
        %904 = vrot.lane.b32.xlu0 %v887, 9
        %v905 = vpop.permute.xlu0 %904
        %906 = vrot.lane.b32.xlu0 %v898, 9
        %v907 = vpop.permute.xlu0 %906
        %908 = vrot.lane.b32.xlu0 %v888, 9
        %v909 = vpop.permute.xlu0 %908
        %910 = vrot.lane.b32.xlu0 %v899, 9
        %v911 = vpop.permute.xlu0 %910
        %912 = vrot.lane.b32.xlu0 %v889, 9
        %v913 = vpop.permute.xlu0 %912
        %914 = vrot.lane.b32.xlu0 %v900, 9
        %v915 = vpop.permute.xlu0 %914
        %916 = vrot.lane.b32.xlu0 %v890, 9
        %v917 = vpop.permute.xlu0 %916
        %918 = vrot.lane.b32.xlu0 %v901, 9
        %v919 = vpop.permute.xlu0 %918
        %vm920 = vcmask 72704
        %v921 = vsel %vm920, %v903, %v905
        %v922 = vsel %vm920, %v905, %v907
        %v923 = vsel %vm920, %v907, %v909
        %v924 = vsel %vm920, %v909, %v911
        %v925 = vsel %vm920, %v911, %v913
        %v926 = vsel %vm920, %v913, %v915
        %v927 = vsel %vm920, %v915, %v917
        %v928 = vsel %vm920, %v917, %v919
        %937 = vst [vmem:[#allocation3 + $0x140] sm:$0xf0] %v921
        %938 = vst [vmem:[#allocation3 + $0x148] sm:$0xf0] %v922
        %939 = vst [vmem:[#allocation3 + $0x150] sm:$0xf0] %v923
        %940 = vst [vmem:[#allocation3 + $0x158] sm:$0xf0] %v924
        %941 = vst [vmem:[#allocation3 + $0x160] sm:$0xf0] %v925
        %942 = vst [vmem:[#allocation3 + $0x168] sm:$0xf0] %v926
        %943 = vst [vmem:[#allocation3 + $0x170] sm:$0xf0] %v927
        %944 = vst.msk [vmem:[#allocation3 + $0x178] sm:$0xf0] %vm373, %v928
        %v945 = vld [vmem:[%s239] sm:$0xff]
        %v946 = vld [vmem:[%s239 + $0x8] sm:$0xff]
        %v947 = vld [vmem:[%s239 + $0x10] sm:$0xff]
        %v948 = vld [vmem:[%s239 + $0x18] sm:$0xff]
        %v949 = vld [vmem:[%s239 + $0x20] sm:$0xf]
        %v955 = vcombine.high %v945, %v945
        %v956 = vcombine.high %v946, %v946
        %v957 = vcombine.high %v947, %v947
        %v958 = vcombine.high %v948, %v948
        %959 = vrot.lane.b32.xlu0 %v945, 1
        %v960 = vpop.permute.xlu0 %959
        %961 = vrot.lane.b32.xlu0 %v955, 1
        %v962 = vpop.permute.xlu0 %961
        %963 = vrot.lane.b32.xlu0 %v946, 1
        %v964 = vpop.permute.xlu0 %963
        %965 = vrot.lane.b32.xlu0 %v956, 1
        %v966 = vpop.permute.xlu0 %965
        %967 = vrot.lane.b32.xlu0 %v947, 1
        %v968 = vpop.permute.xlu0 %967
        %969 = vrot.lane.b32.xlu0 %v957, 1
        %v970 = vpop.permute.xlu0 %969
        %971 = vrot.lane.b32.xlu0 %v948, 1
        %v972 = vpop.permute.xlu0 %971
        %973 = vrot.lane.b32.xlu0 %v958, 1
        %v974 = vpop.permute.xlu0 %973
        %975 = vrot.lane.b32.xlu0 %v949, 1
        %v976 = vpop.permute.xlu0 %975
        %vm977 = vcmask 7168
        %v978 = vsel %vm977, %v960, %v962
        %v979 = vsel %vm977, %v962, %v964
        %v980 = vsel %vm977, %v964, %v966
        %v981 = vsel %vm977, %v966, %v968
        %v982 = vsel %vm977, %v968, %v970
        %v983 = vsel %vm977, %v970, %v972
        %v984 = vsel %vm977, %v972, %v974
        %v985 = vsel %vm977, %v974, %v976
        %994 = vst [vmem:[#allocation3 + $0x180] sm:$0xf] %v978
        %995 = vst [vmem:[#allocation3 + $0x188] sm:$0xf] %v979
        %996 = vst [vmem:[#allocation3 + $0x190] sm:$0xf] %v980
        %997 = vst [vmem:[#allocation3 + $0x198] sm:$0xf] %v981
        %998 = vst [vmem:[#allocation3 + $0x1a0] sm:$0xf] %v982
        %999 = vst [vmem:[#allocation3 + $0x1a8] sm:$0xf] %v983
        %1000 = vst [vmem:[#allocation3 + $0x1b0] sm:$0xf] %v984
        %1001 = vst.msk [vmem:[#allocation3 + $0x1b8] sm:$0xf] %vm320, %v985
        %v1002 = vld [vmem:[%s239 + $0x4] sm:$0xff]
        %v1003 = vld [vmem:[%s239 + $0xc] sm:$0xff]
        %v1004 = vld [vmem:[%s239 + $0x14] sm:$0xff]
        %v1005 = vld [vmem:[%s239 + $0x1c] sm:$0xff]
        %v1010 = vcombine.low %v1002, %v1002
        %v1011 = vcombine.low %v1003, %v1003
        %v1012 = vcombine.low %v1004, %v1004
        %v1013 = vcombine.low %v1005, %v1005
        %1018 = vst [vmem:[#allocation3 + $0x180] sm:$0xf0] %v1010
        %1019 = vst [vmem:[#allocation3 + $0x188] sm:$0xf0] %v1002
        %1020 = vst [vmem:[#allocation3 + $0x190] sm:$0xf0] %v1011
        %1021 = vst [vmem:[#allocation3 + $0x198] sm:$0xf0] %v1003
        %1022 = vst [vmem:[#allocation3 + $0x1a0] sm:$0xf0] %v1012
        %1023 = vst [vmem:[#allocation3 + $0x1a8] sm:$0xf0] %v1004
        %1024 = vst [vmem:[#allocation3 + $0x1b0] sm:$0xf0] %v1013
        %1025 = vst.msk [vmem:[#allocation3 + $0x1b8] sm:$0xf0] %vm373, %v1005
        %v1026 = vld [vmem:[%s239 + $0x4] sm:$0xff]
        %v1027 = vld [vmem:[%s239 + $0xc] sm:$0xff]
        %v1028 = vld [vmem:[%s239 + $0x14] sm:$0xff]
        %v1029 = vld [vmem:[%s239 + $0x1c] sm:$0xff]
        %v1034 = vcombine.high %v1026, %v1026
        %v1035 = vcombine.high %v1027, %v1027
        %v1036 = vcombine.high %v1028, %v1028
        %v1037 = vcombine.high %v1029, %v1029
        %1038 = vrot.lane.b32.xlu0 %v1026, 127
        %v1039 = vpop.permute.xlu0 %1038
        %1040 = vrot.lane.b32.xlu0 %v1034, 127
        %v1041 = vpop.permute.xlu0 %1040
        %1042 = vrot.lane.b32.xlu0 %v1027, 127
        %v1043 = vpop.permute.xlu0 %1042
        %1044 = vrot.lane.b32.xlu0 %v1035, 127
        %v1045 = vpop.permute.xlu0 %1044
        %1046 = vrot.lane.b32.xlu0 %v1028, 127
        %v1047 = vpop.permute.xlu0 %1046
        %1048 = vrot.lane.b32.xlu0 %v1036, 127
        %v1049 = vpop.permute.xlu0 %1048
        %1050 = vrot.lane.b32.xlu0 %v1029, 127
        %v1051 = vpop.permute.xlu0 %1050
        %1052 = vrot.lane.b32.xlu0 %v1037, 127
        %v1053 = vpop.permute.xlu0 %1052
        %vm1054 = vcmask 1039360
        %v1055 = vsel %vm1054, %v1039, %v1041
        %v1056 = vsel %vm1054, %v1041, %v1043
        %v1057 = vsel %vm1054, %v1043, %v1045
        %v1058 = vsel %vm1054, %v1045, %v1047
        %v1059 = vsel %vm1054, %v1047, %v1049
        %v1060 = vsel %vm1054, %v1049, %v1051
        %v1061 = vsel %vm1054, %v1051, %v1053
        %1070 = vst [vmem:[#allocation3 + $0x1c0] sm:$0xf] %v1055
        %1071 = vst [vmem:[#allocation3 + $0x1c8] sm:$0xf] %v1056
        %1072 = vst [vmem:[#allocation3 + $0x1d0] sm:$0xf] %v1057
        %1073 = vst [vmem:[#allocation3 + $0x1d8] sm:$0xf] %v1058
        %1074 = vst [vmem:[#allocation3 + $0x1e0] sm:$0xf] %v1059
        %1075 = vst [vmem:[#allocation3 + $0x1e8] sm:$0xf] %v1060
        %1076 = vst [vmem:[#allocation3 + $0x1f0] sm:$0xf] %v1061
        %1077 = vst.msk [vmem:[#allocation3 + $0x1f8] sm:$0xf] %vm320, %v1053
        %v1078 = vld [vmem:[%s239 + $0x4] sm:$0xff]
        %v1079 = vld [vmem:[%s239 + $0xc] sm:$0xff]
        %v1080 = vld [vmem:[%s239 + $0x14] sm:$0xff]
        %v1081 = vld [vmem:[%s239 + $0x1c] sm:$0xff]
        %v1086 = vcombine.low %v1078, %v1078
        %v1087 = vcombine.low %v1079, %v1079
        %v1088 = vcombine.low %v1080, %v1080
        %v1089 = vcombine.low %v1081, %v1081
        %1090 = vrot.lane.b32.xlu0 %v1086, 119
        %v1091 = vpop.permute.xlu0 %1090
        %1092 = vrot.lane.b32.xlu0 %v1078, 119
        %v1093 = vpop.permute.xlu0 %1092
        %1094 = vrot.lane.b32.xlu0 %v1087, 119
        %v1095 = vpop.permute.xlu0 %1094
        %1096 = vrot.lane.b32.xlu0 %v1079, 119
        %v1097 = vpop.permute.xlu0 %1096
        %1098 = vrot.lane.b32.xlu0 %v1088, 119
        %v1099 = vpop.permute.xlu0 %1098
        %1100 = vrot.lane.b32.xlu0 %v1080, 119
        %v1101 = vpop.permute.xlu0 %1100
        %1102 = vrot.lane.b32.xlu0 %v1089, 119
        %v1103 = vpop.permute.xlu0 %1102
        %1104 = vrot.lane.b32.xlu0 %v1081, 119
        %v1105 = vpop.permute.xlu0 %1104
        %vm1106 = vcmask 973824
        %v1107 = vsel %vm1106, %v1091, %v1093
        %v1108 = vsel %vm1106, %v1093, %v1095
        %v1109 = vsel %vm1106, %v1095, %v1097
        %v1110 = vsel %vm1106, %v1097, %v1099
        %v1111 = vsel %vm1106, %v1099, %v1101
        %v1112 = vsel %vm1106, %v1101, %v1103
        %v1113 = vsel %vm1106, %v1103, %v1105
        %1122 = vst [vmem:[#allocation3 + $0x1c0] sm:$0xf0] %v1107
        %1123 = vst [vmem:[#allocation3 + $0x1c8] sm:$0xf0] %v1108
        %1124 = vst [vmem:[#allocation3 + $0x1d0] sm:$0xf0] %v1109
        %1125 = vst [vmem:[#allocation3 + $0x1d8] sm:$0xf0] %v1110
        %1126 = vst [vmem:[#allocation3 + $0x1e0] sm:$0xf0] %v1111
        %1127 = vst [vmem:[#allocation3 + $0x1e8] sm:$0xf0] %v1112
        %1128 = vst [vmem:[#allocation3 + $0x1f0] sm:$0xf0] %v1113
        %1129 = vst.msk [vmem:[#allocation3 + $0x1f8] sm:$0xf0] %vm373, %v1105
        %v1130 = vld [vmem:[%s239 + $0x4] sm:$0xff]
        %v1131 = vld [vmem:[%s239 + $0xc] sm:$0xff]
        %v1132 = vld [vmem:[%s239 + $0x14] sm:$0xff]
        %v1133 = vld [vmem:[%s239 + $0x1c] sm:$0xff]
        %v1138 = vcombine.high %v1130, %v1130
        %v1139 = vcombine.high %v1131, %v1131
        %v1140 = vcombine.high %v1132, %v1132
        %v1141 = vcombine.high %v1133, %v1133
        %1142 = vrot.lane.b32.xlu0 %v1130, 118
        %v1143 = vpop.permute.xlu0 %1142
        %1144 = vrot.lane.b32.xlu0 %v1138, 118
        %v1145 = vpop.permute.xlu0 %1144
        %1146 = vrot.lane.b32.xlu0 %v1131, 118
        %v1147 = vpop.permute.xlu0 %1146
        %1148 = vrot.lane.b32.xlu0 %v1139, 118
        %v1149 = vpop.permute.xlu0 %1148
        %1150 = vrot.lane.b32.xlu0 %v1132, 118
        %v1151 = vpop.permute.xlu0 %1150
        %1152 = vrot.lane.b32.xlu0 %v1140, 118
        %v1153 = vpop.permute.xlu0 %1152
        %1154 = vrot.lane.b32.xlu0 %v1133, 118
        %v1155 = vpop.permute.xlu0 %1154
        %1156 = vrot.lane.b32.xlu0 %v1141, 118
        %v1157 = vpop.permute.xlu0 %1156
        %vm1158 = vcmask 965632
        %v1159 = vsel %vm1158, %v1143, %v1145
        %v1160 = vsel %vm1158, %v1145, %v1147
        %v1161 = vsel %vm1158, %v1147, %v1149
        %v1162 = vsel %vm1158, %v1149, %v1151
        %v1163 = vsel %vm1158, %v1151, %v1153
        %v1164 = vsel %vm1158, %v1153, %v1155
        %v1165 = vsel %vm1158, %v1155, %v1157
        %1174 = vst [vmem:[#allocation3 + $0x200] sm:$0xf] %v1159
        %1175 = vst [vmem:[#allocation3 + $0x208] sm:$0xf] %v1160
        %1176 = vst [vmem:[#allocation3 + $0x210] sm:$0xf] %v1161
        %1177 = vst [vmem:[#allocation3 + $0x218] sm:$0xf] %v1162
        %1178 = vst [vmem:[#allocation3 + $0x220] sm:$0xf] %v1163
        %1179 = vst [vmem:[#allocation3 + $0x228] sm:$0xf] %v1164
        %1180 = vst [vmem:[#allocation3 + $0x230] sm:$0xf] %v1165
        %1181 = vst.msk [vmem:[#allocation3 + $0x238] sm:$0xf] %vm320, %v1157
        %v1182 = vld [vmem:[%s239 + $0x4] sm:$0xff]
        %v1183 = vld [vmem:[%s239 + $0xc] sm:$0xff]
        %v1184 = vld [vmem:[%s239 + $0x14] sm:$0xff]
        %v1185 = vld [vmem:[%s239 + $0x1c] sm:$0xff]
        %v1190 = vcombine.low %v1182, %v1182
        %v1191 = vcombine.low %v1183, %v1183
        %v1192 = vcombine.low %v1184, %v1184
        %v1193 = vcombine.low %v1185, %v1185
        %1194 = vrot.lane.b32.xlu0 %v1190, 117
        %v1195 = vpop.permute.xlu0 %1194
        %1196 = vrot.lane.b32.xlu0 %v1182, 117
        %v1197 = vpop.permute.xlu0 %1196
        %1198 = vrot.lane.b32.xlu0 %v1191, 117
        %v1199 = vpop.permute.xlu0 %1198
        %1200 = vrot.lane.b32.xlu0 %v1183, 117
        %v1201 = vpop.permute.xlu0 %1200
        %1202 = vrot.lane.b32.xlu0 %v1192, 117
        %v1203 = vpop.permute.xlu0 %1202
        %1204 = vrot.lane.b32.xlu0 %v1184, 117
        %v1205 = vpop.permute.xlu0 %1204
        %1206 = vrot.lane.b32.xlu0 %v1193, 117
        %v1207 = vpop.permute.xlu0 %1206
        %1208 = vrot.lane.b32.xlu0 %v1185, 117
        %v1209 = vpop.permute.xlu0 %1208
        %vm1210 = vcmask 957440
        %v1211 = vsel %vm1210, %v1195, %v1197
        %v1212 = vsel %vm1210, %v1197, %v1199
        %v1213 = vsel %vm1210, %v1199, %v1201
        %v1214 = vsel %vm1210, %v1201, %v1203
        %v1215 = vsel %vm1210, %v1203, %v1205
        %v1216 = vsel %vm1210, %v1205, %v1207
        %v1217 = vsel %vm1210, %v1207, %v1209
        %1226 = vst [vmem:[#allocation3 + $0x200] sm:$0xf0] %v1211
        %1227 = vst [vmem:[#allocation3 + $0x208] sm:$0xf0] %v1212
        %1228 = vst [vmem:[#allocation3 + $0x210] sm:$0xf0] %v1213
        %1229 = vst [vmem:[#allocation3 + $0x218] sm:$0xf0] %v1214
        %1230 = vst [vmem:[#allocation3 + $0x220] sm:$0xf0] %v1215
        %1231 = vst [vmem:[#allocation3 + $0x228] sm:$0xf0] %v1216
        %1232 = vst [vmem:[#allocation3 + $0x230] sm:$0xf0] %v1217
        %1233 = vst.msk [vmem:[#allocation3 + $0x238] sm:$0xf0] %vm373, %v1209
        %v1234 = vld [vmem:[%s239 + $0x4] sm:$0xff]
        %v1235 = vld [vmem:[%s239 + $0xc] sm:$0xff]
        %v1236 = vld [vmem:[%s239 + $0x14] sm:$0xff]
        %v1237 = vld [vmem:[%s239 + $0x1c] sm:$0xff]
        %v1238 = vld [vmem:[%s239 + $0x24] sm:$0xf]
        %v1244 = vcombine.high %v1234, %v1234
        %v1245 = vcombine.high %v1235, %v1235
        %v1246 = vcombine.high %v1236, %v1236
        %v1247 = vcombine.high %v1237, %v1237
        %1248 = vrot.lane.b32.xlu0 %v1234, 39
        %v1249 = vpop.permute.xlu0 %1248
        %1250 = vrot.lane.b32.xlu0 %v1244, 39
        %v1251 = vpop.permute.xlu0 %1250
        %1252 = vrot.lane.b32.xlu0 %v1235, 39
        %v1253 = vpop.permute.xlu0 %1252
        %1254 = vrot.lane.b32.xlu0 %v1245, 39
        %v1255 = vpop.permute.xlu0 %1254
        %1256 = vrot.lane.b32.xlu0 %v1236, 39
        %v1257 = vpop.permute.xlu0 %1256
        %1258 = vrot.lane.b32.xlu0 %v1246, 39
        %v1259 = vpop.permute.xlu0 %1258
        %1260 = vrot.lane.b32.xlu0 %v1237, 39
        %v1261 = vpop.permute.xlu0 %1260
        %1262 = vrot.lane.b32.xlu0 %v1247, 39
        %v1263 = vpop.permute.xlu0 %1262
        %1264 = vrot.lane.b32.xlu0 %v1238, 39
        %v1265 = vpop.permute.xlu0 %1264
        %vm1266 = vcmask 318464
        %v1267 = vsel %vm1266, %v1249, %v1251
        %v1268 = vsel %vm1266, %v1251, %v1253
        %v1269 = vsel %vm1266, %v1253, %v1255
        %v1270 = vsel %vm1266, %v1255, %v1257
        %v1271 = vsel %vm1266, %v1257, %v1259
        %v1272 = vsel %vm1266, %v1259, %v1261
        %v1273 = vsel %vm1266, %v1261, %v1263
        %v1274 = vsel %vm1266, %v1263, %v1265
        %1283 = vst [vmem:[#allocation3 + $0x240] sm:$0xf] %v1267
        %1284 = vst [vmem:[#allocation3 + $0x248] sm:$0xf] %v1268
        %1285 = vst [vmem:[#allocation3 + $0x250] sm:$0xf] %v1269
        %1286 = vst [vmem:[#allocation3 + $0x258] sm:$0xf] %v1270
        %1287 = vst [vmem:[#allocation3 + $0x260] sm:$0xf] %v1271
        %1288 = vst [vmem:[#allocation3 + $0x268] sm:$0xf] %v1272
        %1289 = vst [vmem:[#allocation3 + $0x270] sm:$0xf] %v1273
        %1290 = vst.msk [vmem:[#allocation3 + $0x278] sm:$0xf] %vm320, %v1274
        %v1291 = vld [vmem:[%s239 + $0x4] sm:$0xff]
        %v1292 = vld [vmem:[%s239 + $0xc] sm:$0xff]
        %v1293 = vld [vmem:[%s239 + $0x14] sm:$0xff]
        %v1294 = vld [vmem:[%s239 + $0x1c] sm:$0xff]
        %v1295 = vld [vmem:[%s239 + $0x24] sm:$0xf]
        %v1301 = vcombine.low %v1291, %v1291
        %v1302 = vcombine.low %v1292, %v1292
        %v1303 = vcombine.low %v1293, %v1293
        %v1304 = vcombine.low %v1294, %v1294
        %v1305 = vcombine.low %v1295, %v1295
        %1306 = vrot.lane.b32.xlu0 %v1301, 38
        %v1307 = vpop.permute.xlu0 %1306
        %1308 = vrot.lane.b32.xlu0 %v1291, 38
        %v1309 = vpop.permute.xlu0 %1308
        %1310 = vrot.lane.b32.xlu0 %v1302, 38
        %v1311 = vpop.permute.xlu0 %1310
        %1312 = vrot.lane.b32.xlu0 %v1292, 38
        %v1313 = vpop.permute.xlu0 %1312
        %1314 = vrot.lane.b32.xlu0 %v1303, 38
        %v1315 = vpop.permute.xlu0 %1314
        %1316 = vrot.lane.b32.xlu0 %v1293, 38
        %v1317 = vpop.permute.xlu0 %1316
        %1318 = vrot.lane.b32.xlu0 %v1304, 38
        %v1319 = vpop.permute.xlu0 %1318
        %1320 = vrot.lane.b32.xlu0 %v1294, 38
        %v1321 = vpop.permute.xlu0 %1320
        %1322 = vrot.lane.b32.xlu0 %v1305, 38
        %v1323 = vpop.permute.xlu0 %1322
        %vm1324 = vcmask 310272
        %v1325 = vsel %vm1324, %v1307, %v1309
        %v1326 = vsel %vm1324, %v1309, %v1311
        %v1327 = vsel %vm1324, %v1311, %v1313
        %v1328 = vsel %vm1324, %v1313, %v1315
        %v1329 = vsel %vm1324, %v1315, %v1317
        %v1330 = vsel %vm1324, %v1317, %v1319
        %v1331 = vsel %vm1324, %v1319, %v1321
        %v1332 = vsel %vm1324, %v1321, %v1323
        %1341 = vst [vmem:[#allocation3 + $0x240] sm:$0xf0] %v1325
        %1342 = vst [vmem:[#allocation3 + $0x248] sm:$0xf0] %v1326
        %1343 = vst [vmem:[#allocation3 + $0x250] sm:$0xf0] %v1327
        %1344 = vst [vmem:[#allocation3 + $0x258] sm:$0xf0] %v1328
        %1345 = vst [vmem:[#allocation3 + $0x260] sm:$0xf0] %v1329
        %1346 = vst [vmem:[#allocation3 + $0x268] sm:$0xf0] %v1330
        %1347 = vst [vmem:[#allocation3 + $0x270] sm:$0xf0] %v1331
        %1348 = vst.msk [vmem:[#allocation3 + $0x278] sm:$0xf0] %vm373, %v1332
        %v1349 = vld [vmem:[%s239 + $0x4] sm:$0xff]
        %v1350 = vld [vmem:[%s239 + $0xc] sm:$0xff]
        %v1351 = vld [vmem:[%s239 + $0x14] sm:$0xff]
        %v1352 = vld [vmem:[%s239 + $0x1c] sm:$0xff]
        %v1353 = vld [vmem:[%s239 + $0x24] sm:$0xf]
        %v1359 = vcombine.high %v1349, %v1349
        %v1360 = vcombine.high %v1350, %v1350
        %v1361 = vcombine.high %v1351, %v1351
        %v1362 = vcombine.high %v1352, %v1352
        %1363 = vrot.lane.b32.xlu0 %v1349, 37
        %v1364 = vpop.permute.xlu0 %1363
        %1365 = vrot.lane.b32.xlu0 %v1359, 37
        %v1366 = vpop.permute.xlu0 %1365
        %1367 = vrot.lane.b32.xlu0 %v1350, 37
        %v1368 = vpop.permute.xlu0 %1367
        %1369 = vrot.lane.b32.xlu0 %v1360, 37
        %v1370 = vpop.permute.xlu0 %1369
        %1371 = vrot.lane.b32.xlu0 %v1351, 37
        %v1372 = vpop.permute.xlu0 %1371
        %1373 = vrot.lane.b32.xlu0 %v1361, 37
        %v1374 = vpop.permute.xlu0 %1373
        %1375 = vrot.lane.b32.xlu0 %v1352, 37
        %v1376 = vpop.permute.xlu0 %1375
        %1377 = vrot.lane.b32.xlu0 %v1362, 37
        %v1378 = vpop.permute.xlu0 %1377
        %1379 = vrot.lane.b32.xlu0 %v1353, 37
        %v1380 = vpop.permute.xlu0 %1379
        %vm1381 = vcmask 302080
        %v1382 = vsel %vm1381, %v1364, %v1366
        %v1383 = vsel %vm1381, %v1366, %v1368
        %v1384 = vsel %vm1381, %v1368, %v1370
        %v1385 = vsel %vm1381, %v1370, %v1372
        %v1386 = vsel %vm1381, %v1372, %v1374
        %v1387 = vsel %vm1381, %v1374, %v1376
        %v1388 = vsel %vm1381, %v1376, %v1378
        %v1389 = vsel %vm1381, %v1378, %v1380
        %1398 = vst [vmem:[#allocation3 + $0x280] sm:$0xf] %v1382
        %1399 = vst [vmem:[#allocation3 + $0x288] sm:$0xf] %v1383
        %1400 = vst [vmem:[#allocation3 + $0x290] sm:$0xf] %v1384
        %1401 = vst [vmem:[#allocation3 + $0x298] sm:$0xf] %v1385
        %1402 = vst [vmem:[#allocation3 + $0x2a0] sm:$0xf] %v1386
        %1403 = vst [vmem:[#allocation3 + $0x2a8] sm:$0xf] %v1387
        %1404 = vst [vmem:[#allocation3 + $0x2b0] sm:$0xf] %v1388
        %1405 = vst.msk [vmem:[#allocation3 + $0x2b8] sm:$0xf] %vm320, %v1389
        %v1406 = vld [vmem:[%s239 + $0x4] sm:$0xff]
        %v1407 = vld [vmem:[%s239 + $0xc] sm:$0xff]
        %v1408 = vld [vmem:[%s239 + $0x14] sm:$0xff]
        %v1409 = vld [vmem:[%s239 + $0x1c] sm:$0xff]
        %v1410 = vld [vmem:[%s239 + $0x24] sm:$0xf]
        %v1416 = vcombine.low %v1406, %v1406
        %v1417 = vcombine.low %v1407, %v1407
        %v1418 = vcombine.low %v1408, %v1408
        %v1419 = vcombine.low %v1409, %v1409
        %v1420 = vcombine.low %v1410, %v1410
        %1421 = vrot.lane.b32.xlu0 %v1416, 29
        %v1422 = vpop.permute.xlu0 %1421
        %1423 = vrot.lane.b32.xlu0 %v1406, 29
        %v1424 = vpop.permute.xlu0 %1423
        %1425 = vrot.lane.b32.xlu0 %v1417, 29
        %v1426 = vpop.permute.xlu0 %1425
        %1427 = vrot.lane.b32.xlu0 %v1407, 29
        %v1428 = vpop.permute.xlu0 %1427
        %1429 = vrot.lane.b32.xlu0 %v1418, 29
        %v1430 = vpop.permute.xlu0 %1429
        %1431 = vrot.lane.b32.xlu0 %v1408, 29
        %v1432 = vpop.permute.xlu0 %1431
        %1433 = vrot.lane.b32.xlu0 %v1419, 29
        %v1434 = vpop.permute.xlu0 %1433
        %1435 = vrot.lane.b32.xlu0 %v1409, 29
        %v1436 = vpop.permute.xlu0 %1435
        %1437 = vrot.lane.b32.xlu0 %v1420, 29
        %v1438 = vpop.permute.xlu0 %1437
        %vm1439 = vcmask 236544
        %v1440 = vsel %vm1439, %v1422, %v1424
        %v1441 = vsel %vm1439, %v1424, %v1426
        %v1442 = vsel %vm1439, %v1426, %v1428
        %v1443 = vsel %vm1439, %v1428, %v1430
        %v1444 = vsel %vm1439, %v1430, %v1432
        %v1445 = vsel %vm1439, %v1432, %v1434
        %v1446 = vsel %vm1439, %v1434, %v1436
        %v1447 = vsel %vm1439, %v1436, %v1438
        %1456 = vst [vmem:[#allocation3 + $0x280] sm:$0xf0] %v1440
        %1457 = vst [vmem:[#allocation3 + $0x288] sm:$0xf0] %v1441
        %1458 = vst [vmem:[#allocation3 + $0x290] sm:$0xf0] %v1442
        %1459 = vst [vmem:[#allocation3 + $0x298] sm:$0xf0] %v1443
        %1460 = vst [vmem:[#allocation3 + $0x2a0] sm:$0xf0] %v1444
        %1461 = vst [vmem:[#allocation3 + $0x2a8] sm:$0xf0] %v1445
        %1462 = vst [vmem:[#allocation3 + $0x2b0] sm:$0xf0] %v1446
        %1463 = vst.msk [vmem:[#allocation3 + $0x2b8] sm:$0xf0] %vm373, %v1447
        %v1464 = vld [vmem:[%s239 + $0x4] sm:$0xff]
        %v1465 = vld [vmem:[%s239 + $0xc] sm:$0xff]
        %v1466 = vld [vmem:[%s239 + $0x14] sm:$0xff]
        %v1467 = vld [vmem:[%s239 + $0x1c] sm:$0xff]
        %v1468 = vld [vmem:[%s239 + $0x24] sm:$0xf]
        %v1474 = vcombine.high %v1464, %v1464
        %v1475 = vcombine.high %v1465, %v1465
        %v1476 = vcombine.high %v1466, %v1466
        %v1477 = vcombine.high %v1467, %v1467
        %1478 = vrot.lane.b32.xlu0 %v1464, 28
        %v1479 = vpop.permute.xlu0 %1478
        %1480 = vrot.lane.b32.xlu0 %v1474, 28
        %v1481 = vpop.permute.xlu0 %1480
        %1482 = vrot.lane.b32.xlu0 %v1465, 28
        %v1483 = vpop.permute.xlu0 %1482
        %1484 = vrot.lane.b32.xlu0 %v1475, 28
        %v1485 = vpop.permute.xlu0 %1484
        %1486 = vrot.lane.b32.xlu0 %v1466, 28
        %v1487 = vpop.permute.xlu0 %1486
        %1488 = vrot.lane.b32.xlu0 %v1476, 28
        %v1489 = vpop.permute.xlu0 %1488
        %1490 = vrot.lane.b32.xlu0 %v1467, 28
        %v1491 = vpop.permute.xlu0 %1490
        %1492 = vrot.lane.b32.xlu0 %v1477, 28
        %v1493 = vpop.permute.xlu0 %1492
        %1494 = vrot.lane.b32.xlu0 %v1468, 28
        %v1495 = vpop.permute.xlu0 %1494
        %vm1496 = vcmask 228352
        %v1497 = vsel %vm1496, %v1479, %v1481
        %v1498 = vsel %vm1496, %v1481, %v1483
        %v1499 = vsel %vm1496, %v1483, %v1485
        %v1500 = vsel %vm1496, %v1485, %v1487
        %v1501 = vsel %vm1496, %v1487, %v1489
        %v1502 = vsel %vm1496, %v1489, %v1491
        %v1503 = vsel %vm1496, %v1491, %v1493
        %v1504 = vsel %vm1496, %v1493, %v1495
        %1513 = vst [vmem:[#allocation3 + $0x2c0] sm:$0xf] %v1497
        %1514 = vst [vmem:[#allocation3 + $0x2c8] sm:$0xf] %v1498
        %1515 = vst [vmem:[#allocation3 + $0x2d0] sm:$0xf] %v1499
        %1516 = vst [vmem:[#allocation3 + $0x2d8] sm:$0xf] %v1500
        %1517 = vst [vmem:[#allocation3 + $0x2e0] sm:$0xf] %v1501
        %1518 = vst [vmem:[#allocation3 + $0x2e8] sm:$0xf] %v1502
        %1519 = vst [vmem:[#allocation3 + $0x2f0] sm:$0xf] %v1503
        %1520 = vst.msk [vmem:[#allocation3 + $0x2f8] sm:$0xf] %vm320, %v1504
        %v1521 = vld [vmem:[%s239 + $0x4] sm:$0xff]
        %v1522 = vld [vmem:[%s239 + $0xc] sm:$0xff]
        %v1523 = vld [vmem:[%s239 + $0x14] sm:$0xff]
        %v1524 = vld [vmem:[%s239 + $0x1c] sm:$0xff]
        %v1525 = vld [vmem:[%s239 + $0x24] sm:$0xf]
        %v1531 = vcombine.low %v1521, %v1521
        %v1532 = vcombine.low %v1522, %v1522
        %v1533 = vcombine.low %v1523, %v1523
        %v1534 = vcombine.low %v1524, %v1524
        %v1535 = vcombine.low %v1525, %v1525
        %1536 = vrot.lane.b32.xlu0 %v1531, 27
        %v1537 = vpop.permute.xlu0 %1536
        %1538 = vrot.lane.b32.xlu0 %v1521, 27
        %v1539 = vpop.permute.xlu0 %1538
        %1540 = vrot.lane.b32.xlu0 %v1532, 27
        %v1541 = vpop.permute.xlu0 %1540
        %1542 = vrot.lane.b32.xlu0 %v1522, 27
        %v1543 = vpop.permute.xlu0 %1542
        %1544 = vrot.lane.b32.xlu0 %v1533, 27
        %v1545 = vpop.permute.xlu0 %1544
        %1546 = vrot.lane.b32.xlu0 %v1523, 27
        %v1547 = vpop.permute.xlu0 %1546
        %1548 = vrot.lane.b32.xlu0 %v1534, 27
        %v1549 = vpop.permute.xlu0 %1548
        %1550 = vrot.lane.b32.xlu0 %v1524, 27
        %v1551 = vpop.permute.xlu0 %1550
        %1552 = vrot.lane.b32.xlu0 %v1535, 27
        %v1553 = vpop.permute.xlu0 %1552
        %vm1554 = vcmask 220160
        %v1555 = vsel %vm1554, %v1537, %v1539
        %v1556 = vsel %vm1554, %v1539, %v1541
        %v1557 = vsel %vm1554, %v1541, %v1543
        %v1558 = vsel %vm1554, %v1543, %v1545
        %v1559 = vsel %vm1554, %v1545, %v1547
        %v1560 = vsel %vm1554, %v1547, %v1549
        %v1561 = vsel %vm1554, %v1549, %v1551
        %v1562 = vsel %vm1554, %v1551, %v1553
        %1571 = vst [vmem:[#allocation3 + $0x2c0] sm:$0xf0] %v1555
        %1572 = vst [vmem:[#allocation3 + $0x2c8] sm:$0xf0] %v1556
        %1573 = vst [vmem:[#allocation3 + $0x2d0] sm:$0xf0] %v1557
        %1574 = vst [vmem:[#allocation3 + $0x2d8] sm:$0xf0] %v1558
        %1575 = vst [vmem:[#allocation3 + $0x2e0] sm:$0xf0] %v1559
        %1576 = vst [vmem:[#allocation3 + $0x2e8] sm:$0xf0] %v1560
        %1577 = vst [vmem:[#allocation3 + $0x2f0] sm:$0xf0] %v1561
        %1578 = vst.msk [vmem:[#allocation3 + $0x2f8] sm:$0xf0] %vm373, %v1562
        %v1579 = vld [vmem:[%s239 + $0x4] sm:$0xff]
        %v1580 = vld [vmem:[%s239 + $0xc] sm:$0xff]
        %v1581 = vld [vmem:[%s239 + $0x14] sm:$0xff]
        %v1582 = vld [vmem:[%s239 + $0x1c] sm:$0xff]
        %v1583 = vld [vmem:[%s239 + $0x24] sm:$0xf]
        %v1589 = vcombine.high %v1579, %v1579
        %v1590 = vcombine.high %v1580, %v1580
        %v1591 = vcombine.high %v1581, %v1581
        %v1592 = vcombine.high %v1582, %v1582
        %1593 = vrot.lane.b32.xlu0 %v1579, 19
        %v1594 = vpop.permute.xlu0 %1593
        %1595 = vrot.lane.b32.xlu0 %v1589, 19
        %v1596 = vpop.permute.xlu0 %1595
        %1597 = vrot.lane.b32.xlu0 %v1580, 19
        %v1598 = vpop.permute.xlu0 %1597
        %1599 = vrot.lane.b32.xlu0 %v1590, 19
        %v1600 = vpop.permute.xlu0 %1599
        %1601 = vrot.lane.b32.xlu0 %v1581, 19
        %v1602 = vpop.permute.xlu0 %1601
        %1603 = vrot.lane.b32.xlu0 %v1591, 19
        %v1604 = vpop.permute.xlu0 %1603
        %1605 = vrot.lane.b32.xlu0 %v1582, 19
        %v1606 = vpop.permute.xlu0 %1605
        %1607 = vrot.lane.b32.xlu0 %v1592, 19
        %v1608 = vpop.permute.xlu0 %1607
        %1609 = vrot.lane.b32.xlu0 %v1583, 19
        %v1610 = vpop.permute.xlu0 %1609
        %vm1611 = vcmask 154624
        %v1612 = vsel %vm1611, %v1594, %v1596
        %v1613 = vsel %vm1611, %v1596, %v1598
        %v1614 = vsel %vm1611, %v1598, %v1600
        %v1615 = vsel %vm1611, %v1600, %v1602
        %v1616 = vsel %vm1611, %v1602, %v1604
        %v1617 = vsel %vm1611, %v1604, %v1606
        %v1618 = vsel %vm1611, %v1606, %v1608
        %v1619 = vsel %vm1611, %v1608, %v1610
        %1628 = vst [vmem:[#allocation3 + $0x300] sm:$0xf] %v1612
        %1629 = vst [vmem:[#allocation3 + $0x308] sm:$0xf] %v1613
        %1630 = vst [vmem:[#allocation3 + $0x310] sm:$0xf] %v1614
        %1631 = vst [vmem:[#allocation3 + $0x318] sm:$0xf] %v1615
        %1632 = vst [vmem:[#allocation3 + $0x320] sm:$0xf] %v1616
        %1633 = vst [vmem:[#allocation3 + $0x328] sm:$0xf] %v1617
        %1634 = vst [vmem:[#allocation3 + $0x330] sm:$0xf] %v1618
        %1635 = vst.msk [vmem:[#allocation3 + $0x338] sm:$0xf] %vm320, %v1619
        %v1636 = vld [vmem:[%s239 + $0x4] sm:$0xff]
        %v1637 = vld [vmem:[%s239 + $0xc] sm:$0xff]
        %v1638 = vld [vmem:[%s239 + $0x14] sm:$0xff]
        %v1639 = vld [vmem:[%s239 + $0x1c] sm:$0xff]
        %v1640 = vld [vmem:[%s239 + $0x24] sm:$0xf]
        %v1646 = vcombine.low %v1636, %v1636
        %v1647 = vcombine.low %v1637, %v1637
        %v1648 = vcombine.low %v1638, %v1638
        %v1649 = vcombine.low %v1639, %v1639
        %v1650 = vcombine.low %v1640, %v1640
        %1651 = vrot.lane.b32.xlu0 %v1646, 18
        %v1652 = vpop.permute.xlu0 %1651
        %1653 = vrot.lane.b32.xlu0 %v1636, 18
        %v1654 = vpop.permute.xlu0 %1653
        %1655 = vrot.lane.b32.xlu0 %v1647, 18
        %v1656 = vpop.permute.xlu0 %1655
        %1657 = vrot.lane.b32.xlu0 %v1637, 18
        %v1658 = vpop.permute.xlu0 %1657
        %1659 = vrot.lane.b32.xlu0 %v1648, 18
        %v1660 = vpop.permute.xlu0 %1659
        %1661 = vrot.lane.b32.xlu0 %v1638, 18
        %v1662 = vpop.permute.xlu0 %1661
        %1663 = vrot.lane.b32.xlu0 %v1649, 18
        %v1664 = vpop.permute.xlu0 %1663
        %1665 = vrot.lane.b32.xlu0 %v1639, 18
        %v1666 = vpop.permute.xlu0 %1665
        %1667 = vrot.lane.b32.xlu0 %v1650, 18
        %v1668 = vpop.permute.xlu0 %1667
        %vm1669 = vcmask 146432
        %v1670 = vsel %vm1669, %v1652, %v1654
        %v1671 = vsel %vm1669, %v1654, %v1656
        %v1672 = vsel %vm1669, %v1656, %v1658
        %v1673 = vsel %vm1669, %v1658, %v1660
        %v1674 = vsel %vm1669, %v1660, %v1662
        %v1675 = vsel %vm1669, %v1662, %v1664
        %v1676 = vsel %vm1669, %v1664, %v1666
        %v1677 = vsel %vm1669, %v1666, %v1668
        %1686 = vst [vmem:[#allocation3 + $0x300] sm:$0xf0] %v1670
        %1687 = vst [vmem:[#allocation3 + $0x308] sm:$0xf0] %v1671
        %1688 = vst [vmem:[#allocation3 + $0x310] sm:$0xf0] %v1672
        %1689 = vst [vmem:[#allocation3 + $0x318] sm:$0xf0] %v1673
        %1690 = vst [vmem:[#allocation3 + $0x320] sm:$0xf0] %v1674
        %1691 = vst [vmem:[#allocation3 + $0x328] sm:$0xf0] %v1675
        %1692 = vst [vmem:[#allocation3 + $0x330] sm:$0xf0] %v1676
        %1693 = vst.msk [vmem:[#allocation3 + $0x338] sm:$0xf0] %vm373, %v1677
        %v1694 = vld [vmem:[%s239 + $0x4] sm:$0xff]
        %v1695 = vld [vmem:[%s239 + $0xc] sm:$0xff]
        %v1696 = vld [vmem:[%s239 + $0x14] sm:$0xff]
        %v1697 = vld [vmem:[%s239 + $0x1c] sm:$0xff]
        %v1698 = vld [vmem:[%s239 + $0x24] sm:$0xf]
        %v1704 = vcombine.high %v1694, %v1694
        %v1705 = vcombine.high %v1695, %v1695
        %v1706 = vcombine.high %v1696, %v1696
        %v1707 = vcombine.high %v1697, %v1697
        %1708 = vrot.lane.b32.xlu0 %v1694, 17
        %v1709 = vpop.permute.xlu0 %1708
        %1710 = vrot.lane.b32.xlu0 %v1704, 17
        %v1711 = vpop.permute.xlu0 %1710
        %1712 = vrot.lane.b32.xlu0 %v1695, 17
        %v1713 = vpop.permute.xlu0 %1712
        %1714 = vrot.lane.b32.xlu0 %v1705, 17
        %v1715 = vpop.permute.xlu0 %1714
        %1716 = vrot.lane.b32.xlu0 %v1696, 17
        %v1717 = vpop.permute.xlu0 %1716
        %1718 = vrot.lane.b32.xlu0 %v1706, 17
        %v1719 = vpop.permute.xlu0 %1718
        %1720 = vrot.lane.b32.xlu0 %v1697, 17
        %v1721 = vpop.permute.xlu0 %1720
        %1722 = vrot.lane.b32.xlu0 %v1707, 17
        %v1723 = vpop.permute.xlu0 %1722
        %1724 = vrot.lane.b32.xlu0 %v1698, 17
        %v1725 = vpop.permute.xlu0 %1724
        %vm1726 = vcmask 138240
        %v1727 = vsel %vm1726, %v1709, %v1711
        %v1728 = vsel %vm1726, %v1711, %v1713
        %v1729 = vsel %vm1726, %v1713, %v1715
        %v1730 = vsel %vm1726, %v1715, %v1717
        %v1731 = vsel %vm1726, %v1717, %v1719
        %v1732 = vsel %vm1726, %v1719, %v1721
        %v1733 = vsel %vm1726, %v1721, %v1723
        %v1734 = vsel %vm1726, %v1723, %v1725
        %1743 = vst [vmem:[#allocation3 + $0x340] sm:$0xf] %v1727
        %1744 = vst [vmem:[#allocation3 + $0x348] sm:$0xf] %v1728
        %1745 = vst [vmem:[#allocation3 + $0x350] sm:$0xf] %v1729
        %1746 = vst [vmem:[#allocation3 + $0x358] sm:$0xf] %v1730
        %1747 = vst [vmem:[#allocation3 + $0x360] sm:$0xf] %v1731
        %1748 = vst [vmem:[#allocation3 + $0x368] sm:$0xf] %v1732
        %1749 = vst [vmem:[#allocation3 + $0x370] sm:$0xf] %v1733
        %1750 = vst.msk [vmem:[#allocation3 + $0x378] sm:$0xf] %vm320, %v1734
        %v1751 = vld [vmem:[%s1] sm:$0xff]
        %v1752 = vld [vmem:[#allocation3] sm:$0xff]
        %v1753 = vld [vmem:[#allocation3 + $0x8] sm:$0xff]
        %v1754 = vld [vmem:[#allocation3 + $0x10] sm:$0xff]
        %v1755 = vld [vmem:[#allocation3 + $0x18] sm:$0xff]
        %v1756 = vld [vmem:[#allocation3 + $0x20] sm:$0xff]
        %v1757 = vld [vmem:[#allocation3 + $0x28] sm:$0xff]
        %v1758 = vld [vmem:[#allocation3 + $0x30] sm:$0xff]
        %v1759 = vld [vmem:[#allocation3 + $0x38] sm:$0xff]
        %v1760 = vld [vmem:[#allocation3 + $0x40] sm:$0xff]
        %v1761 = vld [vmem:[#allocation3 + $0x48] sm:$0xff]
        %v1762 = vld [vmem:[#allocation3 + $0x50] sm:$0xff]
        %v1763 = vld [vmem:[#allocation3 + $0x58] sm:$0xff]
        %v1764 = vld [vmem:[#allocation3 + $0x60] sm:$0xff]
        %v1765 = vld [vmem:[#allocation3 + $0x68] sm:$0xff]
        %v1766 = vld [vmem:[#allocation3 + $0x70] sm:$0xff]
        %v1767 = vld [vmem:[#allocation3 + $0x78] sm:$0xff]
        %v1768 = vld [vmem:[#allocation3 + $0x80] sm:$0xff]
        %v1769 = vld [vmem:[#allocation3 + $0x88] sm:$0xff]
        %v1770 = vld [vmem:[#allocation3 + $0x90] sm:$0xff]
        %v1771 = vld [vmem:[#allocation3 + $0x98] sm:$0xff]
        %v1772 = vld [vmem:[#allocation3 + $0xa0] sm:$0xff]
        %v1773 = vld [vmem:[#allocation3 + $0xa8] sm:$0xff]
        %v1774 = vld [vmem:[#allocation3 + $0xb0] sm:$0xff]
        %v1775 = vld [vmem:[#allocation3 + $0xb8] sm:$0xff]
        %v1776 = vld [vmem:[#allocation3 + $0xc0] sm:$0xff]
        %v1777 = vld [vmem:[#allocation3 + $0xc8] sm:$0xff]
        %v1778 = vld [vmem:[#allocation3 + $0xd0] sm:$0xff]
        %v1779 = vld [vmem:[#allocation3 + $0xd8] sm:$0xff]
        %v1780 = vld [vmem:[#allocation3 + $0xe0] sm:$0xff]
        %v1781 = vld [vmem:[#allocation3 + $0xe8] sm:$0xff]
        %v1782 = vld [vmem:[#allocation3 + $0xf0] sm:$0xff]
        %v1783 = vld [vmem:[#allocation3 + $0xf8] sm:$0xff]
        %v1784 = vld [vmem:[#allocation3 + $0x100] sm:$0xff]
        %v1785 = vld [vmem:[#allocation3 + $0x108] sm:$0xff]
        %v1786 = vld [vmem:[#allocation3 + $0x110] sm:$0xff]
        %v1787 = vld [vmem:[#allocation3 + $0x118] sm:$0xff]
        %v1788 = vld [vmem:[#allocation3 + $0x120] sm:$0xff]
        %v1789 = vld [vmem:[#allocation3 + $0x128] sm:$0xff]
        %v1790 = vld [vmem:[#allocation3 + $0x130] sm:$0xff]
        %v1791 = vld [vmem:[#allocation3 + $0x138] sm:$0xff]
        %v1792 = vld [vmem:[#allocation3 + $0x140] sm:$0xff]
        %v1793 = vld [vmem:[#allocation3 + $0x148] sm:$0xff]
        %v1794 = vld [vmem:[#allocation3 + $0x150] sm:$0xff]
        %v1795 = vld [vmem:[#allocation3 + $0x158] sm:$0xff]
        %v1796 = vld [vmem:[#allocation3 + $0x160] sm:$0xff]
        %v1797 = vld [vmem:[#allocation3 + $0x168] sm:$0xff]
        %v1798 = vld [vmem:[#allocation3 + $0x170] sm:$0xff]
        %v1799 = vld [vmem:[#allocation3 + $0x178] sm:$0xff]
        %v1800 = vld [vmem:[#allocation3 + $0x180] sm:$0xff]
        %v1801 = vld [vmem:[#allocation3 + $0x188] sm:$0xff]
        %v1802 = vld [vmem:[#allocation3 + $0x190] sm:$0xff]
        %v1803 = vld [vmem:[#allocation3 + $0x198] sm:$0xff]
        %v1804 = vld [vmem:[#allocation3 + $0x1a0] sm:$0xff]
        %v1805 = vld [vmem:[#allocation3 + $0x1a8] sm:$0xff]
        %v1806 = vld [vmem:[#allocation3 + $0x1b0] sm:$0xff]
        %v1807 = vld [vmem:[#allocation3 + $0x1b8] sm:$0xff]
        %v1808 = vld [vmem:[#allocation3 + $0x1c0] sm:$0xff]
        %v1809 = vld [vmem:[#allocation3 + $0x1c8] sm:$0xff]
        %v1810 = vld [vmem:[#allocation3 + $0x1d0] sm:$0xff]
        %v1811 = vld [vmem:[#allocation3 + $0x1d8] sm:$0xff]
        %v1812 = vld [vmem:[#allocation3 + $0x1e0] sm:$0xff]
        %v1813 = vld [vmem:[#allocation3 + $0x1e8] sm:$0xff]
        %v1814 = vld [vmem:[#allocation3 + $0x1f0] sm:$0xff]
        %v1815 = vld [vmem:[#allocation3 + $0x1f8] sm:$0xff]
        %v1816 = vld [vmem:[#allocation3 + $0x200] sm:$0xff]
        %v1817 = vld [vmem:[#allocation3 + $0x208] sm:$0xff]
        %v1818 = vld [vmem:[#allocation3 + $0x210] sm:$0xff]
        %v1819 = vld [vmem:[#allocation3 + $0x218] sm:$0xff]
        %v1820 = vld [vmem:[#allocation3 + $0x220] sm:$0xff]
        %v1821 = vld [vmem:[#allocation3 + $0x228] sm:$0xff]
        %v1822 = vld [vmem:[#allocation3 + $0x230] sm:$0xff]
        %v1823 = vld [vmem:[#allocation3 + $0x238] sm:$0xff]
        %v1824 = vld [vmem:[#allocation3 + $0x240] sm:$0xff]
        %v1825 = vld [vmem:[#allocation3 + $0x248] sm:$0xff]
        %v1826 = vld [vmem:[#allocation3 + $0x250] sm:$0xff]
        %v1827 = vld [vmem:[#allocation3 + $0x258] sm:$0xff]
        %v1828 = vld [vmem:[#allocation3 + $0x260] sm:$0xff]
        %v1829 = vld [vmem:[#allocation3 + $0x268] sm:$0xff]
        %v1830 = vld [vmem:[#allocation3 + $0x270] sm:$0xff]
        %v1831 = vld [vmem:[#allocation3 + $0x278] sm:$0xff]
        %v1832 = vld [vmem:[#allocation3 + $0x280] sm:$0xff]
        %v1833 = vld [vmem:[#allocation3 + $0x288] sm:$0xff]
        %v1834 = vld [vmem:[#allocation3 + $0x290] sm:$0xff]
        %v1835 = vld [vmem:[#allocation3 + $0x298] sm:$0xff]
        %v1836 = vld [vmem:[#allocation3 + $0x2a0] sm:$0xff]
        %v1837 = vld [vmem:[#allocation3 + $0x2a8] sm:$0xff]
        %v1838 = vld [vmem:[#allocation3 + $0x2b0] sm:$0xff]
        %v1839 = vld [vmem:[#allocation3 + $0x2b8] sm:$0xff]
        %v1840 = vld [vmem:[#allocation3 + $0x2c0] sm:$0xff]
        %v1841 = vld [vmem:[#allocation3 + $0x2c8] sm:$0xff]
        %v1842 = vld [vmem:[#allocation3 + $0x2d0] sm:$0xff]
        %v1843 = vld [vmem:[#allocation3 + $0x2d8] sm:$0xff]
        %v1844 = vld [vmem:[#allocation3 + $0x2e0] sm:$0xff]
        %v1845 = vld [vmem:[#allocation3 + $0x2e8] sm:$0xff]
        %v1846 = vld [vmem:[#allocation3 + $0x2f0] sm:$0xff]
        %v1847 = vld [vmem:[#allocation3 + $0x2f8] sm:$0xff]
        %v1848 = vld [vmem:[#allocation3 + $0x300] sm:$0xff]
        %v1849 = vld [vmem:[#allocation3 + $0x308] sm:$0xff]
        %v1850 = vld [vmem:[#allocation3 + $0x310] sm:$0xff]
        %v1851 = vld [vmem:[#allocation3 + $0x318] sm:$0xff]
        %v1852 = vld [vmem:[#allocation3 + $0x320] sm:$0xff]
        %v1853 = vld [vmem:[#allocation3 + $0x328] sm:$0xff]
        %v1854 = vld [vmem:[#allocation3 + $0x330] sm:$0xff]
        %v1855 = vld [vmem:[#allocation3 + $0x338] sm:$0xff]
        %v1856 = vld [vmem:[#allocation3 + $0x340] sm:$0xf]
        %v1857 = vld [vmem:[#allocation3 + $0x348] sm:$0xf]
        %v1858 = vld [vmem:[#allocation3 + $0x350] sm:$0xf]
        %v1859 = vld [vmem:[#allocation3 + $0x358] sm:$0xf]
        %v1860 = vld [vmem:[#allocation3 + $0x360] sm:$0xf]
        %v1861 = vld [vmem:[#allocation3 + $0x368] sm:$0xf]
        %v1862 = vld [vmem:[#allocation3 + $0x370] sm:$0xf]
        %v1863 = vld [vmem:[#allocation3 + $0x378] sm:$0xf]
        %vm1864 = vcmask 883712
        %v1866 = vsel %vm1864, %v1751, 0
        %vm1868 = vcmask 1043456
        %v1870 = vsel %vm1868, %v1856, 0
        %v1873 = vsel %vm1868, %v1857, 0
        %v1876 = vsel %vm1868, %v1858, 0
        %v1879 = vsel %vm1868, %v1859, 0
        %v1882 = vsel %vm1868, %v1860, 0
        %v1885 = vsel %vm1868, %v1861, 0
        %v1888 = vsel %vm1868, %v1862, 0
        %v1891 = vsel %vm1868, %v1863, 0
        %1893 = vmatprep.subr.mxu0 %v1753
        %1894 = vmatpush1.msra.mxu0 %v1752
        %1895 = vmatprep.subr.mxu0 %v1761
        %1896 = vmatpush1.msra.mxu0 %v1760
        %1897 = vmatprep.subr.mxu0 %v1769
        %1898 = vmatpush1.msra.mxu0 %v1768
        %1899 = vmatprep.subr.mxu0 %v1777
        %1900 = vmatpush1.msra.mxu0 %v1776
        %1901 = vmatprep.subr.mxu0 %v1785
        %1902 = vmatpush1.msra.mxu0 %v1784
        %1903 = vmatprep.subr.mxu0 %v1793
        %1904 = vmatpush1.msra.mxu0 %v1792
        %1905 = vmatprep.subr.mxu0 %v1801
        %1906 = vmatpush1.msra.mxu0 %v1800
        %1907 = vmatprep.subr.mxu0 %v1809
        %1908 = vmatpush1.msra.mxu0 %v1808
        %1909 = vmatprep.subr.mxu0 %v1817
        %1910 = vmatpush1.msra.mxu0 %v1816
        %1911 = vmatprep.subr.mxu0 %v1825
        %1912 = vmatpush1.msra.mxu0 %v1824
        %1913 = vmatprep.subr.mxu0 %v1833
        %1914 = vmatpush1.msra.mxu0 %v1832
        %1915 = vmatprep.subr.mxu0 %v1841
        %1916 = vmatpush1.msra.mxu0 %v1840
        %1917 = vmatprep.subr.mxu0 %v1849
        %1918 = vmatpush1.msra.mxu0 %v1848
        %1919 = vmatprep.subr.mxu0 %v1873
        %1920 = vmatpush1.msra.mxu0 %v1870
        %1921 = vmatprep.subr.mxu0 0.0
        %1922 = vmatpush1.msra.mxu0 0.0
        %1923 = vmatprep.subr.mxu0 0.0
        %1924 = vmatpush1.msra.mxu0 0.0
        %1925 = vmatprep.subr.mxu0 0.0
        %1926 = vmatpush1.msra.mxu0 0.0
        %1927 = vmatprep.subr.mxu0 0.0
        %1928 = vmatpush1.msra.mxu0 0.0
        %1929 = vmatprep.subr.mxu0 0.0
        %1930 = vmatpush1.msra.mxu0 0.0
        %1931 = vmatprep.subr.mxu0 0.0
        %1932 = vmatpush1.msra.mxu0 0.0
        %1933 = vmatprep.subr.mxu0 0.0
        %1934 = vmatpush1.msra.mxu0 0.0
        %1935 = vmatprep.subr.mxu0 0.0
        %1936 = vmatpush1.msra.mxu0 0.0
        %1937 = vmatprep.subr.mxu0 0.0
        %1938 = vmatpush1.msra.mxu0 0.0
        %1939 = vmatprep.subr.mxu0 0.0
        %1940 = vmatpush1.msra.mxu0 0.0
        %1941 = vmatprep.subr.mxu0 0.0
        %1942 = vmatpush1.msra.mxu0 0.0
        %1943 = vmatprep.subr.mxu0 0.0
        %1944 = vmatpush1.msra.mxu0 0.0
        %1945 = vmatprep.subr.mxu0 0.0
        %1946 = vmatpush1.msra.mxu0 0.0
        %1947 = vmatprep.subr.mxu0 0.0
        %1948 = vmatpush1.msra.mxu0 0.0
        %1949 = vmatprep.subr.mxu0 0.0
        %1950 = vmatpush1.msra.mxu0 0.0
        %1951 = vmatprep.subr.mxu0 0.0
        %1952 = vmatpush1.msra.mxu0 0.0
        %1953 = vmatprep.subr.mxu0 0.0
        %1954 = vmatpush1.msra.mxu0 0.0
        %1955 = vmatprep.subr.mxu0 0.0
        %1956 = vmatpush1.msra.mxu0 0.0
        %1957 = vmatprep.mubr.f32.mxu0 0.0
        %1958 = vmatmul.mubr.f32.gmra.mrb[0].mxu0 %v1866
        %v1959 = vpop.f32.mrb[0].mxu0
        %v1960 = vadd.f32 0.0, %v1959
        %v1961 = vpop.f32.mrb[0].mxu0
        %v1962 = vadd.f32 0.0, %v1961
        %1963 = vdwg.mxu0
        %1964 = vmatprep.subr.mxu0 %v1755
        %1965 = vmatpush1.msra.mxu0 %v1754
        %1966 = vmatprep.subr.mxu0 %v1763
        %1967 = vmatpush1.msra.mxu0 %v1762
        %1968 = vmatprep.subr.mxu0 %v1771
        %1969 = vmatpush1.msra.mxu0 %v1770
        %1970 = vmatprep.subr.mxu0 %v1779
        %1971 = vmatpush1.msra.mxu0 %v1778
        %1972 = vmatprep.subr.mxu0 %v1787
        %1973 = vmatpush1.msra.mxu0 %v1786
        %1974 = vmatprep.subr.mxu0 %v1795
        %1975 = vmatpush1.msra.mxu0 %v1794
        %1976 = vmatprep.subr.mxu0 %v1803
        %1977 = vmatpush1.msra.mxu0 %v1802
        %1978 = vmatprep.subr.mxu0 %v1811
        %1979 = vmatpush1.msra.mxu0 %v1810
        %1980 = vmatprep.subr.mxu0 %v1819
        %1981 = vmatpush1.msra.mxu0 %v1818
        %1982 = vmatprep.subr.mxu0 %v1827
        %1983 = vmatpush1.msra.mxu0 %v1826
        %1984 = vmatprep.subr.mxu0 %v1835
        %1985 = vmatpush1.msra.mxu0 %v1834
        %1986 = vmatprep.subr.mxu0 %v1843
        %1987 = vmatpush1.msra.mxu0 %v1842
        %1988 = vmatprep.subr.mxu0 %v1851
        %1989 = vmatpush1.msra.mxu0 %v1850
        %1990 = vmatprep.subr.mxu0 %v1879
        %1991 = vmatpush1.msra.mxu0 %v1876
        %1992 = vmatprep.subr.mxu0 0.0
        %1993 = vmatpush1.msra.mxu0 0.0
        %1994 = vmatprep.subr.mxu0 0.0
        %1995 = vmatpush1.msra.mxu0 0.0
        %1996 = vmatprep.subr.mxu0 0.0
        %1997 = vmatpush1.msra.mxu0 0.0
        %1998 = vmatprep.subr.mxu0 0.0
        %1999 = vmatpush1.msra.mxu0 0.0
        %2000 = vmatprep.subr.mxu0 0.0
        %2001 = vmatpush1.msra.mxu0 0.0
        %2002 = vmatprep.subr.mxu0 0.0
        %2003 = vmatpush1.msra.mxu0 0.0
        %2004 = vmatprep.subr.mxu0 0.0
        %2005 = vmatpush1.msra.mxu0 0.0
        %2006 = vmatprep.subr.mxu0 0.0
        %2007 = vmatpush1.msra.mxu0 0.0
        %2008 = vmatprep.subr.mxu0 0.0
        %2009 = vmatpush1.msra.mxu0 0.0
        %2010 = vmatprep.subr.mxu0 0.0
        %2011 = vmatpush1.msra.mxu0 0.0
        %2012 = vmatprep.subr.mxu0 0.0
        %2013 = vmatpush1.msra.mxu0 0.0
        %2014 = vmatprep.subr.mxu0 0.0
        %2015 = vmatpush1.msra.mxu0 0.0
        %2016 = vmatprep.subr.mxu0 0.0
        %2017 = vmatpush1.msra.mxu0 0.0
        %2018 = vmatprep.subr.mxu0 0.0
        %2019 = vmatpush1.msra.mxu0 0.0
        %2020 = vmatprep.subr.mxu0 0.0
        %2021 = vmatpush1.msra.mxu0 0.0
        %2022 = vmatprep.subr.mxu0 0.0
        %2023 = vmatpush1.msra.mxu0 0.0
        %2024 = vmatprep.subr.mxu0 0.0
        %2025 = vmatpush1.msra.mxu0 0.0
        %2026 = vmatprep.subr.mxu0 0.0
        %2027 = vmatpush1.msra.mxu0 0.0
        %2028 = vmatprep.mubr.f32.mxu0 0.0
        %2029 = vmatmul.mubr.f32.gmra.mrb[0].mxu0 %v1866
        %v2030 = vpop.f32.mrb[0].mxu0
        %v2031 = vadd.f32 0.0, %v2030
        %v2032 = vpop.f32.mrb[0].mxu0
        %v2033 = vadd.f32 0.0, %v2032
        %2034 = vdwg.mxu0
        %2035 = vmatprep.subr.mxu0 %v1757
        %2036 = vmatpush1.msra.mxu0 %v1756
        %2037 = vmatprep.subr.mxu0 %v1765
        %2038 = vmatpush1.msra.mxu0 %v1764
        %2039 = vmatprep.subr.mxu0 %v1773
        %2040 = vmatpush1.msra.mxu0 %v1772
        %2041 = vmatprep.subr.mxu0 %v1781
        %2042 = vmatpush1.msra.mxu0 %v1780
        %2043 = vmatprep.subr.mxu0 %v1789
        %2044 = vmatpush1.msra.mxu0 %v1788
        %2045 = vmatprep.subr.mxu0 %v1797
        %2046 = vmatpush1.msra.mxu0 %v1796
        %2047 = vmatprep.subr.mxu0 %v1805
        %2048 = vmatpush1.msra.mxu0 %v1804
        %2049 = vmatprep.subr.mxu0 %v1813
        %2050 = vmatpush1.msra.mxu0 %v1812
        %2051 = vmatprep.subr.mxu0 %v1821
        %2052 = vmatpush1.msra.mxu0 %v1820
        %2053 = vmatprep.subr.mxu0 %v1829
        %2054 = vmatpush1.msra.mxu0 %v1828
        %2055 = vmatprep.subr.mxu0 %v1837
        %2056 = vmatpush1.msra.mxu0 %v1836
        %2057 = vmatprep.subr.mxu0 %v1845
        %2058 = vmatpush1.msra.mxu0 %v1844
        %2059 = vmatprep.subr.mxu0 %v1853
        %2060 = vmatpush1.msra.mxu0 %v1852
        %2061 = vmatprep.subr.mxu0 %v1885
        %2062 = vmatpush1.msra.mxu0 %v1882
        %2063 = vmatprep.subr.mxu0 0.0
        %2064 = vmatpush1.msra.mxu0 0.0
        %2065 = vmatprep.subr.mxu0 0.0
        %2066 = vmatpush1.msra.mxu0 0.0
        %2067 = vmatprep.subr.mxu0 0.0
        %2068 = vmatpush1.msra.mxu0 0.0
        %2069 = vmatprep.subr.mxu0 0.0
        %2070 = vmatpush1.msra.mxu0 0.0
        %2071 = vmatprep.subr.mxu0 0.0
        %2072 = vmatpush1.msra.mxu0 0.0
        %2073 = vmatprep.subr.mxu0 0.0
        %2074 = vmatpush1.msra.mxu0 0.0
        %2075 = vmatprep.subr.mxu0 0.0
        %2076 = vmatpush1.msra.mxu0 0.0
        %2077 = vmatprep.subr.mxu0 0.0
        %2078 = vmatpush1.msra.mxu0 0.0
        %2079 = vmatprep.subr.mxu0 0.0
        %2080 = vmatpush1.msra.mxu0 0.0
        %2081 = vmatprep.subr.mxu0 0.0
        %2082 = vmatpush1.msra.mxu0 0.0
        %2083 = vmatprep.subr.mxu0 0.0
        %2084 = vmatpush1.msra.mxu0 0.0
        %2085 = vmatprep.subr.mxu0 0.0
        %2086 = vmatpush1.msra.mxu0 0.0
        %2087 = vmatprep.subr.mxu0 0.0
        %2088 = vmatpush1.msra.mxu0 0.0
        %2089 = vmatprep.subr.mxu0 0.0
        %2090 = vmatpush1.msra.mxu0 0.0
        %2091 = vmatprep.subr.mxu0 0.0
        %2092 = vmatpush1.msra.mxu0 0.0
        %2093 = vmatprep.subr.mxu0 0.0
        %2094 = vmatpush1.msra.mxu0 0.0
        %2095 = vmatprep.subr.mxu0 0.0
        %2096 = vmatpush1.msra.mxu0 0.0
        %2097 = vmatprep.subr.mxu0 0.0
        %2098 = vmatpush1.msra.mxu0 0.0
        %2099 = vmatprep.mubr.f32.mxu0 0.0
        %2100 = vmatmul.mubr.f32.gmra.mrb[0].mxu0 %v1866
        %v2101 = vpop.f32.mrb[0].mxu0
        %v2102 = vadd.f32 0.0, %v2101
        %v2103 = vpop.f32.mrb[0].mxu0
        %v2104 = vadd.f32 0.0, %v2103
        %2105 = vdwg.mxu0
        %2106 = vmatprep.subr.mxu0 %v1759
        %2107 = vmatpush1.msra.mxu0 %v1758
        %2108 = vmatprep.subr.mxu0 %v1767
        %2109 = vmatpush1.msra.mxu0 %v1766
        %2110 = vmatprep.subr.mxu0 %v1775
        %2111 = vmatpush1.msra.mxu0 %v1774
        %2112 = vmatprep.subr.mxu0 %v1783
        %2113 = vmatpush1.msra.mxu0 %v1782
        %2114 = vmatprep.subr.mxu0 %v1791
        %2115 = vmatpush1.msra.mxu0 %v1790
        %2116 = vmatprep.subr.mxu0 %v1799
        %2117 = vmatpush1.msra.mxu0 %v1798
        %2118 = vmatprep.subr.mxu0 %v1807
        %2119 = vmatpush1.msra.mxu0 %v1806
        %2120 = vmatprep.subr.mxu0 %v1815
        %2121 = vmatpush1.msra.mxu0 %v1814
        %2122 = vmatprep.subr.mxu0 %v1823
        %2123 = vmatpush1.msra.mxu0 %v1822
        %2124 = vmatprep.subr.mxu0 %v1831
        %2125 = vmatpush1.msra.mxu0 %v1830
        %2126 = vmatprep.subr.mxu0 %v1839
        %2127 = vmatpush1.msra.mxu0 %v1838
        %2128 = vmatprep.subr.mxu0 %v1847
        %2129 = vmatpush1.msra.mxu0 %v1846
        %2130 = vmatprep.subr.mxu0 %v1855
        %2131 = vmatpush1.msra.mxu0 %v1854
        %2132 = vmatprep.subr.mxu0 %v1891
        %2133 = vmatpush1.msra.mxu0 %v1888
        %2134 = vmatprep.subr.mxu0 0.0
        %2135 = vmatpush1.msra.mxu0 0.0
        %2136 = vmatprep.subr.mxu0 0.0
        %2137 = vmatpush1.msra.mxu0 0.0
        %2138 = vmatprep.subr.mxu0 0.0
        %2139 = vmatpush1.msra.mxu0 0.0
        %2140 = vmatprep.subr.mxu0 0.0
        %2141 = vmatpush1.msra.mxu0 0.0
        %2142 = vmatprep.subr.mxu0 0.0
        %2143 = vmatpush1.msra.mxu0 0.0
        %2144 = vmatprep.subr.mxu0 0.0
        %2145 = vmatpush1.msra.mxu0 0.0
        %2146 = vmatprep.subr.mxu0 0.0
        %2147 = vmatpush1.msra.mxu0 0.0
        %2148 = vmatprep.subr.mxu0 0.0
        %2149 = vmatpush1.msra.mxu0 0.0
        %2150 = vmatprep.subr.mxu0 0.0
        %2151 = vmatpush1.msra.mxu0 0.0
        %2152 = vmatprep.subr.mxu0 0.0
        %2153 = vmatpush1.msra.mxu0 0.0
        %2154 = vmatprep.subr.mxu0 0.0
        %2155 = vmatpush1.msra.mxu0 0.0
        %2156 = vmatprep.subr.mxu0 0.0
        %2157 = vmatpush1.msra.mxu0 0.0
        %2158 = vmatprep.subr.mxu0 0.0
        %2159 = vmatpush1.msra.mxu0 0.0
        %2160 = vmatprep.subr.mxu0 0.0
        %2161 = vmatpush1.msra.mxu0 0.0
        %2162 = vmatprep.subr.mxu0 0.0
        %2163 = vmatpush1.msra.mxu0 0.0
        %2164 = vmatprep.subr.mxu0 0.0
        %2165 = vmatpush1.msra.mxu0 0.0
        %2166 = vmatprep.subr.mxu0 0.0
        %2167 = vmatpush1.msra.mxu0 0.0
        %2168 = vmatprep.subr.mxu0 0.0
        %2169 = vmatpush1.msra.mxu0 0.0
        %2170 = vmatprep.mubr.f32.mxu0 0.0
        %2171 = vmatmul.mubr.f32.gmra.mrb[0].mxu0 %v1866
        %v2172 = vpop.f32.mrb[0].mxu0
        %v2173 = vadd.f32 0.0, %v2172
        %v2174 = vpop.f32.mrb[0].mxu0
        %v2175 = vadd.f32 0.0, %v2174
        %2176 = vdwg.mxu0
        %v2178 = vlaneseq
        %v2179 = vshrl.u32 %v2178, 7
        %v2180 = vsub.s32 0, %v2179
        %v2181 = vrot.slane %v268, %v2180
        %v2182 = vlaneseq
        %v2183 = vshrl.u32 %v2182, 7
        %v2184 = vsub.s32 1, %v2183
        %v2185 = vrot.slane %v268, %v2184
        %v2186 = vlaneseq
        %v2187 = vshrl.u32 %v2186, 7
        %v2188 = vsub.s32 2, %v2187
        %v2189 = vrot.slane %v268, %v2188
        %v2190 = vlaneseq
        %v2191 = vshrl.u32 %v2190, 7
        %v2192 = vsub.s32 3, %v2191
        %v2193 = vrot.slane %v268, %v2192
        %v2194 = vlaneseq
        %v2195 = vshrl.u32 %v2194, 7
        %v2196 = vsub.s32 4, %v2195
        %v2197 = vrot.slane %v268, %v2196
        %v2198 = vlaneseq
        %v2199 = vshrl.u32 %v2198, 7
        %v2200 = vsub.s32 5, %v2199
        %v2201 = vrot.slane %v268, %v2200
        %v2202 = vlaneseq
        %v2203 = vshrl.u32 %v2202, 7
        %v2204 = vsub.s32 6, %v2203
        %v2205 = vrot.slane %v268, %v2204
        %v2206 = vlaneseq
        %v2207 = vshrl.u32 %v2206, 7
        %v2208 = vsub.s32 7, %v2207
        %v2209 = vrot.slane %v268, %v2208
        %v2218 = vmul.f32 %v1960, %v2181
        %v2219 = vmul.f32 %v1962, %v2185
        %v2220 = vmul.f32 %v2031, %v2189
        %v2221 = vmul.f32 %v2033, %v2193
        %v2222 = vmul.f32 %v2102, %v2197
        %v2223 = vmul.f32 %v2104, %v2201
        %v2224 = vmul.f32 %v2173, %v2205
        %v2225 = vmul.f32 %v2175, %v2209
        %v2226 = vadd.f32 %v2218, %v2219
        %v2227 = vadd.f32 %v2226, %v2220
        %v2228 = vadd.f32 %v2227, %v2221
        %v2229 = vadd.f32 %v2228, %v2222
        %v2230 = vadd.f32 %v2229, %v2223
        %v2231 = vadd.f32 %v2230, %v2224
        %vm2232 = vcmask 850944
        %v2233 = vsel %vm2232, %v2225, 0.0
        %v2234 = vadd.f32 %v2231, %v2233
        %2235 = vadd.xlane.f32.xlu0 %v2234
        %v2236 = vpop.xlane.xlu0 %2235
        %v2237 = vmul.f32 %v2236, 0.001953125
        %v2238 = vsub.f32 %v1960, %v2237
        %v2239 = vsub.f32 %v1962, %v2237
        %v2240 = vsub.f32 %v2031, %v2237
        %v2241 = vsub.f32 %v2033, %v2237
        %v2242 = vsub.f32 %v2102, %v2237
        %v2243 = vsub.f32 %v2104, %v2237
        %v2244 = vsub.f32 %v2173, %v2237
        %v2245 = vsub.f32 %v2175, %v2237
        %v2246 = vmul.f32 %v2238, %v2181
        %v2247 = vmul.f32 %v2239, %v2185
        %v2248 = vmul.f32 %v2240, %v2189
        %v2249 = vmul.f32 %v2241, %v2193
        %v2250 = vmul.f32 %v2242, %v2197
        %v2251 = vmul.f32 %v2243, %v2201
        %v2252 = vmul.f32 %v2244, %v2205
        %v2253 = vmul.f32 %v2245, %v2209
        %v2254 = vmul.f32 %v2246, %v2246
        %v2255 = vmul.f32 %v2247, %v2247
        %v2256 = vmul.f32 %v2248, %v2248
        %v2257 = vmul.f32 %v2249, %v2249
        %v2258 = vmul.f32 %v2250, %v2250
        %v2259 = vmul.f32 %v2251, %v2251
        %v2260 = vmul.f32 %v2252, %v2252
        %v2261 = vmul.f32 %v2253, %v2253
        %v2262 = vadd.f32 %v2254, %v2255
        %v2263 = vadd.f32 %v2262, %v2256
        %v2264 = vadd.f32 %v2263, %v2257
        %v2265 = vadd.f32 %v2264, %v2258
        %v2266 = vadd.f32 %v2265, %v2259
        %v2267 = vadd.f32 %v2266, %v2260
        %v2268 = vsel %vm2232, %v2261, 0.0
        %v2269 = vadd.f32 %v2267, %v2268
        %2270 = vadd.xlane.f32.xlu0 %v2269
        %v2271 = vpop.xlane.xlu0 %2270
        %v2272 = vmul.f32 %v2271, 0.001953125
        %v2273 = vadd.f32 %v2272, 1e-05
        %v2274 = vrsqrt.pop %v2273
        %v2275 = vmul.f32 %v2246, %v2274
        %v2276 = vmul.f32 %v2247, %v2274
        %v2277 = vmul.f32 %v2248, %v2274
        %v2278 = vmul.f32 %v2249, %v2274
        %v2279 = vmul.f32 %v2250, %v2274
        %v2280 = vmul.f32 %v2251, %v2274
        %v2281 = vmul.f32 %v2252, %v2274
        %v2282 = vmul.f32 %v2253, %v2274
        %v2283 = vmax.f32 %v2275, 0.0
        %v2284 = vmax.f32 %v2276, 0.0
        %v2285 = vmax.f32 %v2277, 0.0
        %v2286 = vmax.f32 %v2278, 0.0
        %v2287 = vmax.f32 %v2279, 0.0
        %v2288 = vmax.f32 %v2280, 0.0
        %v2289 = vmax.f32 %v2281, 0.0
        %v2290 = vmax.f32 %v2282, 0.0
        %2291 = vst [vmem:[#allocation2] sm:$0xff] 0.0
        %vm2292 = vcmask 1048384
        %2293 = vst.msk [vmem:[#allocation2 + $0x40] sm:$0xff] %vm2292, 0.0
        %2294 = vst.msk [vmem:[#allocation2 + $0x48] sm:$0xff] %vm2232, 0.0
        %2295 = vst [vmem:[#allocation2 + $0x8] sm:$0xff] %v2283
        %2296 = vst [vmem:[#allocation2 + $0x10] sm:$0xff] %v2284
        %2297 = vst [vmem:[#allocation2 + $0x18] sm:$0xff] %v2285
        %2298 = vst [vmem:[#allocation2 + $0x20] sm:$0xff] %v2286
        %2299 = vst [vmem:[#allocation2 + $0x28] sm:$0xff] %v2287
        %2300 = vst [vmem:[#allocation2 + $0x30] sm:$0xff] %v2288
        %2301 = vst [vmem:[#allocation2 + $0x38] sm:$0xff] %v2289
        %2302 = vst.msk [vmem:[#allocation2 + $0x40] sm:$0xff] %vm2232, %v2290
        %v2303 = vld [vmem:[#allocation2] sm:$0xff]
        %v2304 = vld [vmem:[#allocation2 + $0x8] sm:$0xff]
        %v2305 = vld [vmem:[#allocation2 + $0x10] sm:$0xff]
        %v2306 = vld [vmem:[#allocation2 + $0x18] sm:$0xff]
        %v2307 = vld [vmem:[#allocation2 + $0x20] sm:$0xff]
        %v2308 = vld [vmem:[#allocation2 + $0x28] sm:$0xff]
        %v2309 = vld [vmem:[#allocation2 + $0x30] sm:$0xff]
        %v2310 = vld [vmem:[#allocation2 + $0x38] sm:$0xff]
        %2319 = vrot.lane.b32.xlu0 %v2303, 111
        %v2320 = vpop.permute.xlu0 %2319
        %2321 = vrot.lane.b32.xlu0 %v2304, 111
        %v2322 = vpop.permute.xlu0 %2321
        %2323 = vrot.lane.b32.xlu0 %v2305, 111
        %v2324 = vpop.permute.xlu0 %2323
        %2325 = vrot.lane.b32.xlu0 %v2306, 111
        %v2326 = vpop.permute.xlu0 %2325
        %2327 = vrot.lane.b32.xlu0 %v2307, 111
        %v2328 = vpop.permute.xlu0 %2327
        %2329 = vrot.lane.b32.xlu0 %v2308, 111
        %v2330 = vpop.permute.xlu0 %2329
        %2331 = vrot.lane.b32.xlu0 %v2309, 111
        %v2332 = vpop.permute.xlu0 %2331
        %2333 = vrot.lane.b32.xlu0 %v2310, 111
        %v2334 = vpop.permute.xlu0 %2333
        %v2335 = vsel %vm297, %v2320, %v2322
        %v2336 = vsel %vm297, %v2322, %v2324
        %v2337 = vsel %vm297, %v2324, %v2326
        %v2338 = vsel %vm297, %v2326, %v2328
        %v2339 = vsel %vm297, %v2328, %v2330
        %v2340 = vsel %vm297, %v2330, %v2332
        %v2341 = vsel %vm297, %v2332, %v2334
        %2350 = vst [vmem:[#allocation4] sm:$0xff] %v2335
        %2351 = vst [vmem:[#allocation4 + $0x8] sm:$0xff] %v2336
        %2352 = vst [vmem:[#allocation4 + $0x10] sm:$0xff] %v2337
        %2353 = vst [vmem:[#allocation4 + $0x18] sm:$0xff] %v2338
        %2354 = vst [vmem:[#allocation4 + $0x20] sm:$0xff] %v2339
        %2355 = vst [vmem:[#allocation4 + $0x28] sm:$0xff] %v2340
        %2356 = vst [vmem:[#allocation4 + $0x30] sm:$0xff] %v2341
        %2357 = vst.msk [vmem:[#allocation4 + $0x38] sm:$0xff] %vm2232, %v2334
        %v2358 = vld [vmem:[#allocation2] sm:$0xff]
        %v2359 = vld [vmem:[#allocation2 + $0x8] sm:$0xff]
        %v2360 = vld [vmem:[#allocation2 + $0x10] sm:$0xff]
        %v2361 = vld [vmem:[#allocation2 + $0x18] sm:$0xff]
        %v2362 = vld [vmem:[#allocation2 + $0x20] sm:$0xff]
        %v2363 = vld [vmem:[#allocation2 + $0x28] sm:$0xff]
        %v2364 = vld [vmem:[#allocation2 + $0x30] sm:$0xff]
        %v2365 = vld [vmem:[#allocation2 + $0x38] sm:$0xff]
        %2374 = vrot.lane.b32.xlu0 %v2358, 110
        %v2375 = vpop.permute.xlu0 %2374
        %2376 = vrot.lane.b32.xlu0 %v2359, 110
        %v2377 = vpop.permute.xlu0 %2376
        %2378 = vrot.lane.b32.xlu0 %v2360, 110
        %v2379 = vpop.permute.xlu0 %2378
        %2380 = vrot.lane.b32.xlu0 %v2361, 110
        %v2381 = vpop.permute.xlu0 %2380
        %2382 = vrot.lane.b32.xlu0 %v2362, 110
        %v2383 = vpop.permute.xlu0 %2382
        %2384 = vrot.lane.b32.xlu0 %v2363, 110
        %v2385 = vpop.permute.xlu0 %2384
        %2386 = vrot.lane.b32.xlu0 %v2364, 110
        %v2387 = vpop.permute.xlu0 %2386
        %2388 = vrot.lane.b32.xlu0 %v2365, 110
        %v2389 = vpop.permute.xlu0 %2388
        %v2390 = vsel %vm350, %v2375, %v2377
        %v2391 = vsel %vm350, %v2377, %v2379
        %v2392 = vsel %vm350, %v2379, %v2381
        %v2393 = vsel %vm350, %v2381, %v2383
        %v2394 = vsel %vm350, %v2383, %v2385
        %v2395 = vsel %vm350, %v2385, %v2387
        %v2396 = vsel %vm350, %v2387, %v2389
        %2405 = vst [vmem:[#allocation4 + $0x40] sm:$0xff] %v2390
        %2406 = vst [vmem:[#allocation4 + $0x48] sm:$0xff] %v2391
        %2407 = vst [vmem:[#allocation4 + $0x50] sm:$0xff] %v2392
        %2408 = vst [vmem:[#allocation4 + $0x58] sm:$0xff] %v2393
        %2409 = vst [vmem:[#allocation4 + $0x60] sm:$0xff] %v2394
        %2410 = vst [vmem:[#allocation4 + $0x68] sm:$0xff] %v2395
        %2411 = vst [vmem:[#allocation4 + $0x70] sm:$0xff] %v2396
        %2412 = vst.msk [vmem:[#allocation4 + $0x78] sm:$0xff] %vm2232, %v2389
        %v2413 = vld [vmem:[#allocation2] sm:$0xff]
        %v2414 = vld [vmem:[#allocation2 + $0x8] sm:$0xff]
        %v2415 = vld [vmem:[#allocation2 + $0x10] sm:$0xff]
        %v2416 = vld [vmem:[#allocation2 + $0x18] sm:$0xff]
        %v2417 = vld [vmem:[#allocation2 + $0x20] sm:$0xff]
        %v2418 = vld [vmem:[#allocation2 + $0x28] sm:$0xff]
        %v2419 = vld [vmem:[#allocation2 + $0x30] sm:$0xff]
        %v2420 = vld [vmem:[#allocation2 + $0x38] sm:$0xff]
        %2429 = vrot.lane.b32.xlu0 %v2413, 109
        %v2430 = vpop.permute.xlu0 %2429
        %2431 = vrot.lane.b32.xlu0 %v2414, 109
        %v2432 = vpop.permute.xlu0 %2431
        %2433 = vrot.lane.b32.xlu0 %v2415, 109
        %v2434 = vpop.permute.xlu0 %2433
        %2435 = vrot.lane.b32.xlu0 %v2416, 109
        %v2436 = vpop.permute.xlu0 %2435
        %2437 = vrot.lane.b32.xlu0 %v2417, 109
        %v2438 = vpop.permute.xlu0 %2437
        %2439 = vrot.lane.b32.xlu0 %v2418, 109
        %v2440 = vpop.permute.xlu0 %2439
        %2441 = vrot.lane.b32.xlu0 %v2419, 109
        %v2442 = vpop.permute.xlu0 %2441
        %2443 = vrot.lane.b32.xlu0 %v2420, 109
        %v2444 = vpop.permute.xlu0 %2443
        %v2445 = vsel %vm403, %v2430, %v2432
        %v2446 = vsel %vm403, %v2432, %v2434
        %v2447 = vsel %vm403, %v2434, %v2436
        %v2448 = vsel %vm403, %v2436, %v2438
        %v2449 = vsel %vm403, %v2438, %v2440
        %v2450 = vsel %vm403, %v2440, %v2442
        %v2451 = vsel %vm403, %v2442, %v2444
        %2460 = vst [vmem:[#allocation4 + $0x80] sm:$0xff] %v2445
        %2461 = vst [vmem:[#allocation4 + $0x88] sm:$0xff] %v2446
        %2462 = vst [vmem:[#allocation4 + $0x90] sm:$0xff] %v2447
        %2463 = vst [vmem:[#allocation4 + $0x98] sm:$0xff] %v2448
        %2464 = vst [vmem:[#allocation4 + $0xa0] sm:$0xff] %v2449
        %2465 = vst [vmem:[#allocation4 + $0xa8] sm:$0xff] %v2450
        %2466 = vst [vmem:[#allocation4 + $0xb0] sm:$0xff] %v2451
        %2467 = vst.msk [vmem:[#allocation4 + $0xb8] sm:$0xff] %vm2232, %v2444
        %v2468 = vld [vmem:[#allocation2] sm:$0xff]
        %v2469 = vld [vmem:[#allocation2 + $0x8] sm:$0xff]
        %v2470 = vld [vmem:[#allocation2 + $0x10] sm:$0xff]
        %v2471 = vld [vmem:[#allocation2 + $0x18] sm:$0xff]
        %v2472 = vld [vmem:[#allocation2 + $0x20] sm:$0xff]
        %v2473 = vld [vmem:[#allocation2 + $0x28] sm:$0xff]
        %v2474 = vld [vmem:[#allocation2 + $0x30] sm:$0xff]
        %v2475 = vld [vmem:[#allocation2 + $0x38] sm:$0xff]
        %v2476 = vld [vmem:[#allocation2 + $0x40] sm:$0xff]
        %2486 = vrot.lane.b32.xlu0 %v2468, 101
        %v2487 = vpop.permute.xlu0 %2486
        %2488 = vrot.lane.b32.xlu0 %v2469, 101
        %v2489 = vpop.permute.xlu0 %2488
        %2490 = vrot.lane.b32.xlu0 %v2470, 101
        %v2491 = vpop.permute.xlu0 %2490
        %2492 = vrot.lane.b32.xlu0 %v2471, 101
        %v2493 = vpop.permute.xlu0 %2492
        %2494 = vrot.lane.b32.xlu0 %v2472, 101
        %v2495 = vpop.permute.xlu0 %2494
        %2496 = vrot.lane.b32.xlu0 %v2473, 101
        %v2497 = vpop.permute.xlu0 %2496
        %2498 = vrot.lane.b32.xlu0 %v2474, 101
        %v2499 = vpop.permute.xlu0 %2498
        %2500 = vrot.lane.b32.xlu0 %v2475, 101
        %v2501 = vpop.permute.xlu0 %2500
        %2502 = vrot.lane.b32.xlu0 %v2476, 101
        %v2503 = vpop.permute.xlu0 %2502
        %v2504 = vsel %vm460, %v2487, %v2489
        %v2505 = vsel %vm460, %v2489, %v2491
        %v2506 = vsel %vm460, %v2491, %v2493
        %v2507 = vsel %vm460, %v2493, %v2495
        %v2508 = vsel %vm460, %v2495, %v2497
        %v2509 = vsel %vm460, %v2497, %v2499
        %v2510 = vsel %vm460, %v2499, %v2501
        %v2511 = vsel %vm460, %v2501, %v2503
        %2520 = vst [vmem:[#allocation4 + $0xc0] sm:$0xff] %v2504
        %2521 = vst [vmem:[#allocation4 + $0xc8] sm:$0xff] %v2505
        %2522 = vst [vmem:[#allocation4 + $0xd0] sm:$0xff] %v2506
        %2523 = vst [vmem:[#allocation4 + $0xd8] sm:$0xff] %v2507
        %2524 = vst [vmem:[#allocation4 + $0xe0] sm:$0xff] %v2508
        %2525 = vst [vmem:[#allocation4 + $0xe8] sm:$0xff] %v2509
        %2526 = vst [vmem:[#allocation4 + $0xf0] sm:$0xff] %v2510
        %2527 = vst.msk [vmem:[#allocation4 + $0xf8] sm:$0xff] %vm2232, %v2511
        %v2528 = vld [vmem:[#allocation2] sm:$0xff]
        %v2529 = vld [vmem:[#allocation2 + $0x8] sm:$0xff]
        %v2530 = vld [vmem:[#allocation2 + $0x10] sm:$0xff]
        %v2531 = vld [vmem:[#allocation2 + $0x18] sm:$0xff]
        %v2532 = vld [vmem:[#allocation2 + $0x20] sm:$0xff]
        %v2533 = vld [vmem:[#allocation2 + $0x28] sm:$0xff]
        %v2534 = vld [vmem:[#allocation2 + $0x30] sm:$0xff]
        %v2535 = vld [vmem:[#allocation2 + $0x38] sm:$0xff]
        %v2536 = vld [vmem:[#allocation2 + $0x40] sm:$0xff]
        %2546 = vrot.lane.b32.xlu0 %v2528, 100
        %v2547 = vpop.permute.xlu0 %2546
        %2548 = vrot.lane.b32.xlu0 %v2529, 100
        %v2549 = vpop.permute.xlu0 %2548
        %2550 = vrot.lane.b32.xlu0 %v2530, 100
        %v2551 = vpop.permute.xlu0 %2550
        %2552 = vrot.lane.b32.xlu0 %v2531, 100
        %v2553 = vpop.permute.xlu0 %2552
        %2554 = vrot.lane.b32.xlu0 %v2532, 100
        %v2555 = vpop.permute.xlu0 %2554
        %2556 = vrot.lane.b32.xlu0 %v2533, 100
        %v2557 = vpop.permute.xlu0 %2556
        %2558 = vrot.lane.b32.xlu0 %v2534, 100
        %v2559 = vpop.permute.xlu0 %2558
        %2560 = vrot.lane.b32.xlu0 %v2535, 100
        %v2561 = vpop.permute.xlu0 %2560
        %2562 = vrot.lane.b32.xlu0 %v2536, 100
        %v2563 = vpop.permute.xlu0 %2562
        %v2564 = vsel %vm517, %v2547, %v2549
        %v2565 = vsel %vm517, %v2549, %v2551
        %v2566 = vsel %vm517, %v2551, %v2553
        %v2567 = vsel %vm517, %v2553, %v2555
        %v2568 = vsel %vm517, %v2555, %v2557
        %v2569 = vsel %vm517, %v2557, %v2559
        %v2570 = vsel %vm517, %v2559, %v2561
        %v2571 = vsel %vm517, %v2561, %v2563
        %2580 = vst [vmem:[#allocation4 + $0x100] sm:$0xff] %v2564
        %2581 = vst [vmem:[#allocation4 + $0x108] sm:$0xff] %v2565
        %2582 = vst [vmem:[#allocation4 + $0x110] sm:$0xff] %v2566
        %2583 = vst [vmem:[#allocation4 + $0x118] sm:$0xff] %v2567
        %2584 = vst [vmem:[#allocation4 + $0x120] sm:$0xff] %v2568
        %2585 = vst [vmem:[#allocation4 + $0x128] sm:$0xff] %v2569
        %2586 = vst [vmem:[#allocation4 + $0x130] sm:$0xff] %v2570
        %2587 = vst.msk [vmem:[#allocation4 + $0x138] sm:$0xff] %vm2232, %v2571
        %v2588 = vld [vmem:[#allocation2] sm:$0xff]
        %v2589 = vld [vmem:[#allocation2 + $0x8] sm:$0xff]
        %v2590 = vld [vmem:[#allocation2 + $0x10] sm:$0xff]
        %v2591 = vld [vmem:[#allocation2 + $0x18] sm:$0xff]
        %v2592 = vld [vmem:[#allocation2 + $0x20] sm:$0xff]
        %v2593 = vld [vmem:[#allocation2 + $0x28] sm:$0xff]
        %v2594 = vld [vmem:[#allocation2 + $0x30] sm:$0xff]
        %v2595 = vld [vmem:[#allocation2 + $0x38] sm:$0xff]
        %v2596 = vld [vmem:[#allocation2 + $0x40] sm:$0xff]
        %2606 = vrot.lane.b32.xlu0 %v2588, 99
        %v2607 = vpop.permute.xlu0 %2606
        %2608 = vrot.lane.b32.xlu0 %v2589, 99
        %v2609 = vpop.permute.xlu0 %2608
        %2610 = vrot.lane.b32.xlu0 %v2590, 99
        %v2611 = vpop.permute.xlu0 %2610
        %2612 = vrot.lane.b32.xlu0 %v2591, 99
        %v2613 = vpop.permute.xlu0 %2612
        %2614 = vrot.lane.b32.xlu0 %v2592, 99
        %v2615 = vpop.permute.xlu0 %2614
        %2616 = vrot.lane.b32.xlu0 %v2593, 99
        %v2617 = vpop.permute.xlu0 %2616
        %2618 = vrot.lane.b32.xlu0 %v2594, 99
        %v2619 = vpop.permute.xlu0 %2618
        %2620 = vrot.lane.b32.xlu0 %v2595, 99
        %v2621 = vpop.permute.xlu0 %2620
        %2622 = vrot.lane.b32.xlu0 %v2596, 99
        %v2623 = vpop.permute.xlu0 %2622
        %v2624 = vsel %vm575, %v2607, %v2609
        %v2625 = vsel %vm575, %v2609, %v2611
        %v2626 = vsel %vm575, %v2611, %v2613
        %v2627 = vsel %vm575, %v2613, %v2615
        %v2628 = vsel %vm575, %v2615, %v2617
        %v2629 = vsel %vm575, %v2617, %v2619
        %v2630 = vsel %vm575, %v2619, %v2621
        %v2631 = vsel %vm575, %v2621, %v2623
        %2640 = vst [vmem:[#allocation4 + $0x140] sm:$0xff] %v2624
        %2641 = vst [vmem:[#allocation4 + $0x148] sm:$0xff] %v2625
        %2642 = vst [vmem:[#allocation4 + $0x150] sm:$0xff] %v2626
        %2643 = vst [vmem:[#allocation4 + $0x158] sm:$0xff] %v2627
        %2644 = vst [vmem:[#allocation4 + $0x160] sm:$0xff] %v2628
        %2645 = vst [vmem:[#allocation4 + $0x168] sm:$0xff] %v2629
        %2646 = vst [vmem:[#allocation4 + $0x170] sm:$0xff] %v2630
        %2647 = vst.msk [vmem:[#allocation4 + $0x178] sm:$0xff] %vm2232, %v2631
        %v2648 = vld [vmem:[#allocation2] sm:$0xff]
        %v2649 = vld [vmem:[#allocation2 + $0x8] sm:$0xff]
        %v2650 = vld [vmem:[#allocation2 + $0x10] sm:$0xff]
        %v2651 = vld [vmem:[#allocation2 + $0x18] sm:$0xff]
        %v2652 = vld [vmem:[#allocation2 + $0x20] sm:$0xff]
        %v2653 = vld [vmem:[#allocation2 + $0x28] sm:$0xff]
        %v2654 = vld [vmem:[#allocation2 + $0x30] sm:$0xff]
        %v2655 = vld [vmem:[#allocation2 + $0x38] sm:$0xff]
        %v2656 = vld [vmem:[#allocation2 + $0x40] sm:$0xff]
        %2666 = vrot.lane.b32.xlu0 %v2648, 91
        %v2667 = vpop.permute.xlu0 %2666
        %2668 = vrot.lane.b32.xlu0 %v2649, 91
        %v2669 = vpop.permute.xlu0 %2668
        %2670 = vrot.lane.b32.xlu0 %v2650, 91
        %v2671 = vpop.permute.xlu0 %2670
        %2672 = vrot.lane.b32.xlu0 %v2651, 91
        %v2673 = vpop.permute.xlu0 %2672
        %2674 = vrot.lane.b32.xlu0 %v2652, 91
        %v2675 = vpop.permute.xlu0 %2674
        %2676 = vrot.lane.b32.xlu0 %v2653, 91
        %v2677 = vpop.permute.xlu0 %2676
        %2678 = vrot.lane.b32.xlu0 %v2654, 91
        %v2679 = vpop.permute.xlu0 %2678
        %2680 = vrot.lane.b32.xlu0 %v2655, 91
        %v2681 = vpop.permute.xlu0 %2680
        %2682 = vrot.lane.b32.xlu0 %v2656, 91
        %v2683 = vpop.permute.xlu0 %2682
        %v2684 = vsel %vm632, %v2667, %v2669
        %v2685 = vsel %vm632, %v2669, %v2671
        %v2686 = vsel %vm632, %v2671, %v2673
        %v2687 = vsel %vm632, %v2673, %v2675
        %v2688 = vsel %vm632, %v2675, %v2677
        %v2689 = vsel %vm632, %v2677, %v2679
        %v2690 = vsel %vm632, %v2679, %v2681
        %v2691 = vsel %vm632, %v2681, %v2683
        %2700 = vst [vmem:[#allocation4 + $0x180] sm:$0xff] %v2684
        %2701 = vst [vmem:[#allocation4 + $0x188] sm:$0xff] %v2685
        %2702 = vst [vmem:[#allocation4 + $0x190] sm:$0xff] %v2686
        %2703 = vst [vmem:[#allocation4 + $0x198] sm:$0xff] %v2687
        %2704 = vst [vmem:[#allocation4 + $0x1a0] sm:$0xff] %v2688
        %2705 = vst [vmem:[#allocation4 + $0x1a8] sm:$0xff] %v2689
        %2706 = vst [vmem:[#allocation4 + $0x1b0] sm:$0xff] %v2690
        %2707 = vst.msk [vmem:[#allocation4 + $0x1b8] sm:$0xff] %vm2232, %v2691
        %v2708 = vld [vmem:[#allocation2] sm:$0xff]
        %v2709 = vld [vmem:[#allocation2 + $0x8] sm:$0xff]
        %v2710 = vld [vmem:[#allocation2 + $0x10] sm:$0xff]
        %v2711 = vld [vmem:[#allocation2 + $0x18] sm:$0xff]
        %v2712 = vld [vmem:[#allocation2 + $0x20] sm:$0xff]
        %v2713 = vld [vmem:[#allocation2 + $0x28] sm:$0xff]
        %v2714 = vld [vmem:[#allocation2 + $0x30] sm:$0xff]
        %v2715 = vld [vmem:[#allocation2 + $0x38] sm:$0xff]
        %v2716 = vld [vmem:[#allocation2 + $0x40] sm:$0xff]
        %2726 = vrot.lane.b32.xlu0 %v2708, 90
        %v2727 = vpop.permute.xlu0 %2726
        %2728 = vrot.lane.b32.xlu0 %v2709, 90
        %v2729 = vpop.permute.xlu0 %2728
        %2730 = vrot.lane.b32.xlu0 %v2710, 90
        %v2731 = vpop.permute.xlu0 %2730
        %2732 = vrot.lane.b32.xlu0 %v2711, 90
        %v2733 = vpop.permute.xlu0 %2732
        %2734 = vrot.lane.b32.xlu0 %v2712, 90
        %v2735 = vpop.permute.xlu0 %2734
        %2736 = vrot.lane.b32.xlu0 %v2713, 90
        %v2737 = vpop.permute.xlu0 %2736
        %2738 = vrot.lane.b32.xlu0 %v2714, 90
        %v2739 = vpop.permute.xlu0 %2738
        %2740 = vrot.lane.b32.xlu0 %v2715, 90
        %v2741 = vpop.permute.xlu0 %2740
        %2742 = vrot.lane.b32.xlu0 %v2716, 90
        %v2743 = vpop.permute.xlu0 %2742
        %v2744 = vsel %vm690, %v2727, %v2729
        %v2745 = vsel %vm690, %v2729, %v2731
        %v2746 = vsel %vm690, %v2731, %v2733
        %v2747 = vsel %vm690, %v2733, %v2735
        %v2748 = vsel %vm690, %v2735, %v2737
        %v2749 = vsel %vm690, %v2737, %v2739
        %v2750 = vsel %vm690, %v2739, %v2741
        %v2751 = vsel %vm690, %v2741, %v2743
        %2760 = vst [vmem:[#allocation4 + $0x1c0] sm:$0xff] %v2744
        %2761 = vst [vmem:[#allocation4 + $0x1c8] sm:$0xff] %v2745
        %2762 = vst [vmem:[#allocation4 + $0x1d0] sm:$0xff] %v2746
        %2763 = vst [vmem:[#allocation4 + $0x1d8] sm:$0xff] %v2747
        %2764 = vst [vmem:[#allocation4 + $0x1e0] sm:$0xff] %v2748
        %2765 = vst [vmem:[#allocation4 + $0x1e8] sm:$0xff] %v2749
        %2766 = vst [vmem:[#allocation4 + $0x1f0] sm:$0xff] %v2750
        %2767 = vst.msk [vmem:[#allocation4 + $0x1f8] sm:$0xff] %vm2232, %v2751
        %v2768 = vld [vmem:[#allocation2] sm:$0xff]
        %v2769 = vld [vmem:[#allocation2 + $0x8] sm:$0xff]
        %v2770 = vld [vmem:[#allocation2 + $0x10] sm:$0xff]
        %v2771 = vld [vmem:[#allocation2 + $0x18] sm:$0xff]
        %v2772 = vld [vmem:[#allocation2 + $0x20] sm:$0xff]
        %v2773 = vld [vmem:[#allocation2 + $0x28] sm:$0xff]
        %v2774 = vld [vmem:[#allocation2 + $0x30] sm:$0xff]
        %v2775 = vld [vmem:[#allocation2 + $0x38] sm:$0xff]
        %v2776 = vld [vmem:[#allocation2 + $0x40] sm:$0xff]
        %2786 = vrot.lane.b32.xlu0 %v2768, 89
        %v2787 = vpop.permute.xlu0 %2786
        %2788 = vrot.lane.b32.xlu0 %v2769, 89
        %v2789 = vpop.permute.xlu0 %2788
        %2790 = vrot.lane.b32.xlu0 %v2770, 89
        %v2791 = vpop.permute.xlu0 %2790
        %2792 = vrot.lane.b32.xlu0 %v2771, 89
        %v2793 = vpop.permute.xlu0 %2792
        %2794 = vrot.lane.b32.xlu0 %v2772, 89
        %v2795 = vpop.permute.xlu0 %2794
        %2796 = vrot.lane.b32.xlu0 %v2773, 89
        %v2797 = vpop.permute.xlu0 %2796
        %2798 = vrot.lane.b32.xlu0 %v2774, 89
        %v2799 = vpop.permute.xlu0 %2798
        %2800 = vrot.lane.b32.xlu0 %v2775, 89
        %v2801 = vpop.permute.xlu0 %2800
        %2802 = vrot.lane.b32.xlu0 %v2776, 89
        %v2803 = vpop.permute.xlu0 %2802
        %v2804 = vsel %vm747, %v2787, %v2789
        %v2805 = vsel %vm747, %v2789, %v2791
        %v2806 = vsel %vm747, %v2791, %v2793
        %v2807 = vsel %vm747, %v2793, %v2795
        %v2808 = vsel %vm747, %v2795, %v2797
        %v2809 = vsel %vm747, %v2797, %v2799
        %v2810 = vsel %vm747, %v2799, %v2801
        %v2811 = vsel %vm747, %v2801, %v2803
        %2820 = vst [vmem:[#allocation4 + $0x200] sm:$0xff] %v2804
        %2821 = vst [vmem:[#allocation4 + $0x208] sm:$0xff] %v2805
        %2822 = vst [vmem:[#allocation4 + $0x210] sm:$0xff] %v2806
        %2823 = vst [vmem:[#allocation4 + $0x218] sm:$0xff] %v2807
        %2824 = vst [vmem:[#allocation4 + $0x220] sm:$0xff] %v2808
        %2825 = vst [vmem:[#allocation4 + $0x228] sm:$0xff] %v2809
        %2826 = vst [vmem:[#allocation4 + $0x230] sm:$0xff] %v2810
        %2827 = vst.msk [vmem:[#allocation4 + $0x238] sm:$0xff] %vm2232, %v2811
        %v2828 = vld [vmem:[#allocation2] sm:$0xff]
        %v2829 = vld [vmem:[#allocation2 + $0x8] sm:$0xff]
        %v2830 = vld [vmem:[#allocation2 + $0x10] sm:$0xff]
        %v2831 = vld [vmem:[#allocation2 + $0x18] sm:$0xff]
        %v2832 = vld [vmem:[#allocation2 + $0x20] sm:$0xff]
        %v2833 = vld [vmem:[#allocation2 + $0x28] sm:$0xff]
        %v2834 = vld [vmem:[#allocation2 + $0x30] sm:$0xff]
        %v2835 = vld [vmem:[#allocation2 + $0x38] sm:$0xff]
        %v2836 = vld [vmem:[#allocation2 + $0x40] sm:$0xff]
        %2846 = vrot.lane.b32.xlu0 %v2828, 11
        %v2847 = vpop.permute.xlu0 %2846
        %2848 = vrot.lane.b32.xlu0 %v2829, 11
        %v2849 = vpop.permute.xlu0 %2848
        %2850 = vrot.lane.b32.xlu0 %v2830, 11
        %v2851 = vpop.permute.xlu0 %2850
        %2852 = vrot.lane.b32.xlu0 %v2831, 11
        %v2853 = vpop.permute.xlu0 %2852
        %2854 = vrot.lane.b32.xlu0 %v2832, 11
        %v2855 = vpop.permute.xlu0 %2854
        %2856 = vrot.lane.b32.xlu0 %v2833, 11
        %v2857 = vpop.permute.xlu0 %2856
        %2858 = vrot.lane.b32.xlu0 %v2834, 11
        %v2859 = vpop.permute.xlu0 %2858
        %2860 = vrot.lane.b32.xlu0 %v2835, 11
        %v2861 = vpop.permute.xlu0 %2860
        %2862 = vrot.lane.b32.xlu0 %v2836, 11
        %v2863 = vpop.permute.xlu0 %2862
        %v2864 = vsel %vm805, %v2847, %v2849
        %v2865 = vsel %vm805, %v2849, %v2851
        %v2866 = vsel %vm805, %v2851, %v2853
        %v2867 = vsel %vm805, %v2853, %v2855
        %v2868 = vsel %vm805, %v2855, %v2857
        %v2869 = vsel %vm805, %v2857, %v2859
        %v2870 = vsel %vm805, %v2859, %v2861
        %v2871 = vsel %vm805, %v2861, %v2863
        %2880 = vst [vmem:[#allocation4 + $0x240] sm:$0xff] %v2864
        %2881 = vst [vmem:[#allocation4 + $0x248] sm:$0xff] %v2865
        %2882 = vst [vmem:[#allocation4 + $0x250] sm:$0xff] %v2866
        %2883 = vst [vmem:[#allocation4 + $0x258] sm:$0xff] %v2867
        %2884 = vst [vmem:[#allocation4 + $0x260] sm:$0xff] %v2868
        %2885 = vst [vmem:[#allocation4 + $0x268] sm:$0xff] %v2869
        %2886 = vst [vmem:[#allocation4 + $0x270] sm:$0xff] %v2870
        %2887 = vst.msk [vmem:[#allocation4 + $0x278] sm:$0xff] %vm2232, %v2871
        %v2888 = vld [vmem:[#allocation2] sm:$0xff]
        %v2889 = vld [vmem:[#allocation2 + $0x8] sm:$0xff]
        %v2890 = vld [vmem:[#allocation2 + $0x10] sm:$0xff]
        %v2891 = vld [vmem:[#allocation2 + $0x18] sm:$0xff]
        %v2892 = vld [vmem:[#allocation2 + $0x20] sm:$0xff]
        %v2893 = vld [vmem:[#allocation2 + $0x28] sm:$0xff]
        %v2894 = vld [vmem:[#allocation2 + $0x30] sm:$0xff]
        %v2895 = vld [vmem:[#allocation2 + $0x38] sm:$0xff]
        %v2896 = vld [vmem:[#allocation2 + $0x40] sm:$0xff]
        %2906 = vrot.lane.b32.xlu0 %v2888, 10
        %v2907 = vpop.permute.xlu0 %2906
        %2908 = vrot.lane.b32.xlu0 %v2889, 10
        %v2909 = vpop.permute.xlu0 %2908
        %2910 = vrot.lane.b32.xlu0 %v2890, 10
        %v2911 = vpop.permute.xlu0 %2910
        %2912 = vrot.lane.b32.xlu0 %v2891, 10
        %v2913 = vpop.permute.xlu0 %2912
        %2914 = vrot.lane.b32.xlu0 %v2892, 10
        %v2915 = vpop.permute.xlu0 %2914
        %2916 = vrot.lane.b32.xlu0 %v2893, 10
        %v2917 = vpop.permute.xlu0 %2916
        %2918 = vrot.lane.b32.xlu0 %v2894, 10
        %v2919 = vpop.permute.xlu0 %2918
        %2920 = vrot.lane.b32.xlu0 %v2895, 10
        %v2921 = vpop.permute.xlu0 %2920
        %2922 = vrot.lane.b32.xlu0 %v2896, 10
        %v2923 = vpop.permute.xlu0 %2922
        %v2924 = vsel %vm862, %v2907, %v2909
        %v2925 = vsel %vm862, %v2909, %v2911
        %v2926 = vsel %vm862, %v2911, %v2913
        %v2927 = vsel %vm862, %v2913, %v2915
        %v2928 = vsel %vm862, %v2915, %v2917
        %v2929 = vsel %vm862, %v2917, %v2919
        %v2930 = vsel %vm862, %v2919, %v2921
        %v2931 = vsel %vm862, %v2921, %v2923
        %2940 = vst [vmem:[#allocation4 + $0x280] sm:$0xff] %v2924
        %2941 = vst [vmem:[#allocation4 + $0x288] sm:$0xff] %v2925
        %2942 = vst [vmem:[#allocation4 + $0x290] sm:$0xff] %v2926
        %2943 = vst [vmem:[#allocation4 + $0x298] sm:$0xff] %v2927
        %2944 = vst [vmem:[#allocation4 + $0x2a0] sm:$0xff] %v2928
        %2945 = vst [vmem:[#allocation4 + $0x2a8] sm:$0xff] %v2929
        %2946 = vst [vmem:[#allocation4 + $0x2b0] sm:$0xff] %v2930
        %2947 = vst.msk [vmem:[#allocation4 + $0x2b8] sm:$0xff] %vm2232, %v2931
        %v2948 = vld [vmem:[#allocation2] sm:$0xff]
        %v2949 = vld [vmem:[#allocation2 + $0x8] sm:$0xff]
        %v2950 = vld [vmem:[#allocation2 + $0x10] sm:$0xff]
        %v2951 = vld [vmem:[#allocation2 + $0x18] sm:$0xff]
        %v2952 = vld [vmem:[#allocation2 + $0x20] sm:$0xff]
        %v2953 = vld [vmem:[#allocation2 + $0x28] sm:$0xff]
        %v2954 = vld [vmem:[#allocation2 + $0x30] sm:$0xff]
        %v2955 = vld [vmem:[#allocation2 + $0x38] sm:$0xff]
        %v2956 = vld [vmem:[#allocation2 + $0x40] sm:$0xff]
        %2966 = vrot.lane.b32.xlu0 %v2948, 9
        %v2967 = vpop.permute.xlu0 %2966
        %2968 = vrot.lane.b32.xlu0 %v2949, 9
        %v2969 = vpop.permute.xlu0 %2968
        %2970 = vrot.lane.b32.xlu0 %v2950, 9
        %v2971 = vpop.permute.xlu0 %2970
        %2972 = vrot.lane.b32.xlu0 %v2951, 9
        %v2973 = vpop.permute.xlu0 %2972
        %2974 = vrot.lane.b32.xlu0 %v2952, 9
        %v2975 = vpop.permute.xlu0 %2974
        %2976 = vrot.lane.b32.xlu0 %v2953, 9
        %v2977 = vpop.permute.xlu0 %2976
        %2978 = vrot.lane.b32.xlu0 %v2954, 9
        %v2979 = vpop.permute.xlu0 %2978
        %2980 = vrot.lane.b32.xlu0 %v2955, 9
        %v2981 = vpop.permute.xlu0 %2980
        %2982 = vrot.lane.b32.xlu0 %v2956, 9
        %v2983 = vpop.permute.xlu0 %2982
        %v2984 = vsel %vm920, %v2967, %v2969
        %v2985 = vsel %vm920, %v2969, %v2971
        %v2986 = vsel %vm920, %v2971, %v2973
        %v2987 = vsel %vm920, %v2973, %v2975
        %v2988 = vsel %vm920, %v2975, %v2977
        %v2989 = vsel %vm920, %v2977, %v2979
        %v2990 = vsel %vm920, %v2979, %v2981
        %v2991 = vsel %vm920, %v2981, %v2983
        %3000 = vst [vmem:[#allocation4 + $0x2c0] sm:$0xff] %v2984
        %3001 = vst [vmem:[#allocation4 + $0x2c8] sm:$0xff] %v2985
        %3002 = vst [vmem:[#allocation4 + $0x2d0] sm:$0xff] %v2986
        %3003 = vst [vmem:[#allocation4 + $0x2d8] sm:$0xff] %v2987
        %3004 = vst [vmem:[#allocation4 + $0x2e0] sm:$0xff] %v2988
        %3005 = vst [vmem:[#allocation4 + $0x2e8] sm:$0xff] %v2989
        %3006 = vst [vmem:[#allocation4 + $0x2f0] sm:$0xff] %v2990
        %3007 = vst.msk [vmem:[#allocation4 + $0x2f8] sm:$0xff] %vm2232, %v2991
        %v3008 = vld [vmem:[#allocation2] sm:$0xff]
        %v3009 = vld [vmem:[#allocation2 + $0x8] sm:$0xff]
        %v3010 = vld [vmem:[#allocation2 + $0x10] sm:$0xff]
        %v3011 = vld [vmem:[#allocation2 + $0x18] sm:$0xff]
        %v3012 = vld [vmem:[#allocation2 + $0x20] sm:$0xff]
        %v3013 = vld [vmem:[#allocation2 + $0x28] sm:$0xff]
        %v3014 = vld [vmem:[#allocation2 + $0x30] sm:$0xff]
        %v3015 = vld [vmem:[#allocation2 + $0x38] sm:$0xff]
        %v3016 = vld [vmem:[#allocation2 + $0x40] sm:$0xff]
        %3026 = vrot.lane.b32.xlu0 %v3008, 1
        %v3027 = vpop.permute.xlu0 %3026
        %3028 = vrot.lane.b32.xlu0 %v3009, 1
        %v3029 = vpop.permute.xlu0 %3028
        %3030 = vrot.lane.b32.xlu0 %v3010, 1
        %v3031 = vpop.permute.xlu0 %3030
        %3032 = vrot.lane.b32.xlu0 %v3011, 1
        %v3033 = vpop.permute.xlu0 %3032
        %3034 = vrot.lane.b32.xlu0 %v3012, 1
        %v3035 = vpop.permute.xlu0 %3034
        %3036 = vrot.lane.b32.xlu0 %v3013, 1
        %v3037 = vpop.permute.xlu0 %3036
        %3038 = vrot.lane.b32.xlu0 %v3014, 1
        %v3039 = vpop.permute.xlu0 %3038
        %3040 = vrot.lane.b32.xlu0 %v3015, 1
        %v3041 = vpop.permute.xlu0 %3040
        %3042 = vrot.lane.b32.xlu0 %v3016, 1
        %v3043 = vpop.permute.xlu0 %3042
        %v3044 = vsel %vm977, %v3027, %v3029
        %v3045 = vsel %vm977, %v3029, %v3031
        %v3046 = vsel %vm977, %v3031, %v3033
        %v3047 = vsel %vm977, %v3033, %v3035
        %v3048 = vsel %vm977, %v3035, %v3037
        %v3049 = vsel %vm977, %v3037, %v3039
        %v3050 = vsel %vm977, %v3039, %v3041
        %v3051 = vsel %vm977, %v3041, %v3043
        %3060 = vst [vmem:[#allocation4 + $0x300] sm:$0xff] %v3044
        %3061 = vst [vmem:[#allocation4 + $0x308] sm:$0xff] %v3045
        %3062 = vst [vmem:[#allocation4 + $0x310] sm:$0xff] %v3046
        %3063 = vst [vmem:[#allocation4 + $0x318] sm:$0xff] %v3047
        %3064 = vst [vmem:[#allocation4 + $0x320] sm:$0xff] %v3048
        %3065 = vst [vmem:[#allocation4 + $0x328] sm:$0xff] %v3049
        %3066 = vst [vmem:[#allocation4 + $0x330] sm:$0xff] %v3050
        %3067 = vst.msk [vmem:[#allocation4 + $0x338] sm:$0xff] %vm2232, %v3051
        %v3068 = vld [vmem:[#allocation2 + $0x8] sm:$0xff]
        %v3069 = vld [vmem:[#allocation2 + $0x10] sm:$0xff]
        %v3070 = vld [vmem:[#allocation2 + $0x18] sm:$0xff]
        %v3071 = vld [vmem:[#allocation2 + $0x20] sm:$0xff]
        %v3072 = vld [vmem:[#allocation2 + $0x28] sm:$0xff]
        %v3073 = vld [vmem:[#allocation2 + $0x30] sm:$0xff]
        %v3074 = vld [vmem:[#allocation2 + $0x38] sm:$0xff]
        %v3075 = vld [vmem:[#allocation2 + $0x40] sm:$0xff]
        %3076 = vst [vmem:[#allocation4 + $0x340] sm:$0xff] %v3068
        %3077 = vst [vmem:[#allocation4 + $0x348] sm:$0xff] %v3069
        %3078 = vst [vmem:[#allocation4 + $0x350] sm:$0xff] %v3070
        %3079 = vst [vmem:[#allocation4 + $0x358] sm:$0xff] %v3071
        %3080 = vst [vmem:[#allocation4 + $0x360] sm:$0xff] %v3072
        %3081 = vst [vmem:[#allocation4 + $0x368] sm:$0xff] %v3073
        %3082 = vst [vmem:[#allocation4 + $0x370] sm:$0xff] %v3074
        %3083 = vst.msk [vmem:[#allocation4 + $0x378] sm:$0xff] %vm2232, %v3075
        %v3084 = vld [vmem:[#allocation2 + $0x8] sm:$0xff]
        %v3085 = vld [vmem:[#allocation2 + $0x10] sm:$0xff]
        %v3086 = vld [vmem:[#allocation2 + $0x18] sm:$0xff]
        %v3087 = vld [vmem:[#allocation2 + $0x20] sm:$0xff]
        %v3088 = vld [vmem:[#allocation2 + $0x28] sm:$0xff]
        %v3089 = vld [vmem:[#allocation2 + $0x30] sm:$0xff]
        %v3090 = vld [vmem:[#allocation2 + $0x38] sm:$0xff]
        %v3091 = vld [vmem:[#allocation2 + $0x40] sm:$0xff]
        %3100 = vrot.lane.b32.xlu0 %v3084, 127
        %v3101 = vpop.permute.xlu0 %3100
        %3102 = vrot.lane.b32.xlu0 %v3085, 127
        %v3103 = vpop.permute.xlu0 %3102
        %3104 = vrot.lane.b32.xlu0 %v3086, 127
        %v3105 = vpop.permute.xlu0 %3104
        %3106 = vrot.lane.b32.xlu0 %v3087, 127
        %v3107 = vpop.permute.xlu0 %3106
        %3108 = vrot.lane.b32.xlu0 %v3088, 127
        %v3109 = vpop.permute.xlu0 %3108
        %3110 = vrot.lane.b32.xlu0 %v3089, 127
        %v3111 = vpop.permute.xlu0 %3110
        %3112 = vrot.lane.b32.xlu0 %v3090, 127
        %v3113 = vpop.permute.xlu0 %3112
        %3114 = vrot.lane.b32.xlu0 %v3091, 127
        %v3115 = vpop.permute.xlu0 %3114
        %v3116 = vsel %vm1054, %v3101, %v3103
        %v3117 = vsel %vm1054, %v3103, %v3105
        %v3118 = vsel %vm1054, %v3105, %v3107
        %v3119 = vsel %vm1054, %v3107, %v3109
        %v3120 = vsel %vm1054, %v3109, %v3111
        %v3121 = vsel %vm1054, %v3111, %v3113
        %v3122 = vsel %vm1054, %v3113, %v3115
        %3131 = vst [vmem:[#allocation4 + $0x380] sm:$0xff] %v3116
        %3132 = vst [vmem:[#allocation4 + $0x388] sm:$0xff] %v3117
        %3133 = vst [vmem:[#allocation4 + $0x390] sm:$0xff] %v3118
        %3134 = vst [vmem:[#allocation4 + $0x398] sm:$0xff] %v3119
        %3135 = vst [vmem:[#allocation4 + $0x3a0] sm:$0xff] %v3120
        %3136 = vst [vmem:[#allocation4 + $0x3a8] sm:$0xff] %v3121
        %3137 = vst [vmem:[#allocation4 + $0x3b0] sm:$0xff] %v3122
        %3138 = vst.msk [vmem:[#allocation4 + $0x3b8] sm:$0xff] %vm2232, %v3115
        %v3139 = vld [vmem:[#allocation2 + $0x8] sm:$0xff]
        %v3140 = vld [vmem:[#allocation2 + $0x10] sm:$0xff]
        %v3141 = vld [vmem:[#allocation2 + $0x18] sm:$0xff]
        %v3142 = vld [vmem:[#allocation2 + $0x20] sm:$0xff]
        %v3143 = vld [vmem:[#allocation2 + $0x28] sm:$0xff]
        %v3144 = vld [vmem:[#allocation2 + $0x30] sm:$0xff]
        %v3145 = vld [vmem:[#allocation2 + $0x38] sm:$0xff]
        %v3146 = vld [vmem:[#allocation2 + $0x40] sm:$0xff]
        %3155 = vrot.lane.b32.xlu0 %v3139, 119
        %v3156 = vpop.permute.xlu0 %3155
        %3157 = vrot.lane.b32.xlu0 %v3140, 119
        %v3158 = vpop.permute.xlu0 %3157
        %3159 = vrot.lane.b32.xlu0 %v3141, 119
        %v3160 = vpop.permute.xlu0 %3159
        %3161 = vrot.lane.b32.xlu0 %v3142, 119
        %v3162 = vpop.permute.xlu0 %3161
        %3163 = vrot.lane.b32.xlu0 %v3143, 119
        %v3164 = vpop.permute.xlu0 %3163
        %3165 = vrot.lane.b32.xlu0 %v3144, 119
        %v3166 = vpop.permute.xlu0 %3165
        %3167 = vrot.lane.b32.xlu0 %v3145, 119
        %v3168 = vpop.permute.xlu0 %3167
        %3169 = vrot.lane.b32.xlu0 %v3146, 119
        %v3170 = vpop.permute.xlu0 %3169
        %v3171 = vsel %vm1106, %v3156, %v3158
        %v3172 = vsel %vm1106, %v3158, %v3160
        %v3173 = vsel %vm1106, %v3160, %v3162
        %v3174 = vsel %vm1106, %v3162, %v3164
        %v3175 = vsel %vm1106, %v3164, %v3166
        %v3176 = vsel %vm1106, %v3166, %v3168
        %v3177 = vsel %vm1106, %v3168, %v3170
        %3186 = vst [vmem:[#allocation4 + $0x3c0] sm:$0xff] %v3171
        %3187 = vst [vmem:[#allocation4 + $0x3c8] sm:$0xff] %v3172
        %3188 = vst [vmem:[#allocation4 + $0x3d0] sm:$0xff] %v3173
        %3189 = vst [vmem:[#allocation4 + $0x3d8] sm:$0xff] %v3174
        %3190 = vst [vmem:[#allocation4 + $0x3e0] sm:$0xff] %v3175
        %3191 = vst [vmem:[#allocation4 + $0x3e8] sm:$0xff] %v3176
        %3192 = vst [vmem:[#allocation4 + $0x3f0] sm:$0xff] %v3177
        %3193 = vst.msk [vmem:[#allocation4 + $0x3f8] sm:$0xff] %vm2232, %v3170
        %v3194 = vld [vmem:[#allocation2 + $0x8] sm:$0xff]
        %v3195 = vld [vmem:[#allocation2 + $0x10] sm:$0xff]
        %v3196 = vld [vmem:[#allocation2 + $0x18] sm:$0xff]
        %v3197 = vld [vmem:[#allocation2 + $0x20] sm:$0xff]
        %v3198 = vld [vmem:[#allocation2 + $0x28] sm:$0xff]
        %v3199 = vld [vmem:[#allocation2 + $0x30] sm:$0xff]
        %v3200 = vld [vmem:[#allocation2 + $0x38] sm:$0xff]
        %v3201 = vld [vmem:[#allocation2 + $0x40] sm:$0xff]
        %3210 = vrot.lane.b32.xlu0 %v3194, 118
        %v3211 = vpop.permute.xlu0 %3210
        %3212 = vrot.lane.b32.xlu0 %v3195, 118
        %v3213 = vpop.permute.xlu0 %3212
        %3214 = vrot.lane.b32.xlu0 %v3196, 118
        %v3215 = vpop.permute.xlu0 %3214
        %3216 = vrot.lane.b32.xlu0 %v3197, 118
        %v3217 = vpop.permute.xlu0 %3216
        %3218 = vrot.lane.b32.xlu0 %v3198, 118
        %v3219 = vpop.permute.xlu0 %3218
        %3220 = vrot.lane.b32.xlu0 %v3199, 118
        %v3221 = vpop.permute.xlu0 %3220
        %3222 = vrot.lane.b32.xlu0 %v3200, 118
        %v3223 = vpop.permute.xlu0 %3222
        %3224 = vrot.lane.b32.xlu0 %v3201, 118
        %v3225 = vpop.permute.xlu0 %3224
        %v3226 = vsel %vm1158, %v3211, %v3213
        %v3227 = vsel %vm1158, %v3213, %v3215
        %v3228 = vsel %vm1158, %v3215, %v3217
        %v3229 = vsel %vm1158, %v3217, %v3219
        %v3230 = vsel %vm1158, %v3219, %v3221
        %v3231 = vsel %vm1158, %v3221, %v3223
        %v3232 = vsel %vm1158, %v3223, %v3225
        %3241 = vst [vmem:[#allocation4 + $0x400] sm:$0xff] %v3226
        %3242 = vst [vmem:[#allocation4 + $0x408] sm:$0xff] %v3227
        %3243 = vst [vmem:[#allocation4 + $0x410] sm:$0xff] %v3228
        %3244 = vst [vmem:[#allocation4 + $0x418] sm:$0xff] %v3229
        %3245 = vst [vmem:[#allocation4 + $0x420] sm:$0xff] %v3230
        %3246 = vst [vmem:[#allocation4 + $0x428] sm:$0xff] %v3231
        %3247 = vst [vmem:[#allocation4 + $0x430] sm:$0xff] %v3232
        %3248 = vst.msk [vmem:[#allocation4 + $0x438] sm:$0xff] %vm2232, %v3225
        %v3249 = vld [vmem:[#allocation2 + $0x8] sm:$0xff]
        %v3250 = vld [vmem:[#allocation2 + $0x10] sm:$0xff]
        %v3251 = vld [vmem:[#allocation2 + $0x18] sm:$0xff]
        %v3252 = vld [vmem:[#allocation2 + $0x20] sm:$0xff]
        %v3253 = vld [vmem:[#allocation2 + $0x28] sm:$0xff]
        %v3254 = vld [vmem:[#allocation2 + $0x30] sm:$0xff]
        %v3255 = vld [vmem:[#allocation2 + $0x38] sm:$0xff]
        %v3256 = vld [vmem:[#allocation2 + $0x40] sm:$0xff]
        %3265 = vrot.lane.b32.xlu0 %v3249, 117
        %v3266 = vpop.permute.xlu0 %3265
        %3267 = vrot.lane.b32.xlu0 %v3250, 117
        %v3268 = vpop.permute.xlu0 %3267
        %3269 = vrot.lane.b32.xlu0 %v3251, 117
        %v3270 = vpop.permute.xlu0 %3269
        %3271 = vrot.lane.b32.xlu0 %v3252, 117
        %v3272 = vpop.permute.xlu0 %3271
        %3273 = vrot.lane.b32.xlu0 %v3253, 117
        %v3274 = vpop.permute.xlu0 %3273
        %3275 = vrot.lane.b32.xlu0 %v3254, 117
        %v3276 = vpop.permute.xlu0 %3275
        %3277 = vrot.lane.b32.xlu0 %v3255, 117
        %v3278 = vpop.permute.xlu0 %3277
        %3279 = vrot.lane.b32.xlu0 %v3256, 117
        %v3280 = vpop.permute.xlu0 %3279
        %v3281 = vsel %vm1210, %v3266, %v3268
        %v3282 = vsel %vm1210, %v3268, %v3270
        %v3283 = vsel %vm1210, %v3270, %v3272
        %v3284 = vsel %vm1210, %v3272, %v3274
        %v3285 = vsel %vm1210, %v3274, %v3276
        %v3286 = vsel %vm1210, %v3276, %v3278
        %v3287 = vsel %vm1210, %v3278, %v3280
        %3296 = vst [vmem:[#allocation4 + $0x440] sm:$0xff] %v3281
        %3297 = vst [vmem:[#allocation4 + $0x448] sm:$0xff] %v3282
        %3298 = vst [vmem:[#allocation4 + $0x450] sm:$0xff] %v3283
        %3299 = vst [vmem:[#allocation4 + $0x458] sm:$0xff] %v3284
        %3300 = vst [vmem:[#allocation4 + $0x460] sm:$0xff] %v3285
        %3301 = vst [vmem:[#allocation4 + $0x468] sm:$0xff] %v3286
        %3302 = vst [vmem:[#allocation4 + $0x470] sm:$0xff] %v3287
        %3303 = vst.msk [vmem:[#allocation4 + $0x478] sm:$0xff] %vm2232, %v3280
        %v3304 = vld [vmem:[#allocation2 + $0x8] sm:$0xff]
        %v3305 = vld [vmem:[#allocation2 + $0x10] sm:$0xff]
        %v3306 = vld [vmem:[#allocation2 + $0x18] sm:$0xff]
        %v3307 = vld [vmem:[#allocation2 + $0x20] sm:$0xff]
        %v3308 = vld [vmem:[#allocation2 + $0x28] sm:$0xff]
        %v3309 = vld [vmem:[#allocation2 + $0x30] sm:$0xff]
        %v3310 = vld [vmem:[#allocation2 + $0x38] sm:$0xff]
        %v3311 = vld [vmem:[#allocation2 + $0x40] sm:$0xff]
        %v3312 = vld [vmem:[#allocation2 + $0x48] sm:$0xff]
        %3322 = vrot.lane.b32.xlu0 %v3304, 39
        %v3323 = vpop.permute.xlu0 %3322
        %3324 = vrot.lane.b32.xlu0 %v3305, 39
        %v3325 = vpop.permute.xlu0 %3324
        %3326 = vrot.lane.b32.xlu0 %v3306, 39
        %v3327 = vpop.permute.xlu0 %3326
        %3328 = vrot.lane.b32.xlu0 %v3307, 39
        %v3329 = vpop.permute.xlu0 %3328
        %3330 = vrot.lane.b32.xlu0 %v3308, 39
        %v3331 = vpop.permute.xlu0 %3330
        %3332 = vrot.lane.b32.xlu0 %v3309, 39
        %v3333 = vpop.permute.xlu0 %3332
        %3334 = vrot.lane.b32.xlu0 %v3310, 39
        %v3335 = vpop.permute.xlu0 %3334
        %3336 = vrot.lane.b32.xlu0 %v3311, 39
        %v3337 = vpop.permute.xlu0 %3336
        %3338 = vrot.lane.b32.xlu0 %v3312, 39
        %v3339 = vpop.permute.xlu0 %3338
        %v3340 = vsel %vm1266, %v3323, %v3325
        %v3341 = vsel %vm1266, %v3325, %v3327
        %v3342 = vsel %vm1266, %v3327, %v3329
        %v3343 = vsel %vm1266, %v3329, %v3331
        %v3344 = vsel %vm1266, %v3331, %v3333
        %v3345 = vsel %vm1266, %v3333, %v3335
        %v3346 = vsel %vm1266, %v3335, %v3337
        %v3347 = vsel %vm1266, %v3337, %v3339
        %3356 = vst [vmem:[#allocation4 + $0x480] sm:$0xff] %v3340
        %3357 = vst [vmem:[#allocation4 + $0x488] sm:$0xff] %v3341
        %3358 = vst [vmem:[#allocation4 + $0x490] sm:$0xff] %v3342
        %3359 = vst [vmem:[#allocation4 + $0x498] sm:$0xff] %v3343
        %3360 = vst [vmem:[#allocation4 + $0x4a0] sm:$0xff] %v3344
        %3361 = vst [vmem:[#allocation4 + $0x4a8] sm:$0xff] %v3345
        %3362 = vst [vmem:[#allocation4 + $0x4b0] sm:$0xff] %v3346
        %3363 = vst.msk [vmem:[#allocation4 + $0x4b8] sm:$0xff] %vm2232, %v3347
        %v3364 = vld [vmem:[#allocation2 + $0x8] sm:$0xff]
        %v3365 = vld [vmem:[#allocation2 + $0x10] sm:$0xff]
        %v3366 = vld [vmem:[#allocation2 + $0x18] sm:$0xff]
        %v3367 = vld [vmem:[#allocation2 + $0x20] sm:$0xff]
        %v3368 = vld [vmem:[#allocation2 + $0x28] sm:$0xff]
        %v3369 = vld [vmem:[#allocation2 + $0x30] sm:$0xff]
        %v3370 = vld [vmem:[#allocation2 + $0x38] sm:$0xff]
        %v3371 = vld [vmem:[#allocation2 + $0x40] sm:$0xff]
        %v3372 = vld [vmem:[#allocation2 + $0x48] sm:$0xff]
        %3382 = vrot.lane.b32.xlu0 %v3364, 38
        %v3383 = vpop.permute.xlu0 %3382
        %3384 = vrot.lane.b32.xlu0 %v3365, 38
        %v3385 = vpop.permute.xlu0 %3384
        %3386 = vrot.lane.b32.xlu0 %v3366, 38
        %v3387 = vpop.permute.xlu0 %3386
        %3388 = vrot.lane.b32.xlu0 %v3367, 38
        %v3389 = vpop.permute.xlu0 %3388
        %3390 = vrot.lane.b32.xlu0 %v3368, 38
        %v3391 = vpop.permute.xlu0 %3390
        %3392 = vrot.lane.b32.xlu0 %v3369, 38
        %v3393 = vpop.permute.xlu0 %3392
        %3394 = vrot.lane.b32.xlu0 %v3370, 38
        %v3395 = vpop.permute.xlu0 %3394
        %3396 = vrot.lane.b32.xlu0 %v3371, 38
        %v3397 = vpop.permute.xlu0 %3396
        %3398 = vrot.lane.b32.xlu0 %v3372, 38
        %v3399 = vpop.permute.xlu0 %3398
        %v3400 = vsel %vm1324, %v3383, %v3385
        %v3401 = vsel %vm1324, %v3385, %v3387
        %v3402 = vsel %vm1324, %v3387, %v3389
        %v3403 = vsel %vm1324, %v3389, %v3391
        %v3404 = vsel %vm1324, %v3391, %v3393
        %v3405 = vsel %vm1324, %v3393, %v3395
        %v3406 = vsel %vm1324, %v3395, %v3397
        %v3407 = vsel %vm1324, %v3397, %v3399
        %3416 = vst [vmem:[#allocation4 + $0x4c0] sm:$0xff] %v3400
        %3417 = vst [vmem:[#allocation4 + $0x4c8] sm:$0xff] %v3401
        %3418 = vst [vmem:[#allocation4 + $0x4d0] sm:$0xff] %v3402
        %3419 = vst [vmem:[#allocation4 + $0x4d8] sm:$0xff] %v3403
        %3420 = vst [vmem:[#allocation4 + $0x4e0] sm:$0xff] %v3404
        %3421 = vst [vmem:[#allocation4 + $0x4e8] sm:$0xff] %v3405
        %3422 = vst [vmem:[#allocation4 + $0x4f0] sm:$0xff] %v3406
        %3423 = vst.msk [vmem:[#allocation4 + $0x4f8] sm:$0xff] %vm2232, %v3407
        %v3424 = vld [vmem:[#allocation2 + $0x8] sm:$0xff]
        %v3425 = vld [vmem:[#allocation2 + $0x10] sm:$0xff]
        %v3426 = vld [vmem:[#allocation2 + $0x18] sm:$0xff]
        %v3427 = vld [vmem:[#allocation2 + $0x20] sm:$0xff]
        %v3428 = vld [vmem:[#allocation2 + $0x28] sm:$0xff]
        %v3429 = vld [vmem:[#allocation2 + $0x30] sm:$0xff]
        %v3430 = vld [vmem:[#allocation2 + $0x38] sm:$0xff]
        %v3431 = vld [vmem:[#allocation2 + $0x40] sm:$0xff]
        %v3432 = vld [vmem:[#allocation2 + $0x48] sm:$0xff]
        %3442 = vrot.lane.b32.xlu0 %v3424, 37
        %v3443 = vpop.permute.xlu0 %3442
        %3444 = vrot.lane.b32.xlu0 %v3425, 37
        %v3445 = vpop.permute.xlu0 %3444
        %3446 = vrot.lane.b32.xlu0 %v3426, 37
        %v3447 = vpop.permute.xlu0 %3446
        %3448 = vrot.lane.b32.xlu0 %v3427, 37
        %v3449 = vpop.permute.xlu0 %3448
        %3450 = vrot.lane.b32.xlu0 %v3428, 37
        %v3451 = vpop.permute.xlu0 %3450
        %3452 = vrot.lane.b32.xlu0 %v3429, 37
        %v3453 = vpop.permute.xlu0 %3452
        %3454 = vrot.lane.b32.xlu0 %v3430, 37
        %v3455 = vpop.permute.xlu0 %3454
        %3456 = vrot.lane.b32.xlu0 %v3431, 37
        %v3457 = vpop.permute.xlu0 %3456
        %3458 = vrot.lane.b32.xlu0 %v3432, 37
        %v3459 = vpop.permute.xlu0 %3458
        %v3460 = vsel %vm1381, %v3443, %v3445
        %v3461 = vsel %vm1381, %v3445, %v3447
        %v3462 = vsel %vm1381, %v3447, %v3449
        %v3463 = vsel %vm1381, %v3449, %v3451
        %v3464 = vsel %vm1381, %v3451, %v3453
        %v3465 = vsel %vm1381, %v3453, %v3455
        %v3466 = vsel %vm1381, %v3455, %v3457
        %v3467 = vsel %vm1381, %v3457, %v3459
        %3476 = vst [vmem:[#allocation4 + $0x500] sm:$0xff] %v3460
        %3477 = vst [vmem:[#allocation4 + $0x508] sm:$0xff] %v3461
        %3478 = vst [vmem:[#allocation4 + $0x510] sm:$0xff] %v3462
        %3479 = vst [vmem:[#allocation4 + $0x518] sm:$0xff] %v3463
        %3480 = vst [vmem:[#allocation4 + $0x520] sm:$0xff] %v3464
        %3481 = vst [vmem:[#allocation4 + $0x528] sm:$0xff] %v3465
        %3482 = vst [vmem:[#allocation4 + $0x530] sm:$0xff] %v3466
        %3483 = vst.msk [vmem:[#allocation4 + $0x538] sm:$0xff] %vm2232, %v3467
        %v3484 = vld [vmem:[#allocation2 + $0x8] sm:$0xff]
        %v3485 = vld [vmem:[#allocation2 + $0x10] sm:$0xff]
        %v3486 = vld [vmem:[#allocation2 + $0x18] sm:$0xff]
        %v3487 = vld [vmem:[#allocation2 + $0x20] sm:$0xff]
        %v3488 = vld [vmem:[#allocation2 + $0x28] sm:$0xff]
        %v3489 = vld [vmem:[#allocation2 + $0x30] sm:$0xff]
        %v3490 = vld [vmem:[#allocation2 + $0x38] sm:$0xff]
        %v3491 = vld [vmem:[#allocation2 + $0x40] sm:$0xff]
        %v3492 = vld [vmem:[#allocation2 + $0x48] sm:$0xff]
        %3502 = vrot.lane.b32.xlu0 %v3484, 29
        %v3503 = vpop.permute.xlu0 %3502
        %3504 = vrot.lane.b32.xlu0 %v3485, 29
        %v3505 = vpop.permute.xlu0 %3504
        %3506 = vrot.lane.b32.xlu0 %v3486, 29
        %v3507 = vpop.permute.xlu0 %3506
        %3508 = vrot.lane.b32.xlu0 %v3487, 29
        %v3509 = vpop.permute.xlu0 %3508
        %3510 = vrot.lane.b32.xlu0 %v3488, 29
        %v3511 = vpop.permute.xlu0 %3510
        %3512 = vrot.lane.b32.xlu0 %v3489, 29
        %v3513 = vpop.permute.xlu0 %3512
        %3514 = vrot.lane.b32.xlu0 %v3490, 29
        %v3515 = vpop.permute.xlu0 %3514
        %3516 = vrot.lane.b32.xlu0 %v3491, 29
        %v3517 = vpop.permute.xlu0 %3516
        %3518 = vrot.lane.b32.xlu0 %v3492, 29
        %v3519 = vpop.permute.xlu0 %3518
        %v3520 = vsel %vm1439, %v3503, %v3505
        %v3521 = vsel %vm1439, %v3505, %v3507
        %v3522 = vsel %vm1439, %v3507, %v3509
        %v3523 = vsel %vm1439, %v3509, %v3511
        %v3524 = vsel %vm1439, %v3511, %v3513
        %v3525 = vsel %vm1439, %v3513, %v3515
        %v3526 = vsel %vm1439, %v3515, %v3517
        %v3527 = vsel %vm1439, %v3517, %v3519
        %3536 = vst [vmem:[#allocation4 + $0x540] sm:$0xff] %v3520
        %3537 = vst [vmem:[#allocation4 + $0x548] sm:$0xff] %v3521
        %3538 = vst [vmem:[#allocation4 + $0x550] sm:$0xff] %v3522
        %3539 = vst [vmem:[#allocation4 + $0x558] sm:$0xff] %v3523
        %3540 = vst [vmem:[#allocation4 + $0x560] sm:$0xff] %v3524
        %3541 = vst [vmem:[#allocation4 + $0x568] sm:$0xff] %v3525
        %3542 = vst [vmem:[#allocation4 + $0x570] sm:$0xff] %v3526
        %3543 = vst.msk [vmem:[#allocation4 + $0x578] sm:$0xff] %vm2232, %v3527
        %v3544 = vld [vmem:[#allocation2 + $0x8] sm:$0xff]
        %v3545 = vld [vmem:[#allocation2 + $0x10] sm:$0xff]
        %v3546 = vld [vmem:[#allocation2 + $0x18] sm:$0xff]
        %v3547 = vld [vmem:[#allocation2 + $0x20] sm:$0xff]
        %v3548 = vld [vmem:[#allocation2 + $0x28] sm:$0xff]
        %v3549 = vld [vmem:[#allocation2 + $0x30] sm:$0xff]
        %v3550 = vld [vmem:[#allocation2 + $0x38] sm:$0xff]
        %v3551 = vld [vmem:[#allocation2 + $0x40] sm:$0xff]
        %v3552 = vld [vmem:[#allocation2 + $0x48] sm:$0xff]
        %3562 = vrot.lane.b32.xlu0 %v3544, 28
        %v3563 = vpop.permute.xlu0 %3562
        %3564 = vrot.lane.b32.xlu0 %v3545, 28
        %v3565 = vpop.permute.xlu0 %3564
        %3566 = vrot.lane.b32.xlu0 %v3546, 28
        %v3567 = vpop.permute.xlu0 %3566
        %3568 = vrot.lane.b32.xlu0 %v3547, 28
        %v3569 = vpop.permute.xlu0 %3568
        %3570 = vrot.lane.b32.xlu0 %v3548, 28
        %v3571 = vpop.permute.xlu0 %3570
        %3572 = vrot.lane.b32.xlu0 %v3549, 28
        %v3573 = vpop.permute.xlu0 %3572
        %3574 = vrot.lane.b32.xlu0 %v3550, 28
        %v3575 = vpop.permute.xlu0 %3574
        %3576 = vrot.lane.b32.xlu0 %v3551, 28
        %v3577 = vpop.permute.xlu0 %3576
        %3578 = vrot.lane.b32.xlu0 %v3552, 28
        %v3579 = vpop.permute.xlu0 %3578
        %v3580 = vsel %vm1496, %v3563, %v3565
        %v3581 = vsel %vm1496, %v3565, %v3567
        %v3582 = vsel %vm1496, %v3567, %v3569
        %v3583 = vsel %vm1496, %v3569, %v3571
        %v3584 = vsel %vm1496, %v3571, %v3573
        %v3585 = vsel %vm1496, %v3573, %v3575
        %v3586 = vsel %vm1496, %v3575, %v3577
        %v3587 = vsel %vm1496, %v3577, %v3579
        %3596 = vst [vmem:[#allocation4 + $0x580] sm:$0xff] %v3580
        %3597 = vst [vmem:[#allocation4 + $0x588] sm:$0xff] %v3581
        %3598 = vst [vmem:[#allocation4 + $0x590] sm:$0xff] %v3582
        %3599 = vst [vmem:[#allocation4 + $0x598] sm:$0xff] %v3583
        %3600 = vst [vmem:[#allocation4 + $0x5a0] sm:$0xff] %v3584
        %3601 = vst [vmem:[#allocation4 + $0x5a8] sm:$0xff] %v3585
        %3602 = vst [vmem:[#allocation4 + $0x5b0] sm:$0xff] %v3586
        %3603 = vst.msk [vmem:[#allocation4 + $0x5b8] sm:$0xff] %vm2232, %v3587
        %v3604 = vld [vmem:[#allocation2 + $0x8] sm:$0xff]
        %v3605 = vld [vmem:[#allocation2 + $0x10] sm:$0xff]
        %v3606 = vld [vmem:[#allocation2 + $0x18] sm:$0xff]
        %v3607 = vld [vmem:[#allocation2 + $0x20] sm:$0xff]
        %v3608 = vld [vmem:[#allocation2 + $0x28] sm:$0xff]
        %v3609 = vld [vmem:[#allocation2 + $0x30] sm:$0xff]
        %v3610 = vld [vmem:[#allocation2 + $0x38] sm:$0xff]
        %v3611 = vld [vmem:[#allocation2 + $0x40] sm:$0xff]
        %v3612 = vld [vmem:[#allocation2 + $0x48] sm:$0xff]
        %3622 = vrot.lane.b32.xlu0 %v3604, 27
        %v3623 = vpop.permute.xlu0 %3622
        %3624 = vrot.lane.b32.xlu0 %v3605, 27
        %v3625 = vpop.permute.xlu0 %3624
        %3626 = vrot.lane.b32.xlu0 %v3606, 27
        %v3627 = vpop.permute.xlu0 %3626
        %3628 = vrot.lane.b32.xlu0 %v3607, 27
        %v3629 = vpop.permute.xlu0 %3628
        %3630 = vrot.lane.b32.xlu0 %v3608, 27
        %v3631 = vpop.permute.xlu0 %3630
        %3632 = vrot.lane.b32.xlu0 %v3609, 27
        %v3633 = vpop.permute.xlu0 %3632
        %3634 = vrot.lane.b32.xlu0 %v3610, 27
        %v3635 = vpop.permute.xlu0 %3634
        %3636 = vrot.lane.b32.xlu0 %v3611, 27
        %v3637 = vpop.permute.xlu0 %3636
        %3638 = vrot.lane.b32.xlu0 %v3612, 27
        %v3639 = vpop.permute.xlu0 %3638
        %v3640 = vsel %vm1554, %v3623, %v3625
        %v3641 = vsel %vm1554, %v3625, %v3627
        %v3642 = vsel %vm1554, %v3627, %v3629
        %v3643 = vsel %vm1554, %v3629, %v3631
        %v3644 = vsel %vm1554, %v3631, %v3633
        %v3645 = vsel %vm1554, %v3633, %v3635
        %v3646 = vsel %vm1554, %v3635, %v3637
        %v3647 = vsel %vm1554, %v3637, %v3639
        %3656 = vst [vmem:[#allocation4 + $0x5c0] sm:$0xff] %v3640
        %3657 = vst [vmem:[#allocation4 + $0x5c8] sm:$0xff] %v3641
        %3658 = vst [vmem:[#allocation4 + $0x5d0] sm:$0xff] %v3642
        %3659 = vst [vmem:[#allocation4 + $0x5d8] sm:$0xff] %v3643
        %3660 = vst [vmem:[#allocation4 + $0x5e0] sm:$0xff] %v3644
        %3661 = vst [vmem:[#allocation4 + $0x5e8] sm:$0xff] %v3645
        %3662 = vst [vmem:[#allocation4 + $0x5f0] sm:$0xff] %v3646
        %3663 = vst.msk [vmem:[#allocation4 + $0x5f8] sm:$0xff] %vm2232, %v3647
        %v3664 = vld [vmem:[#allocation2 + $0x8] sm:$0xff]
        %v3665 = vld [vmem:[#allocation2 + $0x10] sm:$0xff]
        %v3666 = vld [vmem:[#allocation2 + $0x18] sm:$0xff]
        %v3667 = vld [vmem:[#allocation2 + $0x20] sm:$0xff]
        %v3668 = vld [vmem:[#allocation2 + $0x28] sm:$0xff]
        %v3669 = vld [vmem:[#allocation2 + $0x30] sm:$0xff]
        %v3670 = vld [vmem:[#allocation2 + $0x38] sm:$0xff]
        %v3671 = vld [vmem:[#allocation2 + $0x40] sm:$0xff]
        %v3672 = vld [vmem:[#allocation2 + $0x48] sm:$0xff]
        %3682 = vrot.lane.b32.xlu0 %v3664, 19
        %v3683 = vpop.permute.xlu0 %3682
        %3684 = vrot.lane.b32.xlu0 %v3665, 19
        %v3685 = vpop.permute.xlu0 %3684
        %3686 = vrot.lane.b32.xlu0 %v3666, 19
        %v3687 = vpop.permute.xlu0 %3686
        %3688 = vrot.lane.b32.xlu0 %v3667, 19
        %v3689 = vpop.permute.xlu0 %3688
        %3690 = vrot.lane.b32.xlu0 %v3668, 19
        %v3691 = vpop.permute.xlu0 %3690
        %3692 = vrot.lane.b32.xlu0 %v3669, 19
        %v3693 = vpop.permute.xlu0 %3692
        %3694 = vrot.lane.b32.xlu0 %v3670, 19
        %v3695 = vpop.permute.xlu0 %3694
        %3696 = vrot.lane.b32.xlu0 %v3671, 19
        %v3697 = vpop.permute.xlu0 %3696
        %3698 = vrot.lane.b32.xlu0 %v3672, 19
        %v3699 = vpop.permute.xlu0 %3698
        %v3700 = vsel %vm1611, %v3683, %v3685
        %v3701 = vsel %vm1611, %v3685, %v3687
        %v3702 = vsel %vm1611, %v3687, %v3689
        %v3703 = vsel %vm1611, %v3689, %v3691
        %v3704 = vsel %vm1611, %v3691, %v3693
        %v3705 = vsel %vm1611, %v3693, %v3695
        %v3706 = vsel %vm1611, %v3695, %v3697
        %v3707 = vsel %vm1611, %v3697, %v3699
        %3716 = vst [vmem:[#allocation4 + $0x600] sm:$0xff] %v3700
        %3717 = vst [vmem:[#allocation4 + $0x608] sm:$0xff] %v3701
        %3718 = vst [vmem:[#allocation4 + $0x610] sm:$0xff] %v3702
        %3719 = vst [vmem:[#allocation4 + $0x618] sm:$0xff] %v3703
        %3720 = vst [vmem:[#allocation4 + $0x620] sm:$0xff] %v3704
        %3721 = vst [vmem:[#allocation4 + $0x628] sm:$0xff] %v3705
        %3722 = vst [vmem:[#allocation4 + $0x630] sm:$0xff] %v3706
        %3723 = vst.msk [vmem:[#allocation4 + $0x638] sm:$0xff] %vm2232, %v3707
        %v3724 = vld [vmem:[#allocation2 + $0x8] sm:$0xff]
        %v3725 = vld [vmem:[#allocation2 + $0x10] sm:$0xff]
        %v3726 = vld [vmem:[#allocation2 + $0x18] sm:$0xff]
        %v3727 = vld [vmem:[#allocation2 + $0x20] sm:$0xff]
        %v3728 = vld [vmem:[#allocation2 + $0x28] sm:$0xff]
        %v3729 = vld [vmem:[#allocation2 + $0x30] sm:$0xff]
        %v3730 = vld [vmem:[#allocation2 + $0x38] sm:$0xff]
        %v3731 = vld [vmem:[#allocation2 + $0x40] sm:$0xff]
        %v3732 = vld [vmem:[#allocation2 + $0x48] sm:$0xff]
        %3742 = vrot.lane.b32.xlu0 %v3724, 18
        %v3743 = vpop.permute.xlu0 %3742
        %3744 = vrot.lane.b32.xlu0 %v3725, 18
        %v3745 = vpop.permute.xlu0 %3744
        %3746 = vrot.lane.b32.xlu0 %v3726, 18
        %v3747 = vpop.permute.xlu0 %3746
        %3748 = vrot.lane.b32.xlu0 %v3727, 18
        %v3749 = vpop.permute.xlu0 %3748
        %3750 = vrot.lane.b32.xlu0 %v3728, 18
        %v3751 = vpop.permute.xlu0 %3750
        %3752 = vrot.lane.b32.xlu0 %v3729, 18
        %v3753 = vpop.permute.xlu0 %3752
        %3754 = vrot.lane.b32.xlu0 %v3730, 18
        %v3755 = vpop.permute.xlu0 %3754
        %3756 = vrot.lane.b32.xlu0 %v3731, 18
        %v3757 = vpop.permute.xlu0 %3756
        %3758 = vrot.lane.b32.xlu0 %v3732, 18
        %v3759 = vpop.permute.xlu0 %3758
        %v3760 = vsel %vm1669, %v3743, %v3745
        %v3761 = vsel %vm1669, %v3745, %v3747
        %v3762 = vsel %vm1669, %v3747, %v3749
        %v3763 = vsel %vm1669, %v3749, %v3751
        %v3764 = vsel %vm1669, %v3751, %v3753
        %v3765 = vsel %vm1669, %v3753, %v3755
        %v3766 = vsel %vm1669, %v3755, %v3757
        %v3767 = vsel %vm1669, %v3757, %v3759
        %3776 = vst [vmem:[#allocation4 + $0x640] sm:$0xff] %v3760
        %3777 = vst [vmem:[#allocation4 + $0x648] sm:$0xff] %v3761
        %3778 = vst [vmem:[#allocation4 + $0x650] sm:$0xff] %v3762
        %3779 = vst [vmem:[#allocation4 + $0x658] sm:$0xff] %v3763
        %3780 = vst [vmem:[#allocation4 + $0x660] sm:$0xff] %v3764
        %3781 = vst [vmem:[#allocation4 + $0x668] sm:$0xff] %v3765
        %3782 = vst [vmem:[#allocation4 + $0x670] sm:$0xff] %v3766
        %3783 = vst.msk [vmem:[#allocation4 + $0x678] sm:$0xff] %vm2232, %v3767
        %v3784 = vld [vmem:[#allocation2 + $0x8] sm:$0xff]
        %v3785 = vld [vmem:[#allocation2 + $0x10] sm:$0xff]
        %v3786 = vld [vmem:[#allocation2 + $0x18] sm:$0xff]
        %v3787 = vld [vmem:[#allocation2 + $0x20] sm:$0xff]
        %v3788 = vld [vmem:[#allocation2 + $0x28] sm:$0xff]
        %v3789 = vld [vmem:[#allocation2 + $0x30] sm:$0xff]
        %v3790 = vld [vmem:[#allocation2 + $0x38] sm:$0xff]
        %v3791 = vld [vmem:[#allocation2 + $0x40] sm:$0xff]
        %v3792 = vld [vmem:[#allocation2 + $0x48] sm:$0xff]
        %3802 = vrot.lane.b32.xlu0 %v3784, 17
        %v3803 = vpop.permute.xlu0 %3802
        %3804 = vrot.lane.b32.xlu0 %v3785, 17
        %v3805 = vpop.permute.xlu0 %3804
        %3806 = vrot.lane.b32.xlu0 %v3786, 17
        %v3807 = vpop.permute.xlu0 %3806
        %3808 = vrot.lane.b32.xlu0 %v3787, 17
        %v3809 = vpop.permute.xlu0 %3808
        %3810 = vrot.lane.b32.xlu0 %v3788, 17
        %v3811 = vpop.permute.xlu0 %3810
        %3812 = vrot.lane.b32.xlu0 %v3789, 17
        %v3813 = vpop.permute.xlu0 %3812
        %3814 = vrot.lane.b32.xlu0 %v3790, 17
        %v3815 = vpop.permute.xlu0 %3814
        %3816 = vrot.lane.b32.xlu0 %v3791, 17
        %v3817 = vpop.permute.xlu0 %3816
        %3818 = vrot.lane.b32.xlu0 %v3792, 17
        %v3819 = vpop.permute.xlu0 %3818
        %v3820 = vsel %vm1726, %v3803, %v3805
        %v3821 = vsel %vm1726, %v3805, %v3807
        %v3822 = vsel %vm1726, %v3807, %v3809
        %v3823 = vsel %vm1726, %v3809, %v3811
        %v3824 = vsel %vm1726, %v3811, %v3813
        %v3825 = vsel %vm1726, %v3813, %v3815
        %v3826 = vsel %vm1726, %v3815, %v3817
        %v3827 = vsel %vm1726, %v3817, %v3819
        %3836 = vst [vmem:[#allocation4 + $0x680] sm:$0xff] %v3820
        %3837 = vst [vmem:[#allocation4 + $0x688] sm:$0xff] %v3821
        %3838 = vst [vmem:[#allocation4 + $0x690] sm:$0xff] %v3822
        %3839 = vst [vmem:[#allocation4 + $0x698] sm:$0xff] %v3823
        %3840 = vst [vmem:[#allocation4 + $0x6a0] sm:$0xff] %v3824
        %3841 = vst [vmem:[#allocation4 + $0x6a8] sm:$0xff] %v3825
        %3842 = vst [vmem:[#allocation4 + $0x6b0] sm:$0xff] %v3826
        %3843 = vst.msk [vmem:[#allocation4 + $0x6b8] sm:$0xff] %vm2232, %v3827
        %v3844 = vld [vmem:[%s2] sm:$0xff]
        %v3845 = vld [vmem:[%s2 + $0x8] sm:$0xff]
        %v3846 = vld [vmem:[#allocation4] sm:$0xff]
        %v3847 = vld [vmem:[#allocation4 + $0x8] sm:$0xff]
        %v3848 = vld [vmem:[#allocation4 + $0x10] sm:$0xff]
        %v3849 = vld [vmem:[#allocation4 + $0x18] sm:$0xff]
        %v3850 = vld [vmem:[#allocation4 + $0x20] sm:$0xff]
        %v3851 = vld [vmem:[#allocation4 + $0x28] sm:$0xff]
        %v3852 = vld [vmem:[#allocation4 + $0x30] sm:$0xff]
        %v3853 = vld [vmem:[#allocation4 + $0x38] sm:$0xff]
        %v3854 = vld [vmem:[#allocation4 + $0x40] sm:$0xff]
        %v3855 = vld [vmem:[#allocation4 + $0x48] sm:$0xff]
        %v3856 = vld [vmem:[#allocation4 + $0x50] sm:$0xff]
        %v3857 = vld [vmem:[#allocation4 + $0x58] sm:$0xff]
        %v3858 = vld [vmem:[#allocation4 + $0x60] sm:$0xff]
        %v3859 = vld [vmem:[#allocation4 + $0x68] sm:$0xff]
        %v3860 = vld [vmem:[#allocation4 + $0x70] sm:$0xff]
        %v3861 = vld [vmem:[#allocation4 + $0x78] sm:$0xff]
        %v3862 = vld [vmem:[#allocation4 + $0x80] sm:$0xff]
        %v3863 = vld [vmem:[#allocation4 + $0x88] sm:$0xff]
        %v3864 = vld [vmem:[#allocation4 + $0x90] sm:$0xff]
        %v3865 = vld [vmem:[#allocation4 + $0x98] sm:$0xff]
        %v3866 = vld [vmem:[#allocation4 + $0xa0] sm:$0xff]
        %v3867 = vld [vmem:[#allocation4 + $0xa8] sm:$0xff]
        %v3868 = vld [vmem:[#allocation4 + $0xb0] sm:$0xff]
        %v3869 = vld [vmem:[#allocation4 + $0xb8] sm:$0xff]
        %v3870 = vld [vmem:[#allocation4 + $0xc0] sm:$0xff]
        %v3871 = vld [vmem:[#allocation4 + $0xc8] sm:$0xff]
        %v3872 = vld [vmem:[#allocation4 + $0xd0] sm:$0xff]
        %v3873 = vld [vmem:[#allocation4 + $0xd8] sm:$0xff]
        %v3874 = vld [vmem:[#allocation4 + $0xe0] sm:$0xff]
        %v3875 = vld [vmem:[#allocation4 + $0xe8] sm:$0xff]
        %v3876 = vld [vmem:[#allocation4 + $0xf0] sm:$0xff]
        %v3877 = vld [vmem:[#allocation4 + $0xf8] sm:$0xff]
        %v3878 = vld [vmem:[#allocation4 + $0x100] sm:$0xff]
        %v3879 = vld [vmem:[#allocation4 + $0x108] sm:$0xff]
        %v3880 = vld [vmem:[#allocation4 + $0x110] sm:$0xff]
        %v3881 = vld [vmem:[#allocation4 + $0x118] sm:$0xff]
        %v3882 = vld [vmem:[#allocation4 + $0x120] sm:$0xff]
        %v3883 = vld [vmem:[#allocation4 + $0x128] sm:$0xff]
        %v3884 = vld [vmem:[#allocation4 + $0x130] sm:$0xff]
        %v3885 = vld [vmem:[#allocation4 + $0x138] sm:$0xff]
        %v3886 = vld [vmem:[#allocation4 + $0x140] sm:$0xff]
        %v3887 = vld [vmem:[#allocation4 + $0x148] sm:$0xff]
        %v3888 = vld [vmem:[#allocation4 + $0x150] sm:$0xff]
        %v3889 = vld [vmem:[#allocation4 + $0x158] sm:$0xff]
        %v3890 = vld [vmem:[#allocation4 + $0x160] sm:$0xff]
        %v3891 = vld [vmem:[#allocation4 + $0x168] sm:$0xff]
        %v3892 = vld [vmem:[#allocation4 + $0x170] sm:$0xff]
        %v3893 = vld [vmem:[#allocation4 + $0x178] sm:$0xff]
        %v3894 = vld [vmem:[#allocation4 + $0x180] sm:$0xff]
        %v3895 = vld [vmem:[#allocation4 + $0x188] sm:$0xff]
        %v3896 = vld [vmem:[#allocation4 + $0x190] sm:$0xff]
        %v3897 = vld [vmem:[#allocation4 + $0x198] sm:$0xff]
        %v3898 = vld [vmem:[#allocation4 + $0x1a0] sm:$0xff]
        %v3899 = vld [vmem:[#allocation4 + $0x1a8] sm:$0xff]
        %v3900 = vld [vmem:[#allocation4 + $0x1b0] sm:$0xff]
        %v3901 = vld [vmem:[#allocation4 + $0x1b8] sm:$0xff]
        %v3902 = vld [vmem:[#allocation4 + $0x1c0] sm:$0xff]
        %v3903 = vld [vmem:[#allocation4 + $0x1c8] sm:$0xff]
        %v3904 = vld [vmem:[#allocation4 + $0x1d0] sm:$0xff]
        %v3905 = vld [vmem:[#allocation4 + $0x1d8] sm:$0xff]
        %v3906 = vld [vmem:[#allocation4 + $0x1e0] sm:$0xff]
        %v3907 = vld [vmem:[#allocation4 + $0x1e8] sm:$0xff]
        %v3908 = vld [vmem:[#allocation4 + $0x1f0] sm:$0xff]
        %v3909 = vld [vmem:[#allocation4 + $0x1f8] sm:$0xff]
        %v3910 = vld [vmem:[#allocation4 + $0x200] sm:$0xff]
        %v3911 = vld [vmem:[#allocation4 + $0x208] sm:$0xff]
        %v3912 = vld [vmem:[#allocation4 + $0x210] sm:$0xff]
        %v3913 = vld [vmem:[#allocation4 + $0x218] sm:$0xff]
        %v3914 = vld [vmem:[#allocation4 + $0x220] sm:$0xff]
        %v3915 = vld [vmem:[#allocation4 + $0x228] sm:$0xff]
        %v3916 = vld [vmem:[#allocation4 + $0x230] sm:$0xff]
        %v3917 = vld [vmem:[#allocation4 + $0x238] sm:$0xff]
        %v3918 = vld [vmem:[#allocation4 + $0x240] sm:$0xff]
        %v3919 = vld [vmem:[#allocation4 + $0x248] sm:$0xff]
        %v3920 = vld [vmem:[#allocation4 + $0x250] sm:$0xff]
        %v3921 = vld [vmem:[#allocation4 + $0x258] sm:$0xff]
        %v3922 = vld [vmem:[#allocation4 + $0x260] sm:$0xff]
        %v3923 = vld [vmem:[#allocation4 + $0x268] sm:$0xff]
        %v3924 = vld [vmem:[#allocation4 + $0x270] sm:$0xff]
        %v3925 = vld [vmem:[#allocation4 + $0x278] sm:$0xff]
        %v3926 = vld [vmem:[#allocation4 + $0x280] sm:$0xff]
        %v3927 = vld [vmem:[#allocation4 + $0x288] sm:$0xff]
        %v3928 = vld [vmem:[#allocation4 + $0x290] sm:$0xff]
        %v3929 = vld [vmem:[#allocation4 + $0x298] sm:$0xff]
        %v3930 = vld [vmem:[#allocation4 + $0x2a0] sm:$0xff]
        %v3931 = vld [vmem:[#allocation4 + $0x2a8] sm:$0xff]
        %v3932 = vld [vmem:[#allocation4 + $0x2b0] sm:$0xff]
        %v3933 = vld [vmem:[#allocation4 + $0x2b8] sm:$0xff]
        %v3934 = vld [vmem:[#allocation4 + $0x2c0] sm:$0xff]
        %v3935 = vld [vmem:[#allocation4 + $0x2c8] sm:$0xff]
        %v3936 = vld [vmem:[#allocation4 + $0x2d0] sm:$0xff]
        %v3937 = vld [vmem:[#allocation4 + $0x2d8] sm:$0xff]
        %v3938 = vld [vmem:[#allocation4 + $0x2e0] sm:$0xff]
        %v3939 = vld [vmem:[#allocation4 + $0x2e8] sm:$0xff]
        %v3940 = vld [vmem:[#allocation4 + $0x2f0] sm:$0xff]
        %v3941 = vld [vmem:[#allocation4 + $0x2f8] sm:$0xff]
        %v3942 = vld [vmem:[#allocation4 + $0x300] sm:$0xff]
        %v3943 = vld [vmem:[#allocation4 + $0x308] sm:$0xff]
        %v3944 = vld [vmem:[#allocation4 + $0x310] sm:$0xff]
        %v3945 = vld [vmem:[#allocation4 + $0x318] sm:$0xff]
        %v3946 = vld [vmem:[#allocation4 + $0x320] sm:$0xff]
        %v3947 = vld [vmem:[#allocation4 + $0x328] sm:$0xff]
        %v3948 = vld [vmem:[#allocation4 + $0x330] sm:$0xff]
        %v3949 = vld [vmem:[#allocation4 + $0x338] sm:$0xff]
        %v3950 = vld [vmem:[#allocation4 + $0x340] sm:$0xff]
        %v3951 = vld [vmem:[#allocation4 + $0x348] sm:$0xff]
        %v3952 = vld [vmem:[#allocation4 + $0x350] sm:$0xff]
        %v3953 = vld [vmem:[#allocation4 + $0x358] sm:$0xff]
        %v3954 = vld [vmem:[#allocation4 + $0x360] sm:$0xff]
        %v3955 = vld [vmem:[#allocation4 + $0x368] sm:$0xff]
        %v3956 = vld [vmem:[#allocation4 + $0x370] sm:$0xff]
        %v3957 = vld [vmem:[#allocation4 + $0x378] sm:$0xff]
        %v3958 = vld [vmem:[#allocation4 + $0x380] sm:$0xff]
        %v3959 = vld [vmem:[#allocation4 + $0x388] sm:$0xff]
        %v3960 = vld [vmem:[#allocation4 + $0x390] sm:$0xff]
        %v3961 = vld [vmem:[#allocation4 + $0x398] sm:$0xff]
        %v3962 = vld [vmem:[#allocation4 + $0x3a0] sm:$0xff]
        %v3963 = vld [vmem:[#allocation4 + $0x3a8] sm:$0xff]
        %v3964 = vld [vmem:[#allocation4 + $0x3b0] sm:$0xff]
        %v3965 = vld [vmem:[#allocation4 + $0x3b8] sm:$0xff]
        %v3966 = vld [vmem:[#allocation4 + $0x3c0] sm:$0xff]
        %v3967 = vld [vmem:[#allocation4 + $0x3c8] sm:$0xff]
        %v3968 = vld [vmem:[#allocation4 + $0x3d0] sm:$0xff]
        %v3969 = vld [vmem:[#allocation4 + $0x3d8] sm:$0xff]
        %v3970 = vld [vmem:[#allocation4 + $0x3e0] sm:$0xff]
        %v3971 = vld [vmem:[#allocation4 + $0x3e8] sm:$0xff]
        %v3972 = vld [vmem:[#allocation4 + $0x3f0] sm:$0xff]
        %v3973 = vld [vmem:[#allocation4 + $0x3f8] sm:$0xff]
        %v3974 = vld [vmem:[#allocation4 + $0x400] sm:$0xff]
        %v3975 = vld [vmem:[#allocation4 + $0x408] sm:$0xff]
        %v3976 = vld [vmem:[#allocation4 + $0x410] sm:$0xff]
        %v3977 = vld [vmem:[#allocation4 + $0x418] sm:$0xff]
        %v3978 = vld [vmem:[#allocation4 + $0x420] sm:$0xff]
        %v3979 = vld [vmem:[#allocation4 + $0x428] sm:$0xff]
        %v3980 = vld [vmem:[#allocation4 + $0x430] sm:$0xff]
        %v3981 = vld [vmem:[#allocation4 + $0x438] sm:$0xff]
        %v3982 = vld [vmem:[#allocation4 + $0x440] sm:$0xff]
        %v3983 = vld [vmem:[#allocation4 + $0x448] sm:$0xff]
        %v3984 = vld [vmem:[#allocation4 + $0x450] sm:$0xff]
        %v3985 = vld [vmem:[#allocation4 + $0x458] sm:$0xff]
        %v3986 = vld [vmem:[#allocation4 + $0x460] sm:$0xff]
        %v3987 = vld [vmem:[#allocation4 + $0x468] sm:$0xff]
        %v3988 = vld [vmem:[#allocation4 + $0x470] sm:$0xff]
        %v3989 = vld [vmem:[#allocation4 + $0x478] sm:$0xff]
        %v3990 = vld [vmem:[#allocation4 + $0x480] sm:$0xff]
        %v3991 = vld [vmem:[#allocation4 + $0x488] sm:$0xff]
        %v3992 = vld [vmem:[#allocation4 + $0x490] sm:$0xff]
        %v3993 = vld [vmem:[#allocation4 + $0x498] sm:$0xff]
        %v3994 = vld [vmem:[#allocation4 + $0x4a0] sm:$0xff]
        %v3995 = vld [vmem:[#allocation4 + $0x4a8] sm:$0xff]
        %v3996 = vld [vmem:[#allocation4 + $0x4b0] sm:$0xff]
        %v3997 = vld [vmem:[#allocation4 + $0x4b8] sm:$0xff]
        %v3998 = vld [vmem:[#allocation4 + $0x4c0] sm:$0xff]
        %v3999 = vld [vmem:[#allocation4 + $0x4c8] sm:$0xff]
        %v4000 = vld [vmem:[#allocation4 + $0x4d0] sm:$0xff]
        %v4001 = vld [vmem:[#allocation4 + $0x4d8] sm:$0xff]
        %v4002 = vld [vmem:[#allocation4 + $0x4e0] sm:$0xff]
        %v4003 = vld [vmem:[#allocation4 + $0x4e8] sm:$0xff]
        %v4004 = vld [vmem:[#allocation4 + $0x4f0] sm:$0xff]
        %v4005 = vld [vmem:[#allocation4 + $0x4f8] sm:$0xff]
        %v4006 = vld [vmem:[#allocation4 + $0x500] sm:$0xff]
        %v4007 = vld [vmem:[#allocation4 + $0x508] sm:$0xff]
        %v4008 = vld [vmem:[#allocation4 + $0x510] sm:$0xff]
        %v4009 = vld [vmem:[#allocation4 + $0x518] sm:$0xff]
        %v4010 = vld [vmem:[#allocation4 + $0x520] sm:$0xff]
        %v4011 = vld [vmem:[#allocation4 + $0x528] sm:$0xff]
        %v4012 = vld [vmem:[#allocation4 + $0x530] sm:$0xff]
        %v4013 = vld [vmem:[#allocation4 + $0x538] sm:$0xff]
        %v4014 = vld [vmem:[#allocation4 + $0x540] sm:$0xff]
        %v4015 = vld [vmem:[#allocation4 + $0x548] sm:$0xff]
        %v4016 = vld [vmem:[#allocation4 + $0x550] sm:$0xff]
        %v4017 = vld [vmem:[#allocation4 + $0x558] sm:$0xff]
        %v4018 = vld [vmem:[#allocation4 + $0x560] sm:$0xff]
        %v4019 = vld [vmem:[#allocation4 + $0x568] sm:$0xff]
        %v4020 = vld [vmem:[#allocation4 + $0x570] sm:$0xff]
        %v4021 = vld [vmem:[#allocation4 + $0x578] sm:$0xff]
        %v4022 = vld [vmem:[#allocation4 + $0x580] sm:$0xff]
        %v4023 = vld [vmem:[#allocation4 + $0x588] sm:$0xff]
        %v4024 = vld [vmem:[#allocation4 + $0x590] sm:$0xff]
        %v4025 = vld [vmem:[#allocation4 + $0x598] sm:$0xff]
        %v4026 = vld [vmem:[#allocation4 + $0x5a0] sm:$0xff]
        %v4027 = vld [vmem:[#allocation4 + $0x5a8] sm:$0xff]
        %v4028 = vld [vmem:[#allocation4 + $0x5b0] sm:$0xff]
        %v4029 = vld [vmem:[#allocation4 + $0x5b8] sm:$0xff]
        %v4030 = vld [vmem:[#allocation4 + $0x5c0] sm:$0xff]
        %v4031 = vld [vmem:[#allocation4 + $0x5c8] sm:$0xff]
        %v4032 = vld [vmem:[#allocation4 + $0x5d0] sm:$0xff]
        %v4033 = vld [vmem:[#allocation4 + $0x5d8] sm:$0xff]
        %v4034 = vld [vmem:[#allocation4 + $0x5e0] sm:$0xff]
        %v4035 = vld [vmem:[#allocation4 + $0x5e8] sm:$0xff]
        %v4036 = vld [vmem:[#allocation4 + $0x5f0] sm:$0xff]
        %v4037 = vld [vmem:[#allocation4 + $0x5f8] sm:$0xff]
        %v4038 = vld [vmem:[#allocation4 + $0x600] sm:$0xff]
        %v4039 = vld [vmem:[#allocation4 + $0x608] sm:$0xff]
        %v4040 = vld [vmem:[#allocation4 + $0x610] sm:$0xff]
        %v4041 = vld [vmem:[#allocation4 + $0x618] sm:$0xff]
        %v4042 = vld [vmem:[#allocation4 + $0x620] sm:$0xff]
        %v4043 = vld [vmem:[#allocation4 + $0x628] sm:$0xff]
        %v4044 = vld [vmem:[#allocation4 + $0x630] sm:$0xff]
        %v4045 = vld [vmem:[#allocation4 + $0x638] sm:$0xff]
        %v4046 = vld [vmem:[#allocation4 + $0x640] sm:$0xff]
        %v4047 = vld [vmem:[#allocation4 + $0x648] sm:$0xff]
        %v4048 = vld [vmem:[#allocation4 + $0x650] sm:$0xff]
        %v4049 = vld [vmem:[#allocation4 + $0x658] sm:$0xff]
        %v4050 = vld [vmem:[#allocation4 + $0x660] sm:$0xff]
        %v4051 = vld [vmem:[#allocation4 + $0x668] sm:$0xff]
        %v4052 = vld [vmem:[#allocation4 + $0x670] sm:$0xff]
        %v4053 = vld [vmem:[#allocation4 + $0x678] sm:$0xff]
        %v4054 = vld [vmem:[#allocation4 + $0x680] sm:$0xff]
        %v4055 = vld [vmem:[#allocation4 + $0x688] sm:$0xff]
        %v4056 = vld [vmem:[#allocation4 + $0x690] sm:$0xff]
        %v4057 = vld [vmem:[#allocation4 + $0x698] sm:$0xff]
        %v4058 = vld [vmem:[#allocation4 + $0x6a0] sm:$0xff]
        %v4059 = vld [vmem:[#allocation4 + $0x6a8] sm:$0xff]
        %v4060 = vld [vmem:[#allocation4 + $0x6b0] sm:$0xff]
        %v4061 = vld [vmem:[#allocation4 + $0x6b8] sm:$0xff]
        %vm4062 = vcmask 719872
        %v4064 = vsel %vm4062, %v3845, 0
        %4066 = vmatprep.subr.mxu0 %v3847
        %4067 = vmatpush1.msra.mxu0 %v3846
        %4068 = vmatprep.subr.mxu0 %v3855
        %4069 = vmatpush1.msra.mxu0 %v3854
        %4070 = vmatprep.subr.mxu0 %v3863
        %4071 = vmatpush1.msra.mxu0 %v3862
        %4072 = vmatprep.subr.mxu0 %v3871
        %4073 = vmatpush1.msra.mxu0 %v3870
        %4074 = vmatprep.subr.mxu0 %v3879
        %4075 = vmatpush1.msra.mxu0 %v3878
        %4076 = vmatprep.subr.mxu0 %v3887
        %4077 = vmatpush1.msra.mxu0 %v3886
        %4078 = vmatprep.subr.mxu0 %v3895
        %4079 = vmatpush1.msra.mxu0 %v3894
        %4080 = vmatprep.subr.mxu0 %v3903
        %4081 = vmatpush1.msra.mxu0 %v3902
        %4082 = vmatprep.subr.mxu0 %v3911
        %4083 = vmatpush1.msra.mxu0 %v3910
        %4084 = vmatprep.subr.mxu0 %v3919
        %4085 = vmatpush1.msra.mxu0 %v3918
        %4086 = vmatprep.subr.mxu0 %v3927
        %4087 = vmatpush1.msra.mxu0 %v3926
        %4088 = vmatprep.subr.mxu0 %v3935
        %4089 = vmatpush1.msra.mxu0 %v3934
        %4090 = vmatprep.subr.mxu0 %v3943
        %4091 = vmatpush1.msra.mxu0 %v3942
        %4092 = vmatprep.subr.mxu0 %v3951
        %4093 = vmatpush1.msra.mxu0 %v3950
        %4094 = vmatprep.subr.mxu0 %v3959
        %4095 = vmatpush1.msra.mxu0 %v3958
        %4096 = vmatprep.subr.mxu0 %v3967
        %4097 = vmatpush1.msra.mxu0 %v3966
        %4098 = vmatprep.subr.mxu0 %v3975
        %4099 = vmatpush1.msra.mxu0 %v3974
        %4100 = vmatprep.subr.mxu0 %v3983
        %4101 = vmatpush1.msra.mxu0 %v3982
        %4102 = vmatprep.subr.mxu0 %v3991
        %4103 = vmatpush1.msra.mxu0 %v3990
        %4104 = vmatprep.subr.mxu0 %v3999
        %4105 = vmatpush1.msra.mxu0 %v3998
        %4106 = vmatprep.subr.mxu0 %v4007
        %4107 = vmatpush1.msra.mxu0 %v4006
        %4108 = vmatprep.subr.mxu0 %v4015
        %4109 = vmatpush1.msra.mxu0 %v4014
        %4110 = vmatprep.subr.mxu0 %v4023
        %4111 = vmatpush1.msra.mxu0 %v4022
        %4112 = vmatprep.subr.mxu0 %v4031
        %4113 = vmatpush1.msra.mxu0 %v4030
        %4114 = vmatprep.subr.mxu0 %v4039
        %4115 = vmatpush1.msra.mxu0 %v4038
        %4116 = vmatprep.subr.mxu0 %v4047
        %4117 = vmatpush1.msra.mxu0 %v4046
        %4118 = vmatprep.subr.mxu0 %v4055
        %4119 = vmatpush1.msra.mxu0 %v4054
        %4120 = vmatprep.subr.mxu0 0.0
        %4121 = vmatpush1.msra.mxu0 0.0
        %4122 = vmatprep.subr.mxu0 0.0
        %4123 = vmatpush1.msra.mxu0 0.0
        %4124 = vmatprep.subr.mxu0 0.0
        %4125 = vmatpush1.msra.mxu0 0.0
        %4126 = vmatprep.subr.mxu0 0.0
        %4127 = vmatpush1.msra.mxu0 0.0
        %4128 = vmatprep.subr.mxu0 0.0
        %4129 = vmatpush1.msra.mxu0 0.0
        %4130 = vmatprep.mubr.f32.mxu0 %v4064
        %4131 = vmatmul.mubr.f32.gmra.mrb[0].mxu0 %v3844
        %v4132 = vpop.f32.mrb[0].mxu0
        %v4133 = vadd.f32 0.0, %v4132
        %v4134 = vpop.f32.mrb[0].mxu0
        %v4135 = vadd.f32 0.0, %v4134
        %4136 = vdwg.mxu0
        %4137 = vmatprep.subr.mxu0 %v3849
        %4138 = vmatpush1.msra.mxu0 %v3848
        %4139 = vmatprep.subr.mxu0 %v3857
        %4140 = vmatpush1.msra.mxu0 %v3856
        %4141 = vmatprep.subr.mxu0 %v3865
        %4142 = vmatpush1.msra.mxu0 %v3864
        %4143 = vmatprep.subr.mxu0 %v3873
        %4144 = vmatpush1.msra.mxu0 %v3872
        %4145 = vmatprep.subr.mxu0 %v3881
        %4146 = vmatpush1.msra.mxu0 %v3880
        %4147 = vmatprep.subr.mxu0 %v3889
        %4148 = vmatpush1.msra.mxu0 %v3888
        %4149 = vmatprep.subr.mxu0 %v3897
        %4150 = vmatpush1.msra.mxu0 %v3896
        %4151 = vmatprep.subr.mxu0 %v3905
        %4152 = vmatpush1.msra.mxu0 %v3904
        %4153 = vmatprep.subr.mxu0 %v3913
        %4154 = vmatpush1.msra.mxu0 %v3912
        %4155 = vmatprep.subr.mxu0 %v3921
        %4156 = vmatpush1.msra.mxu0 %v3920
        %4157 = vmatprep.subr.mxu0 %v3929
        %4158 = vmatpush1.msra.mxu0 %v3928
        %4159 = vmatprep.subr.mxu0 %v3937
        %4160 = vmatpush1.msra.mxu0 %v3936
        %4161 = vmatprep.subr.mxu0 %v3945
        %4162 = vmatpush1.msra.mxu0 %v3944
        %4163 = vmatprep.subr.mxu0 %v3953
        %4164 = vmatpush1.msra.mxu0 %v3952
        %4165 = vmatprep.subr.mxu0 %v3961
        %4166 = vmatpush1.msra.mxu0 %v3960
        %4167 = vmatprep.subr.mxu0 %v3969
        %4168 = vmatpush1.msra.mxu0 %v3968
        %4169 = vmatprep.subr.mxu0 %v3977
        %4170 = vmatpush1.msra.mxu0 %v3976
        %4171 = vmatprep.subr.mxu0 %v3985
        %4172 = vmatpush1.msra.mxu0 %v3984
        %4173 = vmatprep.subr.mxu0 %v3993
        %4174 = vmatpush1.msra.mxu0 %v3992
        %4175 = vmatprep.subr.mxu0 %v4001
        %4176 = vmatpush1.msra.mxu0 %v4000
        %4177 = vmatprep.subr.mxu0 %v4009
        %4178 = vmatpush1.msra.mxu0 %v4008
        %4179 = vmatprep.subr.mxu0 %v4017
        %4180 = vmatpush1.msra.mxu0 %v4016
        %4181 = vmatprep.subr.mxu0 %v4025
        %4182 = vmatpush1.msra.mxu0 %v4024
        %4183 = vmatprep.subr.mxu0 %v4033
        %4184 = vmatpush1.msra.mxu0 %v4032
        %4185 = vmatprep.subr.mxu0 %v4041
        %4186 = vmatpush1.msra.mxu0 %v4040
        %4187 = vmatprep.subr.mxu0 %v4049
        %4188 = vmatpush1.msra.mxu0 %v4048
        %4189 = vmatprep.subr.mxu0 %v4057
        %4190 = vmatpush1.msra.mxu0 %v4056
        %4191 = vmatprep.subr.mxu0 0.0
        %4192 = vmatpush1.msra.mxu0 0.0
        %4193 = vmatprep.subr.mxu0 0.0
        %4194 = vmatpush1.msra.mxu0 0.0
        %4195 = vmatprep.subr.mxu0 0.0
        %4196 = vmatpush1.msra.mxu0 0.0
        %4197 = vmatprep.subr.mxu0 0.0
        %4198 = vmatpush1.msra.mxu0 0.0
        %4199 = vmatprep.subr.mxu0 0.0
        %4200 = vmatpush1.msra.mxu0 0.0
        %4201 = vmatprep.mubr.f32.mxu0 %v4064
        %4202 = vmatmul.mubr.f32.gmra.mrb[0].mxu0 %v3844
        %v4203 = vpop.f32.mrb[0].mxu0
        %v4204 = vadd.f32 0.0, %v4203
        %v4205 = vpop.f32.mrb[0].mxu0
        %v4206 = vadd.f32 0.0, %v4205
        %4207 = vdwg.mxu0
        %4208 = vmatprep.subr.mxu0 %v3851
        %4209 = vmatpush1.msra.mxu0 %v3850
        %4210 = vmatprep.subr.mxu0 %v3859
        %4211 = vmatpush1.msra.mxu0 %v3858
        %4212 = vmatprep.subr.mxu0 %v3867
        %4213 = vmatpush1.msra.mxu0 %v3866
        %4214 = vmatprep.subr.mxu0 %v3875
        %4215 = vmatpush1.msra.mxu0 %v3874
        %4216 = vmatprep.subr.mxu0 %v3883
        %4217 = vmatpush1.msra.mxu0 %v3882
        %4218 = vmatprep.subr.mxu0 %v3891
        %4219 = vmatpush1.msra.mxu0 %v3890
        %4220 = vmatprep.subr.mxu0 %v3899
        %4221 = vmatpush1.msra.mxu0 %v3898
        %4222 = vmatprep.subr.mxu0 %v3907
        %4223 = vmatpush1.msra.mxu0 %v3906
        %4224 = vmatprep.subr.mxu0 %v3915
        %4225 = vmatpush1.msra.mxu0 %v3914
        %4226 = vmatprep.subr.mxu0 %v3923
        %4227 = vmatpush1.msra.mxu0 %v3922
        %4228 = vmatprep.subr.mxu0 %v3931
        %4229 = vmatpush1.msra.mxu0 %v3930
        %4230 = vmatprep.subr.mxu0 %v3939
        %4231 = vmatpush1.msra.mxu0 %v3938
        %4232 = vmatprep.subr.mxu0 %v3947
        %4233 = vmatpush1.msra.mxu0 %v3946
        %4234 = vmatprep.subr.mxu0 %v3955
        %4235 = vmatpush1.msra.mxu0 %v3954
        %4236 = vmatprep.subr.mxu0 %v3963
        %4237 = vmatpush1.msra.mxu0 %v3962
        %4238 = vmatprep.subr.mxu0 %v3971
        %4239 = vmatpush1.msra.mxu0 %v3970
        %4240 = vmatprep.subr.mxu0 %v3979
        %4241 = vmatpush1.msra.mxu0 %v3978
        %4242 = vmatprep.subr.mxu0 %v3987
        %4243 = vmatpush1.msra.mxu0 %v3986
        %4244 = vmatprep.subr.mxu0 %v3995
        %4245 = vmatpush1.msra.mxu0 %v3994
        %4246 = vmatprep.subr.mxu0 %v4003
        %4247 = vmatpush1.msra.mxu0 %v4002
        %4248 = vmatprep.subr.mxu0 %v4011
        %4249 = vmatpush1.msra.mxu0 %v4010
        %4250 = vmatprep.subr.mxu0 %v4019
        %4251 = vmatpush1.msra.mxu0 %v4018
        %4252 = vmatprep.subr.mxu0 %v4027
        %4253 = vmatpush1.msra.mxu0 %v4026
        %4254 = vmatprep.subr.mxu0 %v4035
        %4255 = vmatpush1.msra.mxu0 %v4034
        %4256 = vmatprep.subr.mxu0 %v4043
        %4257 = vmatpush1.msra.mxu0 %v4042
        %4258 = vmatprep.subr.mxu0 %v4051
        %4259 = vmatpush1.msra.mxu0 %v4050
        %4260 = vmatprep.subr.mxu0 %v4059
        %4261 = vmatpush1.msra.mxu0 %v4058
        %4262 = vmatprep.subr.mxu0 0.0
        %4263 = vmatpush1.msra.mxu0 0.0
        %4264 = vmatprep.subr.mxu0 0.0
        %4265 = vmatpush1.msra.mxu0 0.0
        %4266 = vmatprep.subr.mxu0 0.0
        %4267 = vmatpush1.msra.mxu0 0.0
        %4268 = vmatprep.subr.mxu0 0.0
        %4269 = vmatpush1.msra.mxu0 0.0
        %4270 = vmatprep.subr.mxu0 0.0
        %4271 = vmatpush1.msra.mxu0 0.0
        %4272 = vmatprep.mubr.f32.mxu0 %v4064
        %4273 = vmatmul.mubr.f32.gmra.mrb[0].mxu0 %v3844
        %v4274 = vpop.f32.mrb[0].mxu0
        %v4275 = vadd.f32 0.0, %v4274
        %v4276 = vpop.f32.mrb[0].mxu0
        %v4277 = vadd.f32 0.0, %v4276
        %4278 = vdwg.mxu0
        %4279 = vmatprep.subr.mxu0 %v3853
        %4280 = vmatpush1.msra.mxu0 %v3852
        %4281 = vmatprep.subr.mxu0 %v3861
        %4282 = vmatpush1.msra.mxu0 %v3860
        %4283 = vmatprep.subr.mxu0 %v3869
        %4284 = vmatpush1.msra.mxu0 %v3868
        %4285 = vmatprep.subr.mxu0 %v3877
        %4286 = vmatpush1.msra.mxu0 %v3876
        %4287 = vmatprep.subr.mxu0 %v3885
        %4288 = vmatpush1.msra.mxu0 %v3884
        %4289 = vmatprep.subr.mxu0 %v3893
        %4290 = vmatpush1.msra.mxu0 %v3892
        %4291 = vmatprep.subr.mxu0 %v3901
        %4292 = vmatpush1.msra.mxu0 %v3900
        %4293 = vmatprep.subr.mxu0 %v3909
        %4294 = vmatpush1.msra.mxu0 %v3908
        %4295 = vmatprep.subr.mxu0 %v3917
        %4296 = vmatpush1.msra.mxu0 %v3916
        %4297 = vmatprep.subr.mxu0 %v3925
        %4298 = vmatpush1.msra.mxu0 %v3924
        %4299 = vmatprep.subr.mxu0 %v3933
        %4300 = vmatpush1.msra.mxu0 %v3932
        %4301 = vmatprep.subr.mxu0 %v3941
        %4302 = vmatpush1.msra.mxu0 %v3940
        %4303 = vmatprep.subr.mxu0 %v3949
        %4304 = vmatpush1.msra.mxu0 %v3948
        %4305 = vmatprep.subr.mxu0 %v3957
        %4306 = vmatpush1.msra.mxu0 %v3956
        %4307 = vmatprep.subr.mxu0 %v3965
        %4308 = vmatpush1.msra.mxu0 %v3964
        %4309 = vmatprep.subr.mxu0 %v3973
        %4310 = vmatpush1.msra.mxu0 %v3972
        %4311 = vmatprep.subr.mxu0 %v3981
        %4312 = vmatpush1.msra.mxu0 %v3980
        %4313 = vmatprep.subr.mxu0 %v3989
        %4314 = vmatpush1.msra.mxu0 %v3988
        %4315 = vmatprep.subr.mxu0 %v3997
        %4316 = vmatpush1.msra.mxu0 %v3996
        %4317 = vmatprep.subr.mxu0 %v4005
        %4318 = vmatpush1.msra.mxu0 %v4004
        %4319 = vmatprep.subr.mxu0 %v4013
        %4320 = vmatpush1.msra.mxu0 %v4012
        %4321 = vmatprep.subr.mxu0 %v4021
        %4322 = vmatpush1.msra.mxu0 %v4020
        %4323 = vmatprep.subr.mxu0 %v4029
        %4324 = vmatpush1.msra.mxu0 %v4028
        %4325 = vmatprep.subr.mxu0 %v4037
        %4326 = vmatpush1.msra.mxu0 %v4036
        %4327 = vmatprep.subr.mxu0 %v4045
        %4328 = vmatpush1.msra.mxu0 %v4044
        %4329 = vmatprep.subr.mxu0 %v4053
        %4330 = vmatpush1.msra.mxu0 %v4052
        %4331 = vmatprep.subr.mxu0 %v4061
        %4332 = vmatpush1.msra.mxu0 %v4060
        %4333 = vmatprep.subr.mxu0 0.0
        %4334 = vmatpush1.msra.mxu0 0.0
        %4335 = vmatprep.subr.mxu0 0.0
        %4336 = vmatpush1.msra.mxu0 0.0
        %4337 = vmatprep.subr.mxu0 0.0
        %4338 = vmatpush1.msra.mxu0 0.0
        %4339 = vmatprep.subr.mxu0 0.0
        %4340 = vmatpush1.msra.mxu0 0.0
        %4341 = vmatprep.subr.mxu0 0.0
        %4342 = vmatpush1.msra.mxu0 0.0
        %4343 = vmatprep.mubr.f32.mxu0 %v4064
        %4344 = vmatmul.mubr.f32.gmra.mrb[0].mxu0 %v3844
        %v4345 = vpop.f32.mrb[0].mxu0
        %v4346 = vadd.f32 0.0, %v4345
        %v4347 = vpop.f32.mrb[0].mxu0
        %v4348 = vadd.f32 0.0, %v4347
        %4349 = vdwg.mxu0
        %v4350 = vmul.f32 %v4133, %v2181
        %v4351 = vmul.f32 %v4135, %v2185
        %v4352 = vmul.f32 %v4204, %v2189
        %v4353 = vmul.f32 %v4206, %v2193
        %v4354 = vmul.f32 %v4275, %v2197
        %v4355 = vmul.f32 %v4277, %v2201
        %v4356 = vmul.f32 %v4346, %v2205
        %v4357 = vmul.f32 %v4348, %v2209
        %v4358 = vadd.f32 %v4350, %v4351
        %v4359 = vadd.f32 %v4358, %v4352
        %v4360 = vadd.f32 %v4359, %v4353
        %v4361 = vadd.f32 %v4360, %v4354
        %v4362 = vadd.f32 %v4361, %v4355
        %v4363 = vadd.f32 %v4362, %v4356
        %v4364 = vsel %vm2232, %v4357, 0.0
        %v4365 = vadd.f32 %v4363, %v4364
        %4366 = vadd.xlane.f32.xlu0 %v4365
        %v4367 = vpop.xlane.xlu0 %4366
        %v4368 = vmul.f32 %v4367, 0.001953125
        %v4369 = vsub.f32 %v4133, %v4368
        %v4370 = vsub.f32 %v4135, %v4368
        %v4371 = vsub.f32 %v4204, %v4368
        %v4372 = vsub.f32 %v4206, %v4368
        %v4373 = vsub.f32 %v4275, %v4368
        %v4374 = vsub.f32 %v4277, %v4368
        %v4375 = vsub.f32 %v4346, %v4368
        %v4376 = vsub.f32 %v4348, %v4368
        %v4377 = vmul.f32 %v4369, %v2181
        %v4378 = vmul.f32 %v4370, %v2185
        %v4379 = vmul.f32 %v4371, %v2189
        %v4380 = vmul.f32 %v4372, %v2193
        %v4381 = vmul.f32 %v4373, %v2197
        %v4382 = vmul.f32 %v4374, %v2201
        %v4383 = vmul.f32 %v4375, %v2205
        %v4384 = vmul.f32 %v4376, %v2209
        %v4385 = vmul.f32 %v4377, %v4377
        %v4386 = vmul.f32 %v4378, %v4378
        %v4387 = vmul.f32 %v4379, %v4379
        %v4388 = vmul.f32 %v4380, %v4380
        %v4389 = vmul.f32 %v4381, %v4381
        %v4390 = vmul.f32 %v4382, %v4382
        %v4391 = vmul.f32 %v4383, %v4383
        %v4392 = vmul.f32 %v4384, %v4384
        %v4393 = vadd.f32 %v4385, %v4386
        %v4394 = vadd.f32 %v4393, %v4387
        %v4395 = vadd.f32 %v4394, %v4388
        %v4396 = vadd.f32 %v4395, %v4389
        %v4397 = vadd.f32 %v4396, %v4390
        %v4398 = vadd.f32 %v4397, %v4391
        %v4399 = vsel %vm2232, %v4392, 0.0
        %v4400 = vadd.f32 %v4398, %v4399
        %4401 = vadd.xlane.f32.xlu0 %v4400
        %v4402 = vpop.xlane.xlu0 %4401
        %v4403 = vmul.f32 %v4402, 0.001953125
        %v4404 = vadd.f32 %v4403, 1e-05
        %v4405 = vrsqrt.pop %v4404
        %v4406 = vmul.f32 %v4377, %v4405
        %v4407 = vmul.f32 %v4378, %v4405
        %v4408 = vmul.f32 %v4379, %v4405
        %v4409 = vmul.f32 %v4380, %v4405
        %v4410 = vmul.f32 %v4381, %v4405
        %v4411 = vmul.f32 %v4382, %v4405
        %v4412 = vmul.f32 %v4383, %v4405
        %v4413 = vmul.f32 %v4384, %v4405
        %v4414 = vmax.f32 %v4406, 0.0
        %v4415 = vmax.f32 %v4407, 0.0
        %v4416 = vmax.f32 %v4408, 0.0
        %v4417 = vmax.f32 %v4409, 0.0
        %v4418 = vmax.f32 %v4410, 0.0
        %v4419 = vmax.f32 %v4411, 0.0
        %v4420 = vmax.f32 %v4412, 0.0
        %v4421 = vmax.f32 %v4413, 0.0
        %v4422 = vld [vmem:[%s3] sm:$0xff]
        %v4423 = vld [vmem:[%s239 + $0x4] sm:$0xff]
        %v4424 = vld [vmem:[%s239 + $0xc] sm:$0xff]
        %v4425 = vld [vmem:[%s239 + $0x14] sm:$0xff]
        %v4426 = vld [vmem:[%s239 + $0x1c] sm:$0xff]
        %v4427 = vld [vmem:[%s4] sm:$0xff]
        %4429 = vset.pattern.permute.xlu0 0
        %4430 = vperm.xlu0 %4429, %v4427
        %v4431 = vpop.permute.xlu0 %4430
        %v4437 = vcombine.high %v4423, %v4423
        %v4438 = vcombine.high %v4424, %v4424
        %v4439 = vcombine.high %v4425, %v4425
        %v4440 = vcombine.high %v4426, %v4426
        %vm4441 = vcmask 31744
        %v4443 = vsel %vm4441, %v4422, 0
        %v4445 = vsel %vm1868, %v4423, 0
        %v4447 = vsel %vm1868, %v4437, 0
        %v4449 = vsel %vm1868, %v4424, 0
        %v4451 = vsel %vm1868, %v4438, 0
        %v4453 = vsel %vm1868, %v4425, 0
        %v4455 = vsel %vm1868, %v4439, 0
        %v4457 = vsel %vm1868, %v4426, 0
        %v4459 = vsel %vm1868, %v4440, 0
        %4461 = vmatprep.subr.mxu0 %v4447
        %4462 = vmatpush1.msra.mxu0 %v4445
        %4463 = vmatprep.subr.mxu0 0.0
        %4464 = vmatpush1.msra.mxu0 0.0
        %4465 = vmatprep.subr.mxu0 0.0
        %4466 = vmatpush1.msra.mxu0 0.0
        %4467 = vmatprep.subr.mxu0 0.0
        %4468 = vmatpush1.msra.mxu0 0.0
        %4469 = vmatprep.subr.mxu0 0.0
        %4470 = vmatpush1.msra.mxu0 0.0
        %4471 = vmatprep.subr.mxu0 0.0
        %4472 = vmatpush1.msra.mxu0 0.0
        %4473 = vmatprep.subr.mxu0 0.0
        %4474 = vmatpush1.msra.mxu0 0.0
        %4475 = vmatprep.subr.mxu0 0.0
        %4476 = vmatpush1.msra.mxu0 0.0
        %4477 = vmatprep.subr.mxu0 0.0
        %4478 = vmatpush1.msra.mxu0 0.0
        %4479 = vmatprep.subr.mxu0 0.0
        %4480 = vmatpush1.msra.mxu0 0.0
        %4481 = vmatprep.subr.mxu0 0.0
        %4482 = vmatpush1.msra.mxu0 0.0
        %4483 = vmatprep.subr.mxu0 0.0
        %4484 = vmatpush1.msra.mxu0 0.0
        %4485 = vmatprep.subr.mxu0 0.0
        %4486 = vmatpush1.msra.mxu0 0.0
        %4487 = vmatprep.subr.mxu0 0.0
        %4488 = vmatpush1.msra.mxu0 0.0
        %4489 = vmatprep.subr.mxu0 0.0
        %4490 = vmatpush1.msra.mxu0 0.0
        %4491 = vmatprep.subr.mxu0 0.0
        %4492 = vmatpush1.msra.mxu0 0.0
        %4493 = vmatprep.subr.mxu0 0.0
        %4494 = vmatpush1.msra.mxu0 0.0
        %4495 = vmatprep.subr.mxu0 0.0
        %4496 = vmatpush1.msra.mxu0 0.0
        %4497 = vmatprep.subr.mxu0 0.0
        %4498 = vmatpush1.msra.mxu0 0.0
        %4499 = vmatprep.subr.mxu0 0.0
        %4500 = vmatpush1.msra.mxu0 0.0
        %4501 = vmatprep.subr.mxu0 0.0
        %4502 = vmatpush1.msra.mxu0 0.0
        %4503 = vmatprep.subr.mxu0 0.0
        %4504 = vmatpush1.msra.mxu0 0.0
        %4505 = vmatprep.subr.mxu0 0.0
        %4506 = vmatpush1.msra.mxu0 0.0
        %4507 = vmatprep.subr.mxu0 0.0
        %4508 = vmatpush1.msra.mxu0 0.0
        %4509 = vmatprep.subr.mxu0 0.0
        %4510 = vmatpush1.msra.mxu0 0.0
        %4511 = vmatprep.subr.mxu0 0.0
        %4512 = vmatpush1.msra.mxu0 0.0
        %4513 = vmatprep.subr.mxu0 0.0
        %4514 = vmatpush1.msra.mxu0 0.0
        %4515 = vmatprep.subr.mxu0 0.0
        %4516 = vmatpush1.msra.mxu0 0.0
        %4517 = vmatprep.subr.mxu0 0.0
        %4518 = vmatpush1.msra.mxu0 0.0
        %4519 = vmatprep.subr.mxu0 0.0
        %4520 = vmatpush1.msra.mxu0 0.0
        %4521 = vmatprep.subr.mxu0 0.0
        %4522 = vmatpush1.msra.mxu0 0.0
        %4523 = vmatprep.subr.mxu0 0.0
        %4524 = vmatpush1.msra.mxu0 0.0
        %4525 = vmatprep.mubr.f32.mxu0 0.0
        %4526 = vmatmul.mubr.f32.gmra.mrb[0].mxu0 %v4443
        %v4527 = vpop.f32.mrb[0].mxu0
        %v4528 = vadd.f32 %v4431, %v4527
        %v4529 = vpop.f32.mrb[0].mxu0
        %v4530 = vadd.f32 %v4431, %v4529
        %4531 = vdwg.mxu0
        %4532 = vmatprep.subr.mxu0 %v4451
        %4533 = vmatpush1.msra.mxu0 %v4449
        %4534 = vmatprep.subr.mxu0 0.0
        %4535 = vmatpush1.msra.mxu0 0.0
        %4536 = vmatprep.subr.mxu0 0.0
        %4537 = vmatpush1.msra.mxu0 0.0
        %4538 = vmatprep.subr.mxu0 0.0
        %4539 = vmatpush1.msra.mxu0 0.0
        %4540 = vmatprep.subr.mxu0 0.0
        %4541 = vmatpush1.msra.mxu0 0.0
        %4542 = vmatprep.subr.mxu0 0.0
        %4543 = vmatpush1.msra.mxu0 0.0
        %4544 = vmatprep.subr.mxu0 0.0
        %4545 = vmatpush1.msra.mxu0 0.0
        %4546 = vmatprep.subr.mxu0 0.0
        %4547 = vmatpush1.msra.mxu0 0.0
        %4548 = vmatprep.subr.mxu0 0.0
        %4549 = vmatpush1.msra.mxu0 0.0
        %4550 = vmatprep.subr.mxu0 0.0
        %4551 = vmatpush1.msra.mxu0 0.0
        %4552 = vmatprep.subr.mxu0 0.0
        %4553 = vmatpush1.msra.mxu0 0.0
        %4554 = vmatprep.subr.mxu0 0.0
        %4555 = vmatpush1.msra.mxu0 0.0
        %4556 = vmatprep.subr.mxu0 0.0
        %4557 = vmatpush1.msra.mxu0 0.0
        %4558 = vmatprep.subr.mxu0 0.0
        %4559 = vmatpush1.msra.mxu0 0.0
        %4560 = vmatprep.subr.mxu0 0.0
        %4561 = vmatpush1.msra.mxu0 0.0
        %4562 = vmatprep.subr.mxu0 0.0
        %4563 = vmatpush1.msra.mxu0 0.0
        %4564 = vmatprep.subr.mxu0 0.0
        %4565 = vmatpush1.msra.mxu0 0.0
        %4566 = vmatprep.subr.mxu0 0.0
        %4567 = vmatpush1.msra.mxu0 0.0
        %4568 = vmatprep.subr.mxu0 0.0
        %4569 = vmatpush1.msra.mxu0 0.0
        %4570 = vmatprep.subr.mxu0 0.0
        %4571 = vmatpush1.msra.mxu0 0.0
        %4572 = vmatprep.subr.mxu0 0.0
        %4573 = vmatpush1.msra.mxu0 0.0
        %4574 = vmatprep.subr.mxu0 0.0
        %4575 = vmatpush1.msra.mxu0 0.0
        %4576 = vmatprep.subr.mxu0 0.0
        %4577 = vmatpush1.msra.mxu0 0.0
        %4578 = vmatprep.subr.mxu0 0.0
        %4579 = vmatpush1.msra.mxu0 0.0
        %4580 = vmatprep.subr.mxu0 0.0
        %4581 = vmatpush1.msra.mxu0 0.0
        %4582 = vmatprep.subr.mxu0 0.0
        %4583 = vmatpush1.msra.mxu0 0.0
        %4584 = vmatprep.subr.mxu0 0.0
        %4585 = vmatpush1.msra.mxu0 0.0
        %4586 = vmatprep.subr.mxu0 0.0
        %4587 = vmatpush1.msra.mxu0 0.0
        %4588 = vmatprep.subr.mxu0 0.0
        %4589 = vmatpush1.msra.mxu0 0.0
        %4590 = vmatprep.subr.mxu0 0.0
        %4591 = vmatpush1.msra.mxu0 0.0
        %4592 = vmatprep.subr.mxu0 0.0
        %4593 = vmatpush1.msra.mxu0 0.0
        %4594 = vmatprep.subr.mxu0 0.0
        %4595 = vmatpush1.msra.mxu0 0.0
        %4596 = vmatprep.mubr.f32.mxu0 0.0
        %4597 = vmatmul.mubr.f32.gmra.mrb[0].mxu0 %v4443
        %v4598 = vpop.f32.mrb[0].mxu0
        %v4599 = vadd.f32 %v4431, %v4598
        %v4600 = vpop.f32.mrb[0].mxu0
        %v4601 = vadd.f32 %v4431, %v4600
        %4602 = vdwg.mxu0
        %4603 = vmatprep.subr.mxu0 %v4455
        %4604 = vmatpush1.msra.mxu0 %v4453
        %4605 = vmatprep.subr.mxu0 0.0
        %4606 = vmatpush1.msra.mxu0 0.0
        %4607 = vmatprep.subr.mxu0 0.0
        %4608 = vmatpush1.msra.mxu0 0.0
        %4609 = vmatprep.subr.mxu0 0.0
        %4610 = vmatpush1.msra.mxu0 0.0
        %4611 = vmatprep.subr.mxu0 0.0
        %4612 = vmatpush1.msra.mxu0 0.0
        %4613 = vmatprep.subr.mxu0 0.0
        %4614 = vmatpush1.msra.mxu0 0.0
        %4615 = vmatprep.subr.mxu0 0.0
        %4616 = vmatpush1.msra.mxu0 0.0
        %4617 = vmatprep.subr.mxu0 0.0
        %4618 = vmatpush1.msra.mxu0 0.0
        %4619 = vmatprep.subr.mxu0 0.0
        %4620 = vmatpush1.msra.mxu0 0.0
        %4621 = vmatprep.subr.mxu0 0.0
        %4622 = vmatpush1.msra.mxu0 0.0
        %4623 = vmatprep.subr.mxu0 0.0
        %4624 = vmatpush1.msra.mxu0 0.0
        %4625 = vmatprep.subr.mxu0 0.0
        %4626 = vmatpush1.msra.mxu0 0.0
        %4627 = vmatprep.subr.mxu0 0.0
        %4628 = vmatpush1.msra.mxu0 0.0
        %4629 = vmatprep.subr.mxu0 0.0
        %4630 = vmatpush1.msra.mxu0 0.0
        %4631 = vmatprep.subr.mxu0 0.0
        %4632 = vmatpush1.msra.mxu0 0.0
        %4633 = vmatprep.subr.mxu0 0.0
        %4634 = vmatpush1.msra.mxu0 0.0
        %4635 = vmatprep.subr.mxu0 0.0
        %4636 = vmatpush1.msra.mxu0 0.0
        %4637 = vmatprep.subr.mxu0 0.0
        %4638 = vmatpush1.msra.mxu0 0.0
        %4639 = vmatprep.subr.mxu0 0.0
        %4640 = vmatpush1.msra.mxu0 0.0
        %4641 = vmatprep.subr.mxu0 0.0
        %4642 = vmatpush1.msra.mxu0 0.0
        %4643 = vmatprep.subr.mxu0 0.0
        %4644 = vmatpush1.msra.mxu0 0.0
        %4645 = vmatprep.subr.mxu0 0.0
        %4646 = vmatpush1.msra.mxu0 0.0
        %4647 = vmatprep.subr.mxu0 0.0
        %4648 = vmatpush1.msra.mxu0 0.0
        %4649 = vmatprep.subr.mxu0 0.0
        %4650 = vmatpush1.msra.mxu0 0.0
        %4651 = vmatprep.subr.mxu0 0.0
        %4652 = vmatpush1.msra.mxu0 0.0
        %4653 = vmatprep.subr.mxu0 0.0
        %4654 = vmatpush1.msra.mxu0 0.0
        %4655 = vmatprep.subr.mxu0 0.0
        %4656 = vmatpush1.msra.mxu0 0.0
        %4657 = vmatprep.subr.mxu0 0.0
        %4658 = vmatpush1.msra.mxu0 0.0
        %4659 = vmatprep.subr.mxu0 0.0
        %4660 = vmatpush1.msra.mxu0 0.0
        %4661 = vmatprep.subr.mxu0 0.0
        %4662 = vmatpush1.msra.mxu0 0.0
        %4663 = vmatprep.subr.mxu0 0.0
        %4664 = vmatpush1.msra.mxu0 0.0
        %4665 = vmatprep.subr.mxu0 0.0
        %4666 = vmatpush1.msra.mxu0 0.0
        %4667 = vmatprep.mubr.f32.mxu0 0.0
        %4668 = vmatmul.mubr.f32.gmra.mrb[0].mxu0 %v4443
        %v4669 = vpop.f32.mrb[0].mxu0
        %v4670 = vadd.f32 %v4431, %v4669
        %v4671 = vpop.f32.mrb[0].mxu0
        %v4672 = vadd.f32 %v4431, %v4671
        %4673 = vdwg.mxu0
        %4674 = vmatprep.subr.mxu0 %v4459
        %4675 = vmatpush1.msra.mxu0 %v4457
        %4676 = vmatprep.subr.mxu0 0.0
        %4677 = vmatpush1.msra.mxu0 0.0
        %4678 = vmatprep.subr.mxu0 0.0
        %4679 = vmatpush1.msra.mxu0 0.0
        %4680 = vmatprep.subr.mxu0 0.0
        %4681 = vmatpush1.msra.mxu0 0.0
        %4682 = vmatprep.subr.mxu0 0.0
        %4683 = vmatpush1.msra.mxu0 0.0
        %4684 = vmatprep.subr.mxu0 0.0
        %4685 = vmatpush1.msra.mxu0 0.0
        %4686 = vmatprep.subr.mxu0 0.0
        %4687 = vmatpush1.msra.mxu0 0.0
        %4688 = vmatprep.subr.mxu0 0.0
        %4689 = vmatpush1.msra.mxu0 0.0
        %4690 = vmatprep.subr.mxu0 0.0
        %4691 = vmatpush1.msra.mxu0 0.0
        %4692 = vmatprep.subr.mxu0 0.0
        %4693 = vmatpush1.msra.mxu0 0.0
        %4694 = vmatprep.subr.mxu0 0.0
        %4695 = vmatpush1.msra.mxu0 0.0
        %4696 = vmatprep.subr.mxu0 0.0
        %4697 = vmatpush1.msra.mxu0 0.0
        %4698 = vmatprep.subr.mxu0 0.0
        %4699 = vmatpush1.msra.mxu0 0.0
        %4700 = vmatprep.subr.mxu0 0.0
        %4701 = vmatpush1.msra.mxu0 0.0
        %4702 = vmatprep.subr.mxu0 0.0
        %4703 = vmatpush1.msra.mxu0 0.0
        %4704 = vmatprep.subr.mxu0 0.0
        %4705 = vmatpush1.msra.mxu0 0.0
        %4706 = vmatprep.subr.mxu0 0.0
        %4707 = vmatpush1.msra.mxu0 0.0
        %4708 = vmatprep.subr.mxu0 0.0
        %4709 = vmatpush1.msra.mxu0 0.0
        %4710 = vmatprep.subr.mxu0 0.0
        %4711 = vmatpush1.msra.mxu0 0.0
        %4712 = vmatprep.subr.mxu0 0.0
        %4713 = vmatpush1.msra.mxu0 0.0
        %4714 = vmatprep.subr.mxu0 0.0
        %4715 = vmatpush1.msra.mxu0 0.0
        %4716 = vmatprep.subr.mxu0 0.0
        %4717 = vmatpush1.msra.mxu0 0.0
        %4718 = vmatprep.subr.mxu0 0.0
        %4719 = vmatpush1.msra.mxu0 0.0
        %4720 = vmatprep.subr.mxu0 0.0
        %4721 = vmatpush1.msra.mxu0 0.0
        %4722 = vmatprep.subr.mxu0 0.0
        %4723 = vmatpush1.msra.mxu0 0.0
        %4724 = vmatprep.subr.mxu0 0.0
        %4725 = vmatpush1.msra.mxu0 0.0
        %4726 = vmatprep.subr.mxu0 0.0
        %4727 = vmatpush1.msra.mxu0 0.0
        %4728 = vmatprep.subr.mxu0 0.0
        %4729 = vmatpush1.msra.mxu0 0.0
        %4730 = vmatprep.subr.mxu0 0.0
        %4731 = vmatpush1.msra.mxu0 0.0
        %4732 = vmatprep.subr.mxu0 0.0
        %4733 = vmatpush1.msra.mxu0 0.0
        %4734 = vmatprep.subr.mxu0 0.0
        %4735 = vmatpush1.msra.mxu0 0.0
        %4736 = vmatprep.subr.mxu0 0.0
        %4737 = vmatpush1.msra.mxu0 0.0
        %4738 = vmatprep.mubr.f32.mxu0 0.0
        %4739 = vmatmul.mubr.f32.gmra.mrb[0].mxu0 %v4443
        %v4740 = vpop.f32.mrb[0].mxu0
        %v4741 = vadd.f32 %v4431, %v4740
        %v4742 = vpop.f32.mrb[0].mxu0
        %v4743 = vadd.f32 %v4431, %v4742
        %4744 = vdwg.mxu0
        %v4745 = vadd.f32 %v4414, %v4528
        %v4746 = vadd.f32 %v4415, %v4530
        %v4747 = vadd.f32 %v4416, %v4599
        %v4748 = vadd.f32 %v4417, %v4601
        %v4749 = vadd.f32 %v4418, %v4670
        %v4750 = vadd.f32 %v4419, %v4672
        %v4751 = vadd.f32 %v4420, %v4741
        %v4752 = vadd.f32 %v4421, %v4743
        %4753 = vst [vmem:[%s267] sm:$0xff] %v4745
        %4754 = vst [vmem:[%s267 + $0x8] sm:$0xff] %v4746
        %4755 = vst [vmem:[%s267 + $0x10] sm:$0xff] %v4747
        %4756 = vst [vmem:[%s267 + $0x18] sm:$0xff] %v4748
        %4757 = vst [vmem:[%s267 + $0x20] sm:$0xff] %v4749
        %4758 = vst [vmem:[%s267 + $0x28] sm:$0xff] %v4750
        %4759 = vst [vmem:[%s267 + $0x30] sm:$0xff] %v4751
        %4760 = vst.msk [vmem:[%s267 + $0x38] sm:$0xff] %vm2232, %v4752
        %s4761 = sand.u32 %s162, 1
        %s4762 = scalar_lea.sflag [#allocation7], %s4761
        %s4763 = sand.u32 %s162, 1
        %s4764 = smul.addr %s4763, 64
        %s4765 = scalar_lea.vmem [#allocation8], %s4764
        // Predicated region
        $region49: #{tpu_custom_call.1} parent=43 // pred_check
          %p4766 = pneg %p172
        $region50: #{tpu_custom_call.1} parent=43 // pred_check_branch
          %4768 = sbr.rel (%p4766) target = $region52
        $region51: #{tpu_custom_call.1} parent=43 // pred_region
          %s4770 = ssub.s32 1024, 1024
          %4771 = vsyncadd %s4762, %s4770
          %s4772 = smul.addr %s23, 8
          %s4773 = smul.addr %s4772, 128
          %s4774 = scalar_lea.hbm %s6, %s4773
          %s4776 = sshll.u32 %s4765, 4
          %s4777 = int_to_ptr.vmem [resolvable:$true] %s4776
          %4779 = dma.vmem_to_hbm [thread:$0]  %s4777, 1024, %s4774, %s4762
        $region52: #{tpu_custom_call.1} parent=43 // pred_fallthru
          _
      $region44: #{tpu_custom_call.1} parent=5 // pred_fallthru
        _
      %p4780 = scmp.le.s32.totalorder 2, %s18
      // Predicated region
      $region53: #{tpu_custom_call.1} parent=5 // pred_check
        %p4781 = pneg %p4780
      $region54: #{tpu_custom_call.1} parent=5 // pred_check_branch
        %4783 = sbr.rel (%p4781) target = $region56
      $region55: #{tpu_custom_call.1} parent=5 // pred_region
        %s4784 = ssub.s32 %s18, 2
        // Predicated region
        $region57: #{tpu_custom_call.1} parent=55 // pred_check
          %p4785 = pneg %p178
        $region58: #{tpu_custom_call.1} parent=55 // pred_check_branch
          %4787 = sbr.rel (%p4785) target = $region60
        $region59: #{tpu_custom_call.1} parent=55 // pred_region
          %s4788 = sand.u32 %s163, 1
          %s4789 = scalar_lea.sflag [#allocation7], %s4788
          %s4790 = sand.u32 %s163, 1
          %s4791 = smul.addr %s4790, 64
          %s4792 = scalar_lea.vmem [#allocation8], %s4791
          %4793 = dma.done %s4789, 1024
        $region60: #{tpu_custom_call.1} parent=55 // pred_fallthru
          _
      $region56: #{tpu_custom_call.1} parent=5 // pred_fallthru
        _
    $region6: #{tpu_custom_call.1} parent=1 // loop_footer
      %s22 = sadd.s32 1, %s18
    $region7: #{tpu_custom_call.1} parent=1 // loop_footer_branch
      %17 = sbr.rel target = $region3
    $region8: #{tpu_custom_call.1} parent=1 // loop_exit
      _
    %4794 = vsyncpa [#allocation6], 1
    %s4795 = scalar_lea.sflag [#allocation6], 1
    %4796 = vsyncpa %s4795, 1
    %4797 = vsyncpa [#allocation7], 1
    %s4798 = scalar_lea.sflag [#allocation7], 1
    %4799 = vsyncpa %s4798, 1

</llo_original>
